<compile_context>
chip_gen: v5e
topology: v5e:2x2
jax: 0.10.0
libtpu: 0.0.40
codegen_flags: <defaults>
</compile_context>

<pallas_src>
import functools

import numpy as np
import jax
import jax.numpy as jnp
from jax import lax
from jax.experimental import pallas as pl
from jax.experimental.pallas import tpu as pltpu

DIFFERENT_IDS = 52707
EMBED_DIM = 128
RATIO = 0.8
NEG_BIG = -1e30

VMEM_SPEC = pl.BlockSpec(memory_space=pltpu.MemorySpace.VMEM)
SMEM_SPEC = pl.BlockSpec(memory_space=pltpu.MemorySpace.SMEM)
ANY_SPEC = pl.BlockSpec(memory_space=pl.ANY)


# ----------------------------- fused forward kernel ---------------------------------------------

def _net_fwd_kernel(ids_ref, emb_hbm, adj_ref, bmask_ref, brow_ref, bcol_ref,
                    conv_wl_ref, conv_wr_ref, conv_b_ref, pool_w_ref,
                    w1a_ref, w1b_ref, b1_ref, w2_ref, b2_ref, w3_ref, b3_ref,
                    out_ref, x_buf, gather_sem):
    n = adj_ref.shape[0]
    nb = bmask_ref.shape[0]

    # ---- item_embedding(x).squeeze(1): per-row DMA gather from the HBM table into VMEM ----------
    # All row copies share one DMA semaphore (start all, then wait for the total).
    for i in range(n):                                   # N is small & static -> unrolled DMAs
        pltpu.make_async_copy(emb_hbm.at[pl.ds(ids_ref[i], 1), :],
                              x_buf.at[pl.ds(i, 1), :],
                              gather_sem).start()
    for i in range(n):
        pltpu.make_async_copy(emb_hbm.at[pl.ds(ids_ref[i], 1), :],
                              x_buf.at[pl.ds(i, 1), :],
                              gather_sem).wait()

    x = x_buf[...]                                       # [N, 128] f32
    adj = adj_ref[...]                                   # [N, N]   bf16, A[dst, src]
    bmask = bmask_ref[...]                               # [B, N]   graph membership (static)
    brow = brow_ref[...]                                 # [1, N]   batch id per node (row layout)
    bcol = bcol_ref[...]                                 # [N, 1]   batch id per node (col layout)
    same = (bcol == brow).astype(jnp.float32)            # [N, N]   same-graph indicator (in-kernel)

    ii = lax.broadcasted_iota(jnp.int32, (n, n), 0)      # row (sublane) node index
    jj = lax.broadcasted_iota(jnp.int32, (n, n), 1)      # col (lane)    node index

    # surviving-node mask kept in both layouts so no transposes are ever needed
    alive_row = jnp.ones((1, n), jnp.float32)
    alive_col = jnp.ones((n, 1), jnp.float32)

    z_max = jnp.zeros((nb, EMBED_DIM), jnp.float32)      # gmp accumulator (x1+x2+x3, first half)
    z_avg = jnp.zeros((nb, EMBED_DIM), jnp.float32)      # gap accumulator (x1+x2+x3, second half)

    for layer in range(3):
        wl = conv_wl_ref[layer]                          # [128, 128] bf16  (lin_l, aggregated)
        wr = conv_wr_ref[layer]                          # [128, 128] bf16  (lin_r, root)
        b = conv_b_ref[layer]                            # [1, 128]   f32
        p = pool_w_ref[layer]                            # [1, 128]   f32

        # --- relu(SAGEConv(x)): mean over surviving neighbours + root, two K=128 MXU dots --------
        x_bf = x.astype(jnp.bfloat16)                    # cast once, reused by both dots
        a_m = adj * alive_row.astype(jnp.bfloat16)       # bf16 mask of dropped src columns
        deg = jnp.dot(adj, alive_col.astype(jnp.bfloat16),
                      preferred_element_type=jnp.float32)          # exact 0/1 counts, f32 accum
        inv_deg = pl.reciprocal(jnp.maximum(deg, 1.0), approx=True)
        agg = jnp.dot(a_m, x_bf, preferred_element_type=jnp.float32) * inv_deg
        x = jnp.maximum(
            jnp.dot(agg.astype(jnp.bfloat16), wl, preferred_element_type=jnp.float32)
            + jnp.dot(x_bf, wr, preferred_element_type=jnp.float32) + b, 0.0)

        # --- TopKPooling score: tanh(<x, p> / ||p||), computed ONCE; row layout is an exact ------
        # diag-extract of the same values so both layouts agree bitwise (antisymmetric tie-break).
        inv_norm = lax.rsqrt(jnp.sum(p * p) + 1e-12)
        raw_col = lax.dot_general(x, p, (((1,), (1,)), ((), ())),
                                  preferred_element_type=jnp.float32)        # [N, 1]
        s_col = jnp.tanh(raw_col * inv_norm)                                 # [N, 1]
        s_row = jnp.sum(jnp.where(ii == jj, s_col, 0.0), axis=0, keepdims=True)   # [1, N] (exact)
        x = x * s_col                                    # x[perm] * score[perm] (mask via alive)

        # --- per-graph top-ceil(0.8*n) selection as a static mask (dual layouts, no transpose) ---
        cand_r = same * alive_row                        # candidate nodes j for each row node i
        k_i = jnp.ceil(RATIO * jnp.sum(cand_r, axis=1, keepdims=True))
        beats_i = (s_row > s_col) | ((s_row == s_col) & (jj < ii))           # j beats i
        rank_i = jnp.sum(cand_r * beats_i.astype(jnp.float32), axis=1, keepdims=True)
        new_col = alive_col * (rank_i < k_i).astype(jnp.float32)

        cand_c = same * alive_col                        # candidate nodes i for each col node j
        k_j = jnp.ceil(RATIO * jnp.sum(cand_c, axis=0, keepdims=True))
        beats_j = (s_col > s_row) | ((s_col == s_row) & (ii < jj))           # i beats j
        rank_j = jnp.sum(cand_c * beats_j.astype(jnp.float32), axis=0, keepdims=True)
        new_row = alive_row * (rank_j < k_j).astype(jnp.float32)

        alive_col, alive_row = new_col, new_row

        # --- gmp/gap readout over surviving nodes, accumulated into two lane-dense [B, 128] ------
        member = bmask * alive_row                       # [B, N]
        cnt = jnp.maximum(jnp.sum(member, axis=1, keepdims=True), 1.0)
        z_avg = z_avg + jnp.dot(member, x, preferred_element_type=jnp.float32) * \
            pl.reciprocal(cnt, approx=True)                                   # gap, [B, 128]
        # per-graph max: B is tiny & static, masked sublane reduce per graph (known-good lowering)
        # TODO(synk): at realistic B replace with one batched masked reduce / grid axis over graphs.
        gmp_rows = []
        for gb in range(nb):
            col_m = (bcol == float(gb)).astype(jnp.float32) * alive_col       # [N, 1]
            gmp_rows.append(jnp.max(jnp.where(col_m > 0.0, x, NEG_BIG),
                                    axis=0, keepdims=True))
        z_max = z_max + jnp.concatenate(gmp_rows, axis=0)                     # gmp, [B, 128]

    # --- MLP head: lin1 -> relu -> lin2 -> relu -> dropout(eval = identity) -> lin3 -> sigmoid ---
    # lin1 split into two K=128 dots so the [gmp | gap] lane-concat is never materialized.
    h1 = jnp.maximum(
        jnp.dot(z_max, w1a_ref[...], preferred_element_type=jnp.float32)
        + jnp.dot(z_avg, w1b_ref[...], preferred_element_type=jnp.float32)
        + b1_ref[...], 0.0)
    h2 = jnp.maximum(jnp.dot(h1, w2_ref[...], preferred_element_type=jnp.float32) + b2_ref[...], 0.0)
    # final linear produced directly in lane-dense [1, B] layout (no [B,1] masked partial stores)
    logits = lax.dot_general(w3_ref[...], h2, (((1,), (1,)), ((), ())),
                             preferred_element_type=jnp.float32) + b3_ref[...]
    out_ref[...] = jax.nn.sigmoid(logits)


# ----------------------------- wrapper -----------------------------------------------------------

@functools.partial(jax.jit, static_argnames=("num_graphs",))
def net_forward(params, node_ids, adj, batch_ids, num_graphs):
    n = node_ids.shape[0]
    ids = node_ids.reshape(n).astype(jnp.int32)
    adj_bf = adj.astype(jnp.bfloat16)                                         # exact for 0/1 edges
    graph_ids = jnp.arange(num_graphs, dtype=batch_ids.dtype)
    bmask = (batch_ids[None, :] == graph_ids[:, None]).astype(jnp.float32)    # [B, N]
    brow = batch_ids.astype(jnp.float32).reshape(1, n)                        # [1, N]
    bcol = batch_ids.astype(jnp.float32).reshape(n, 1)                        # [N, 1]

    w1a, w1b, b1, w2_t, b2, w3_row, b3 = params["lin"]

    out = pl.pallas_call(
        _net_fwd_kernel,
        out_shape=jax.ShapeDtypeStruct((1, num_graphs), jnp.float32),
        in_specs=[SMEM_SPEC,                 # node ids (scalars for the DMA gather)
                  ANY_SPEC]                  # embedding table stays in HBM
                 + [VMEM_SPEC] * 15,
        out_specs=VMEM_SPEC,
        scratch_shapes=[
            pltpu.VMEM((n, EMBED_DIM), jnp.float32),     # gathered node embeddings
            pltpu.SemaphoreType.DMA,                     # ONE DMA semaphore shared by all rows
        ],
        compiler_params=pltpu.CompilerParams(vmem_limit_bytes=32 * 1024 * 1024),
    )(ids, params["embedding"], adj_bf, bmask, brow, bcol,
      params["conv_wl"], params["conv_wr"], params["conv_b"], params["pool_w"],
      w1a, w1b, b1, w2_t, b2, w3_row, b3)
    return out[0]                                                             # .squeeze(1)


# ----------------------------- parameters (deterministic) ----------------------------------------
# Note: bn1/bn2 are defined in the PyTorch module but never used in forward -> omitted.

def init_params(key):
    keys = jax.random.split(key, 20)

    def nrm(k, shape, scale):
        return jax.random.normal(k, shape, jnp.float32) * scale

    params = {"embedding": nrm(keys[0], (DIFFERENT_IDS, EMBED_DIM), 0.1)}

    conv_wl, conv_wr, conv_b, pool_w = [], [], [], []
    ki = 1
    for _ in range(3):                       # SAGEConv(128,128): lin_l (agg, bias) + lin_r (root)
        conv_wl.append(nrm(keys[ki], (128, 128), 0.05)); ki += 1
        conv_wr.append(nrm(keys[ki], (128, 128), 0.05)); ki += 1
        conv_b.append(nrm(keys[ki], (1, 128), 0.05)); ki += 1
    for _ in range(3):                       # TopKPooling weight: [1, 128]
        pool_w.append(jax.random.normal(keys[ki], (1, 128), jnp.float32)); ki += 1

    params["conv_wl"] = jnp.stack(conv_wl).astype(jnp.bfloat16)  # bf16 MXU operands, f32 accumulate
    params["conv_wr"] = jnp.stack(conv_wr).astype(jnp.bfloat16)  # [3,128,128]
    params["conv_b"] = jnp.stack(conv_b)                         # [3,1,128]
    params["pool_w"] = jnp.stack(pool_w)                         # [3,1,128]

    # lin1 (256->128) split into the gmp half (w1a) and gap half (w1b); lin3 stored row-major [1,64].
    w1a = nrm(keys[ki], (128, 128), 0.05); ki += 1
    w1b = nrm(keys[ki], (128, 128), 0.05); ki += 1
    b1 = nrm(keys[ki], (1, 128), 0.05); ki += 1
    w2_t = nrm(keys[ki], (128, 64), 0.05); ki += 1
    b2 = nrm(keys[ki], (1, 64), 0.05); ki += 1
    w3_row = nrm(keys[ki], (1, 64), 0.05); ki += 1
    b3 = nrm(keys[ki], (1, 1), 0.05); ki += 1
    params["lin"] = (w1a, w1b, b1, w2_t, b2, w3_row, b3)
    return params


# ----------------------------- main ---------------------------------------------------------------

if __name__ == "__main__":
    key = jax.random.PRNGKey(0)
    pkey, dkey = jax.random.split(key)
    params = init_params(pkey)

    num_graphs = 2
    nodes_per_graph = 8
    n = num_graphs * nodes_per_graph

    # data.x : [N, 1] item ids ; data.batch : [N] ; data.edge_index : [2, E]
    node_ids = jax.random.randint(dkey, (n, 1), 0, DIFFERENT_IDS, dtype=jnp.int32)
    batch_ids = jnp.repeat(jnp.arange(num_graphs, dtype=jnp.int32), nodes_per_graph)

    edges = []
    for g in range(num_graphs):
        base = g * nodes_per_graph
        for i in range(nodes_per_graph):
            s, d = base + i, base + (i + 1) % nodes_per_graph
            edges.append((s, d))
            edges.append((d, s))
    edge_index = np.asarray(edges, dtype=np.int32).T           # [2, E], row0 = src, row1 = dst

    adj_np = np.zeros((n, n), dtype=np.float32)
    adj_np[edge_index[1], edge_index[0]] = 1.0                 # A[dst, src] = 1
    adj = jnp.asarray(adj_np, dtype=jnp.bfloat16)              # 0/1 edges are exact in bf16

    out = net_forward(params, node_ids, adj, batch_ids, num_graphs=num_graphs)
    out = jax.block_until_ready(out)
    assert out.shape == (num_graphs,)
    assert bool(jnp.all((out >= 0.0) & (out <= 1.0)))
    print("KERNEL_OK")
</pallas_src>

<mosaic_0001>
module attributes {stable_mosaic.version = 11 : i64} {
  func.func @_net_fwd_kernel(%arg0: memref<16xi32, #tpu.memory_space<smem>>, %arg1: memref<52707x128xf32, #tpu.memory_space<any>>, %arg2: memref<16x16xbf16, #tpu.memory_space<vmem>>, %arg3: memref<2x16xf32, #tpu.memory_space<vmem>>, %arg4: memref<1x16xf32, #tpu.memory_space<vmem>>, %arg5: memref<16x1xf32, #tpu.memory_space<vmem>>, %arg6: memref<3x128x128xbf16, #tpu.memory_space<vmem>>, %arg7: memref<3x128x128xbf16, #tpu.memory_space<vmem>>, %arg8: memref<3x1x128xf32, #tpu.memory_space<vmem>>, %arg9: memref<3x1x128xf32, #tpu.memory_space<vmem>>, %arg10: memref<128x128xf32, #tpu.memory_space<vmem>>, %arg11: memref<128x128xf32, #tpu.memory_space<vmem>>, %arg12: memref<1x128xf32, #tpu.memory_space<vmem>>, %arg13: memref<128x64xf32, #tpu.memory_space<vmem>>, %arg14: memref<1x64xf32, #tpu.memory_space<vmem>>, %arg15: memref<1x64xf32, #tpu.memory_space<vmem>>, %arg16: memref<1x1xf32, #tpu.memory_space<vmem>>, %arg17: memref<1x2xf32, #tpu.memory_space<vmem>>, %arg18: memref<16x128xf32, #tpu.memory_space<vmem>>, %arg19: memref<!tpu.dma_semaphore, #tpu.memory_space<semaphore_mem>>) attributes {dimension_semantics = [], scalar_prefetch = 0 : i64, scratch_operands = 2 : i64, tpu.core_type = #tpu.core_type<tc>} {
    %c0 = arith.constant 0 : index
    %0 = memref.load %arg0[%c0] : memref<16xi32, #tpu.memory_space<smem>>
    %c0_i32 = arith.constant 0 : i32
    %1 = tpu.memref_slice %arg1[%0, %c0_i32] : memref<52707x128xf32, #tpu.memory_space<any>> -> memref<1x128xf32, #tpu.memory_space<any>>
    %c0_i32_0 = arith.constant 0 : i32
    %c0_i32_1 = arith.constant 0 : i32
    %2 = tpu.memref_slice %arg18[%c0_i32_0, %c0_i32_1] : memref<16x128xf32, #tpu.memory_space<vmem>> -> memref<1x128xf32, #tpu.memory_space<vmem>>
    tpu.enqueue_dma source(%1 : memref<1x128xf32, #tpu.memory_space<any>>) target(%2 : memref<1x128xf32, #tpu.memory_space<vmem>>) target_semaphore(%arg19 : memref<!tpu.dma_semaphore, #tpu.memory_space<semaphore_mem>>)
    %c1 = arith.constant 1 : index
    %3 = memref.load %arg0[%c1] : memref<16xi32, #tpu.memory_space<smem>>
    %c0_i32_2 = arith.constant 0 : i32
    %4 = tpu.memref_slice %arg1[%3, %c0_i32_2] : memref<52707x128xf32, #tpu.memory_space<any>> -> memref<1x128xf32, #tpu.memory_space<any>>
    %c1_i32 = arith.constant 1 : i32
    %c0_i32_3 = arith.constant 0 : i32
    %5 = tpu.memref_slice %arg18[%c1_i32, %c0_i32_3] : memref<16x128xf32, #tpu.memory_space<vmem>> -> memref<1x128xf32, #tpu.memory_space<vmem>>
    tpu.enqueue_dma source(%4 : memref<1x128xf32, #tpu.memory_space<any>>) target(%5 : memref<1x128xf32, #tpu.memory_space<vmem>>) target_semaphore(%arg19 : memref<!tpu.dma_semaphore, #tpu.memory_space<semaphore_mem>>)
    %c2 = arith.constant 2 : index
    %6 = memref.load %arg0[%c2] : memref<16xi32, #tpu.memory_space<smem>>
    %c0_i32_4 = arith.constant 0 : i32
    %7 = tpu.memref_slice %arg1[%6, %c0_i32_4] : memref<52707x128xf32, #tpu.memory_space<any>> -> memref<1x128xf32, #tpu.memory_space<any>>
    %c2_i32 = arith.constant 2 : i32
    %c0_i32_5 = arith.constant 0 : i32
    %8 = tpu.memref_slice %arg18[%c2_i32, %c0_i32_5] : memref<16x128xf32, #tpu.memory_space<vmem>> -> memref<1x128xf32, #tpu.memory_space<vmem>>
    tpu.enqueue_dma source(%7 : memref<1x128xf32, #tpu.memory_space<any>>) target(%8 : memref<1x128xf32, #tpu.memory_space<vmem>>) target_semaphore(%arg19 : memref<!tpu.dma_semaphore, #tpu.memory_space<semaphore_mem>>)
    %c3 = arith.constant 3 : index
    %9 = memref.load %arg0[%c3] : memref<16xi32, #tpu.memory_space<smem>>
    %c0_i32_6 = arith.constant 0 : i32
    %10 = tpu.memref_slice %arg1[%9, %c0_i32_6] : memref<52707x128xf32, #tpu.memory_space<any>> -> memref<1x128xf32, #tpu.memory_space<any>>
    %c3_i32 = arith.constant 3 : i32
    %c0_i32_7 = arith.constant 0 : i32
    %11 = tpu.memref_slice %arg18[%c3_i32, %c0_i32_7] : memref<16x128xf32, #tpu.memory_space<vmem>> -> memref<1x128xf32, #tpu.memory_space<vmem>>
    tpu.enqueue_dma source(%10 : memref<1x128xf32, #tpu.memory_space<any>>) target(%11 : memref<1x128xf32, #tpu.memory_space<vmem>>) target_semaphore(%arg19 : memref<!tpu.dma_semaphore, #tpu.memory_space<semaphore_mem>>)
    %c4 = arith.constant 4 : index
    %12 = memref.load %arg0[%c4] : memref<16xi32, #tpu.memory_space<smem>>
    %c0_i32_8 = arith.constant 0 : i32
    %13 = tpu.memref_slice %arg1[%12, %c0_i32_8] : memref<52707x128xf32, #tpu.memory_space<any>> -> memref<1x128xf32, #tpu.memory_space<any>>
    %c4_i32 = arith.constant 4 : i32
    %c0_i32_9 = arith.constant 0 : i32
    %14 = tpu.memref_slice %arg18[%c4_i32, %c0_i32_9] : memref<16x128xf32, #tpu.memory_space<vmem>> -> memref<1x128xf32, #tpu.memory_space<vmem>>
    tpu.enqueue_dma source(%13 : memref<1x128xf32, #tpu.memory_space<any>>) target(%14 : memref<1x128xf32, #tpu.memory_space<vmem>>) target_semaphore(%arg19 : memref<!tpu.dma_semaphore, #tpu.memory_space<semaphore_mem>>)
    %c5 = arith.constant 5 : index
    %15 = memref.load %arg0[%c5] : memref<16xi32, #tpu.memory_space<smem>>
    %c0_i32_10 = arith.constant 0 : i32
    %16 = tpu.memref_slice %arg1[%15, %c0_i32_10] : memref<52707x128xf32, #tpu.memory_space<any>> -> memref<1x128xf32, #tpu.memory_space<any>>
    %c5_i32 = arith.constant 5 : i32
    %c0_i32_11 = arith.constant 0 : i32
    %17 = tpu.memref_slice %arg18[%c5_i32, %c0_i32_11] : memref<16x128xf32, #tpu.memory_space<vmem>> -> memref<1x128xf32, #tpu.memory_space<vmem>>
    tpu.enqueue_dma source(%16 : memref<1x128xf32, #tpu.memory_space<any>>) target(%17 : memref<1x128xf32, #tpu.memory_space<vmem>>) target_semaphore(%arg19 : memref<!tpu.dma_semaphore, #tpu.memory_space<semaphore_mem>>)
    %c6 = arith.constant 6 : index
    %18 = memref.load %arg0[%c6] : memref<16xi32, #tpu.memory_space<smem>>
    %c0_i32_12 = arith.constant 0 : i32
    %19 = tpu.memref_slice %arg1[%18, %c0_i32_12] : memref<52707x128xf32, #tpu.memory_space<any>> -> memref<1x128xf32, #tpu.memory_space<any>>
    %c6_i32 = arith.constant 6 : i32
    %c0_i32_13 = arith.constant 0 : i32
    %20 = tpu.memref_slice %arg18[%c6_i32, %c0_i32_13] : memref<16x128xf32, #tpu.memory_space<vmem>> -> memref<1x128xf32, #tpu.memory_space<vmem>>
    tpu.enqueue_dma source(%19 : memref<1x128xf32, #tpu.memory_space<any>>) target(%20 : memref<1x128xf32, #tpu.memory_space<vmem>>) target_semaphore(%arg19 : memref<!tpu.dma_semaphore, #tpu.memory_space<semaphore_mem>>)
    %c7 = arith.constant 7 : index
    %21 = memref.load %arg0[%c7] : memref<16xi32, #tpu.memory_space<smem>>
    %c0_i32_14 = arith.constant 0 : i32
    %22 = tpu.memref_slice %arg1[%21, %c0_i32_14] : memref<52707x128xf32, #tpu.memory_space<any>> -> memref<1x128xf32, #tpu.memory_space<any>>
    %c7_i32 = arith.constant 7 : i32
    %c0_i32_15 = arith.constant 0 : i32
    %23 = tpu.memref_slice %arg18[%c7_i32, %c0_i32_15] : memref<16x128xf32, #tpu.memory_space<vmem>> -> memref<1x128xf32, #tpu.memory_space<vmem>>
    tpu.enqueue_dma source(%22 : memref<1x128xf32, #tpu.memory_space<any>>) target(%23 : memref<1x128xf32, #tpu.memory_space<vmem>>) target_semaphore(%arg19 : memref<!tpu.dma_semaphore, #tpu.memory_space<semaphore_mem>>)
    %c8 = arith.constant 8 : index
    %24 = memref.load %arg0[%c8] : memref<16xi32, #tpu.memory_space<smem>>
    %c0_i32_16 = arith.constant 0 : i32
    %25 = tpu.memref_slice %arg1[%24, %c0_i32_16] : memref<52707x128xf32, #tpu.memory_space<any>> -> memref<1x128xf32, #tpu.memory_space<any>>
    %c8_i32 = arith.constant 8 : i32
    %c0_i32_17 = arith.constant 0 : i32
    %26 = tpu.memref_slice %arg18[%c8_i32, %c0_i32_17] : memref<16x128xf32, #tpu.memory_space<vmem>> -> memref<1x128xf32, #tpu.memory_space<vmem>>
    tpu.enqueue_dma source(%25 : memref<1x128xf32, #tpu.memory_space<any>>) target(%26 : memref<1x128xf32, #tpu.memory_space<vmem>>) target_semaphore(%arg19 : memref<!tpu.dma_semaphore, #tpu.memory_space<semaphore_mem>>)
    %c9 = arith.constant 9 : index
    %27 = memref.load %arg0[%c9] : memref<16xi32, #tpu.memory_space<smem>>
    %c0_i32_18 = arith.constant 0 : i32
    %28 = tpu.memref_slice %arg1[%27, %c0_i32_18] : memref<52707x128xf32, #tpu.memory_space<any>> -> memref<1x128xf32, #tpu.memory_space<any>>
    %c9_i32 = arith.constant 9 : i32
    %c0_i32_19 = arith.constant 0 : i32
    %29 = tpu.memref_slice %arg18[%c9_i32, %c0_i32_19] : memref<16x128xf32, #tpu.memory_space<vmem>> -> memref<1x128xf32, #tpu.memory_space<vmem>>
    tpu.enqueue_dma source(%28 : memref<1x128xf32, #tpu.memory_space<any>>) target(%29 : memref<1x128xf32, #tpu.memory_space<vmem>>) target_semaphore(%arg19 : memref<!tpu.dma_semaphore, #tpu.memory_space<semaphore_mem>>)
    %c10 = arith.constant 10 : index
    %30 = memref.load %arg0[%c10] : memref<16xi32, #tpu.memory_space<smem>>
    %c0_i32_20 = arith.constant 0 : i32
    %31 = tpu.memref_slice %arg1[%30, %c0_i32_20] : memref<52707x128xf32, #tpu.memory_space<any>> -> memref<1x128xf32, #tpu.memory_space<any>>
    %c10_i32 = arith.constant 10 : i32
    %c0_i32_21 = arith.constant 0 : i32
    %32 = tpu.memref_slice %arg18[%c10_i32, %c0_i32_21] : memref<16x128xf32, #tpu.memory_space<vmem>> -> memref<1x128xf32, #tpu.memory_space<vmem>>
    tpu.enqueue_dma source(%31 : memref<1x128xf32, #tpu.memory_space<any>>) target(%32 : memref<1x128xf32, #tpu.memory_space<vmem>>) target_semaphore(%arg19 : memref<!tpu.dma_semaphore, #tpu.memory_space<semaphore_mem>>)
    %c11 = arith.constant 11 : index
    %33 = memref.load %arg0[%c11] : memref<16xi32, #tpu.memory_space<smem>>
    %c0_i32_22 = arith.constant 0 : i32
    %34 = tpu.memref_slice %arg1[%33, %c0_i32_22] : memref<52707x128xf32, #tpu.memory_space<any>> -> memref<1x128xf32, #tpu.memory_space<any>>
    %c11_i32 = arith.constant 11 : i32
    %c0_i32_23 = arith.constant 0 : i32
    %35 = tpu.memref_slice %arg18[%c11_i32, %c0_i32_23] : memref<16x128xf32, #tpu.memory_space<vmem>> -> memref<1x128xf32, #tpu.memory_space<vmem>>
    tpu.enqueue_dma source(%34 : memref<1x128xf32, #tpu.memory_space<any>>) target(%35 : memref<1x128xf32, #tpu.memory_space<vmem>>) target_semaphore(%arg19 : memref<!tpu.dma_semaphore, #tpu.memory_space<semaphore_mem>>)
    %c12 = arith.constant 12 : index
    %36 = memref.load %arg0[%c12] : memref<16xi32, #tpu.memory_space<smem>>
    %c0_i32_24 = arith.constant 0 : i32
    %37 = tpu.memref_slice %arg1[%36, %c0_i32_24] : memref<52707x128xf32, #tpu.memory_space<any>> -> memref<1x128xf32, #tpu.memory_space<any>>
    %c12_i32 = arith.constant 12 : i32
    %c0_i32_25 = arith.constant 0 : i32
    %38 = tpu.memref_slice %arg18[%c12_i32, %c0_i32_25] : memref<16x128xf32, #tpu.memory_space<vmem>> -> memref<1x128xf32, #tpu.memory_space<vmem>>
    tpu.enqueue_dma source(%37 : memref<1x128xf32, #tpu.memory_space<any>>) target(%38 : memref<1x128xf32, #tpu.memory_space<vmem>>) target_semaphore(%arg19 : memref<!tpu.dma_semaphore, #tpu.memory_space<semaphore_mem>>)
    %c13 = arith.constant 13 : index
    %39 = memref.load %arg0[%c13] : memref<16xi32, #tpu.memory_space<smem>>
    %c0_i32_26 = arith.constant 0 : i32
    %40 = tpu.memref_slice %arg1[%39, %c0_i32_26] : memref<52707x128xf32, #tpu.memory_space<any>> -> memref<1x128xf32, #tpu.memory_space<any>>
    %c13_i32 = arith.constant 13 : i32
    %c0_i32_27 = arith.constant 0 : i32
    %41 = tpu.memref_slice %arg18[%c13_i32, %c0_i32_27] : memref<16x128xf32, #tpu.memory_space<vmem>> -> memref<1x128xf32, #tpu.memory_space<vmem>>
    tpu.enqueue_dma source(%40 : memref<1x128xf32, #tpu.memory_space<any>>) target(%41 : memref<1x128xf32, #tpu.memory_space<vmem>>) target_semaphore(%arg19 : memref<!tpu.dma_semaphore, #tpu.memory_space<semaphore_mem>>)
    %c14 = arith.constant 14 : index
    %42 = memref.load %arg0[%c14] : memref<16xi32, #tpu.memory_space<smem>>
    %c0_i32_28 = arith.constant 0 : i32
    %43 = tpu.memref_slice %arg1[%42, %c0_i32_28] : memref<52707x128xf32, #tpu.memory_space<any>> -> memref<1x128xf32, #tpu.memory_space<any>>
    %c14_i32 = arith.constant 14 : i32
    %c0_i32_29 = arith.constant 0 : i32
    %44 = tpu.memref_slice %arg18[%c14_i32, %c0_i32_29] : memref<16x128xf32, #tpu.memory_space<vmem>> -> memref<1x128xf32, #tpu.memory_space<vmem>>
    tpu.enqueue_dma source(%43 : memref<1x128xf32, #tpu.memory_space<any>>) target(%44 : memref<1x128xf32, #tpu.memory_space<vmem>>) target_semaphore(%arg19 : memref<!tpu.dma_semaphore, #tpu.memory_space<semaphore_mem>>)
    %c15 = arith.constant 15 : index
    %45 = memref.load %arg0[%c15] : memref<16xi32, #tpu.memory_space<smem>>
    %c0_i32_30 = arith.constant 0 : i32
    %46 = tpu.memref_slice %arg1[%45, %c0_i32_30] : memref<52707x128xf32, #tpu.memory_space<any>> -> memref<1x128xf32, #tpu.memory_space<any>>
    %c15_i32 = arith.constant 15 : i32
    %c0_i32_31 = arith.constant 0 : i32
    %47 = tpu.memref_slice %arg18[%c15_i32, %c0_i32_31] : memref<16x128xf32, #tpu.memory_space<vmem>> -> memref<1x128xf32, #tpu.memory_space<vmem>>
    tpu.enqueue_dma source(%46 : memref<1x128xf32, #tpu.memory_space<any>>) target(%47 : memref<1x128xf32, #tpu.memory_space<vmem>>) target_semaphore(%arg19 : memref<!tpu.dma_semaphore, #tpu.memory_space<semaphore_mem>>)
    %c0_32 = arith.constant 0 : index
    %48 = memref.load %arg0[%c0_32] : memref<16xi32, #tpu.memory_space<smem>>
    %c0_i32_33 = arith.constant 0 : i32
    %49 = tpu.memref_slice %arg1[%48, %c0_i32_33] : memref<52707x128xf32, #tpu.memory_space<any>> -> memref<1x128xf32, #tpu.memory_space<any>>
    %c0_i32_34 = arith.constant 0 : i32
    %c0_i32_35 = arith.constant 0 : i32
    %50 = tpu.memref_slice %arg18[%c0_i32_34, %c0_i32_35] : memref<16x128xf32, #tpu.memory_space<vmem>> -> memref<1x128xf32, #tpu.memory_space<vmem>>
    tpu.wait_dma2 semaphore(%arg19 : memref<!tpu.dma_semaphore, #tpu.memory_space<semaphore_mem>>) src(%49 : memref<1x128xf32, #tpu.memory_space<any>>) dst(%50 : memref<1x128xf32, #tpu.memory_space<vmem>>)
    %c1_36 = arith.constant 1 : index
    %51 = memref.load %arg0[%c1_36] : memref<16xi32, #tpu.memory_space<smem>>
    %c0_i32_37 = arith.constant 0 : i32
    %52 = tpu.memref_slice %arg1[%51, %c0_i32_37] : memref<52707x128xf32, #tpu.memory_space<any>> -> memref<1x128xf32, #tpu.memory_space<any>>
    %c1_i32_38 = arith.constant 1 : i32
    %c0_i32_39 = arith.constant 0 : i32
    %53 = tpu.memref_slice %arg18[%c1_i32_38, %c0_i32_39] : memref<16x128xf32, #tpu.memory_space<vmem>> -> memref<1x128xf32, #tpu.memory_space<vmem>>
    tpu.wait_dma2 semaphore(%arg19 : memref<!tpu.dma_semaphore, #tpu.memory_space<semaphore_mem>>) src(%52 : memref<1x128xf32, #tpu.memory_space<any>>) dst(%53 : memref<1x128xf32, #tpu.memory_space<vmem>>)
    %c2_40 = arith.constant 2 : index
    %54 = memref.load %arg0[%c2_40] : memref<16xi32, #tpu.memory_space<smem>>
    %c0_i32_41 = arith.constant 0 : i32
    %55 = tpu.memref_slice %arg1[%54, %c0_i32_41] : memref<52707x128xf32, #tpu.memory_space<any>> -> memref<1x128xf32, #tpu.memory_space<any>>
    %c2_i32_42 = arith.constant 2 : i32
    %c0_i32_43 = arith.constant 0 : i32
    %56 = tpu.memref_slice %arg18[%c2_i32_42, %c0_i32_43] : memref<16x128xf32, #tpu.memory_space<vmem>> -> memref<1x128xf32, #tpu.memory_space<vmem>>
    tpu.wait_dma2 semaphore(%arg19 : memref<!tpu.dma_semaphore, #tpu.memory_space<semaphore_mem>>) src(%55 : memref<1x128xf32, #tpu.memory_space<any>>) dst(%56 : memref<1x128xf32, #tpu.memory_space<vmem>>)
    %c3_44 = arith.constant 3 : index
    %57 = memref.load %arg0[%c3_44] : memref<16xi32, #tpu.memory_space<smem>>
    %c0_i32_45 = arith.constant 0 : i32
    %58 = tpu.memref_slice %arg1[%57, %c0_i32_45] : memref<52707x128xf32, #tpu.memory_space<any>> -> memref<1x128xf32, #tpu.memory_space<any>>
    %c3_i32_46 = arith.constant 3 : i32
    %c0_i32_47 = arith.constant 0 : i32
    %59 = tpu.memref_slice %arg18[%c3_i32_46, %c0_i32_47] : memref<16x128xf32, #tpu.memory_space<vmem>> -> memref<1x128xf32, #tpu.memory_space<vmem>>
    tpu.wait_dma2 semaphore(%arg19 : memref<!tpu.dma_semaphore, #tpu.memory_space<semaphore_mem>>) src(%58 : memref<1x128xf32, #tpu.memory_space<any>>) dst(%59 : memref<1x128xf32, #tpu.memory_space<vmem>>)
    %c4_48 = arith.constant 4 : index
    %60 = memref.load %arg0[%c4_48] : memref<16xi32, #tpu.memory_space<smem>>
    %c0_i32_49 = arith.constant 0 : i32
    %61 = tpu.memref_slice %arg1[%60, %c0_i32_49] : memref<52707x128xf32, #tpu.memory_space<any>> -> memref<1x128xf32, #tpu.memory_space<any>>
    %c4_i32_50 = arith.constant 4 : i32
    %c0_i32_51 = arith.constant 0 : i32
    %62 = tpu.memref_slice %arg18[%c4_i32_50, %c0_i32_51] : memref<16x128xf32, #tpu.memory_space<vmem>> -> memref<1x128xf32, #tpu.memory_space<vmem>>
    tpu.wait_dma2 semaphore(%arg19 : memref<!tpu.dma_semaphore, #tpu.memory_space<semaphore_mem>>) src(%61 : memref<1x128xf32, #tpu.memory_space<any>>) dst(%62 : memref<1x128xf32, #tpu.memory_space<vmem>>)
    %c5_52 = arith.constant 5 : index
    %63 = memref.load %arg0[%c5_52] : memref<16xi32, #tpu.memory_space<smem>>
    %c0_i32_53 = arith.constant 0 : i32
    %64 = tpu.memref_slice %arg1[%63, %c0_i32_53] : memref<52707x128xf32, #tpu.memory_space<any>> -> memref<1x128xf32, #tpu.memory_space<any>>
    %c5_i32_54 = arith.constant 5 : i32
    %c0_i32_55 = arith.constant 0 : i32
    %65 = tpu.memref_slice %arg18[%c5_i32_54, %c0_i32_55] : memref<16x128xf32, #tpu.memory_space<vmem>> -> memref<1x128xf32, #tpu.memory_space<vmem>>
    tpu.wait_dma2 semaphore(%arg19 : memref<!tpu.dma_semaphore, #tpu.memory_space<semaphore_mem>>) src(%64 : memref<1x128xf32, #tpu.memory_space<any>>) dst(%65 : memref<1x128xf32, #tpu.memory_space<vmem>>)
    %c6_56 = arith.constant 6 : index
    %66 = memref.load %arg0[%c6_56] : memref<16xi32, #tpu.memory_space<smem>>
    %c0_i32_57 = arith.constant 0 : i32
    %67 = tpu.memref_slice %arg1[%66, %c0_i32_57] : memref<52707x128xf32, #tpu.memory_space<any>> -> memref<1x128xf32, #tpu.memory_space<any>>
    %c6_i32_58 = arith.constant 6 : i32
    %c0_i32_59 = arith.constant 0 : i32
    %68 = tpu.memref_slice %arg18[%c6_i32_58, %c0_i32_59] : memref<16x128xf32, #tpu.memory_space<vmem>> -> memref<1x128xf32, #tpu.memory_space<vmem>>
    tpu.wait_dma2 semaphore(%arg19 : memref<!tpu.dma_semaphore, #tpu.memory_space<semaphore_mem>>) src(%67 : memref<1x128xf32, #tpu.memory_space<any>>) dst(%68 : memref<1x128xf32, #tpu.memory_space<vmem>>)
    %c7_60 = arith.constant 7 : index
    %69 = memref.load %arg0[%c7_60] : memref<16xi32, #tpu.memory_space<smem>>
    %c0_i32_61 = arith.constant 0 : i32
    %70 = tpu.memref_slice %arg1[%69, %c0_i32_61] : memref<52707x128xf32, #tpu.memory_space<any>> -> memref<1x128xf32, #tpu.memory_space<any>>
    %c7_i32_62 = arith.constant 7 : i32
    %c0_i32_63 = arith.constant 0 : i32
    %71 = tpu.memref_slice %arg18[%c7_i32_62, %c0_i32_63] : memref<16x128xf32, #tpu.memory_space<vmem>> -> memref<1x128xf32, #tpu.memory_space<vmem>>
    tpu.wait_dma2 semaphore(%arg19 : memref<!tpu.dma_semaphore, #tpu.memory_space<semaphore_mem>>) src(%70 : memref<1x128xf32, #tpu.memory_space<any>>) dst(%71 : memref<1x128xf32, #tpu.memory_space<vmem>>)
    %c8_64 = arith.constant 8 : index
    %72 = memref.load %arg0[%c8_64] : memref<16xi32, #tpu.memory_space<smem>>
    %c0_i32_65 = arith.constant 0 : i32
    %73 = tpu.memref_slice %arg1[%72, %c0_i32_65] : memref<52707x128xf32, #tpu.memory_space<any>> -> memref<1x128xf32, #tpu.memory_space<any>>
    %c8_i32_66 = arith.constant 8 : i32
    %c0_i32_67 = arith.constant 0 : i32
    %74 = tpu.memref_slice %arg18[%c8_i32_66, %c0_i32_67] : memref<16x128xf32, #tpu.memory_space<vmem>> -> memref<1x128xf32, #tpu.memory_space<vmem>>
    tpu.wait_dma2 semaphore(%arg19 : memref<!tpu.dma_semaphore, #tpu.memory_space<semaphore_mem>>) src(%73 : memref<1x128xf32, #tpu.memory_space<any>>) dst(%74 : memref<1x128xf32, #tpu.memory_space<vmem>>)
    %c9_68 = arith.constant 9 : index
    %75 = memref.load %arg0[%c9_68] : memref<16xi32, #tpu.memory_space<smem>>
    %c0_i32_69 = arith.constant 0 : i32
    %76 = tpu.memref_slice %arg1[%75, %c0_i32_69] : memref<52707x128xf32, #tpu.memory_space<any>> -> memref<1x128xf32, #tpu.memory_space<any>>
    %c9_i32_70 = arith.constant 9 : i32
    %c0_i32_71 = arith.constant 0 : i32
    %77 = tpu.memref_slice %arg18[%c9_i32_70, %c0_i32_71] : memref<16x128xf32, #tpu.memory_space<vmem>> -> memref<1x128xf32, #tpu.memory_space<vmem>>
    tpu.wait_dma2 semaphore(%arg19 : memref<!tpu.dma_semaphore, #tpu.memory_space<semaphore_mem>>) src(%76 : memref<1x128xf32, #tpu.memory_space<any>>) dst(%77 : memref<1x128xf32, #tpu.memory_space<vmem>>)
    %c10_72 = arith.constant 10 : index
    %78 = memref.load %arg0[%c10_72] : memref<16xi32, #tpu.memory_space<smem>>
    %c0_i32_73 = arith.constant 0 : i32
    %79 = tpu.memref_slice %arg1[%78, %c0_i32_73] : memref<52707x128xf32, #tpu.memory_space<any>> -> memref<1x128xf32, #tpu.memory_space<any>>
    %c10_i32_74 = arith.constant 10 : i32
    %c0_i32_75 = arith.constant 0 : i32
    %80 = tpu.memref_slice %arg18[%c10_i32_74, %c0_i32_75] : memref<16x128xf32, #tpu.memory_space<vmem>> -> memref<1x128xf32, #tpu.memory_space<vmem>>
    tpu.wait_dma2 semaphore(%arg19 : memref<!tpu.dma_semaphore, #tpu.memory_space<semaphore_mem>>) src(%79 : memref<1x128xf32, #tpu.memory_space<any>>) dst(%80 : memref<1x128xf32, #tpu.memory_space<vmem>>)
    %c11_76 = arith.constant 11 : index
    %81 = memref.load %arg0[%c11_76] : memref<16xi32, #tpu.memory_space<smem>>
    %c0_i32_77 = arith.constant 0 : i32
    %82 = tpu.memref_slice %arg1[%81, %c0_i32_77] : memref<52707x128xf32, #tpu.memory_space<any>> -> memref<1x128xf32, #tpu.memory_space<any>>
    %c11_i32_78 = arith.constant 11 : i32
    %c0_i32_79 = arith.constant 0 : i32
    %83 = tpu.memref_slice %arg18[%c11_i32_78, %c0_i32_79] : memref<16x128xf32, #tpu.memory_space<vmem>> -> memref<1x128xf32, #tpu.memory_space<vmem>>
    tpu.wait_dma2 semaphore(%arg19 : memref<!tpu.dma_semaphore, #tpu.memory_space<semaphore_mem>>) src(%82 : memref<1x128xf32, #tpu.memory_space<any>>) dst(%83 : memref<1x128xf32, #tpu.memory_space<vmem>>)
    %c12_80 = arith.constant 12 : index
    %84 = memref.load %arg0[%c12_80] : memref<16xi32, #tpu.memory_space<smem>>
    %c0_i32_81 = arith.constant 0 : i32
    %85 = tpu.memref_slice %arg1[%84, %c0_i32_81] : memref<52707x128xf32, #tpu.memory_space<any>> -> memref<1x128xf32, #tpu.memory_space<any>>
    %c12_i32_82 = arith.constant 12 : i32
    %c0_i32_83 = arith.constant 0 : i32
    %86 = tpu.memref_slice %arg18[%c12_i32_82, %c0_i32_83] : memref<16x128xf32, #tpu.memory_space<vmem>> -> memref<1x128xf32, #tpu.memory_space<vmem>>
    tpu.wait_dma2 semaphore(%arg19 : memref<!tpu.dma_semaphore, #tpu.memory_space<semaphore_mem>>) src(%85 : memref<1x128xf32, #tpu.memory_space<any>>) dst(%86 : memref<1x128xf32, #tpu.memory_space<vmem>>)
    %c13_84 = arith.constant 13 : index
    %87 = memref.load %arg0[%c13_84] : memref<16xi32, #tpu.memory_space<smem>>
    %c0_i32_85 = arith.constant 0 : i32
    %88 = tpu.memref_slice %arg1[%87, %c0_i32_85] : memref<52707x128xf32, #tpu.memory_space<any>> -> memref<1x128xf32, #tpu.memory_space<any>>
    %c13_i32_86 = arith.constant 13 : i32
    %c0_i32_87 = arith.constant 0 : i32
    %89 = tpu.memref_slice %arg18[%c13_i32_86, %c0_i32_87] : memref<16x128xf32, #tpu.memory_space<vmem>> -> memref<1x128xf32, #tpu.memory_space<vmem>>
    tpu.wait_dma2 semaphore(%arg19 : memref<!tpu.dma_semaphore, #tpu.memory_space<semaphore_mem>>) src(%88 : memref<1x128xf32, #tpu.memory_space<any>>) dst(%89 : memref<1x128xf32, #tpu.memory_space<vmem>>)
    %c14_88 = arith.constant 14 : index
    %90 = memref.load %arg0[%c14_88] : memref<16xi32, #tpu.memory_space<smem>>
    %c0_i32_89 = arith.constant 0 : i32
    %91 = tpu.memref_slice %arg1[%90, %c0_i32_89] : memref<52707x128xf32, #tpu.memory_space<any>> -> memref<1x128xf32, #tpu.memory_space<any>>
    %c14_i32_90 = arith.constant 14 : i32
    %c0_i32_91 = arith.constant 0 : i32
    %92 = tpu.memref_slice %arg18[%c14_i32_90, %c0_i32_91] : memref<16x128xf32, #tpu.memory_space<vmem>> -> memref<1x128xf32, #tpu.memory_space<vmem>>
    tpu.wait_dma2 semaphore(%arg19 : memref<!tpu.dma_semaphore, #tpu.memory_space<semaphore_mem>>) src(%91 : memref<1x128xf32, #tpu.memory_space<any>>) dst(%92 : memref<1x128xf32, #tpu.memory_space<vmem>>)
    %c15_92 = arith.constant 15 : index
    %93 = memref.load %arg0[%c15_92] : memref<16xi32, #tpu.memory_space<smem>>
    %c0_i32_93 = arith.constant 0 : i32
    %94 = tpu.memref_slice %arg1[%93, %c0_i32_93] : memref<52707x128xf32, #tpu.memory_space<any>> -> memref<1x128xf32, #tpu.memory_space<any>>
    %c15_i32_94 = arith.constant 15 : i32
    %c0_i32_95 = arith.constant 0 : i32
    %95 = tpu.memref_slice %arg18[%c15_i32_94, %c0_i32_95] : memref<16x128xf32, #tpu.memory_space<vmem>> -> memref<1x128xf32, #tpu.memory_space<vmem>>
    tpu.wait_dma2 semaphore(%arg19 : memref<!tpu.dma_semaphore, #tpu.memory_space<semaphore_mem>>) src(%94 : memref<1x128xf32, #tpu.memory_space<any>>) dst(%95 : memref<1x128xf32, #tpu.memory_space<vmem>>)
    %c0_96 = arith.constant 0 : index
    %c0_97 = arith.constant 0 : index
    %96 = vector.load %arg18[%c0_96, %c0_97] : memref<16x128xf32, #tpu.memory_space<vmem>>, vector<16x128xf32>
    %c0_98 = arith.constant 0 : index
    %c0_99 = arith.constant 0 : index
    %97 = vector.load %arg2[%c0_98, %c0_99] : memref<16x16xbf16, #tpu.memory_space<vmem>>, vector<16x16xbf16>
    %c0_100 = arith.constant 0 : index
    %c0_101 = arith.constant 0 : index
    %98 = vector.load %arg3[%c0_100, %c0_101] : memref<2x16xf32, #tpu.memory_space<vmem>>, vector<2x16xf32>
    %c0_102 = arith.constant 0 : index
    %c0_103 = arith.constant 0 : index
    %99 = vector.load %arg4[%c0_102, %c0_103] : memref<1x16xf32, #tpu.memory_space<vmem>>, vector<1x16xf32>
    %c0_104 = arith.constant 0 : index
    %c0_105 = arith.constant 0 : index
    %100 = vector.load %arg5[%c0_104, %c0_105] : memref<16x1xf32, #tpu.memory_space<vmem>>, vector<16x1xf32>
    %101 = vector.broadcast %100 : vector<16x1xf32> to vector<16x16xf32>
    %102 = vector.broadcast %99 : vector<1x16xf32> to vector<16x16xf32>
    %103 = arith.cmpf oeq, %101, %102 : vector<16x16xf32>
    %104 = arith.extui %103 : vector<16x16xi1> to vector<16x16xi32>
    %105 = arith.sitofp %104 : vector<16x16xi32> to vector<16x16xf32>
    %106 = tpu.iota {dimensions = array<i32: 0>} : vector<16x16xi32>
    %107 = tpu.iota {dimensions = array<i32: 1>} : vector<16x16xi32>
    %cst = arith.constant 1.000000e+00 : f32
    %108 = vector.broadcast %cst : f32 to vector<1x16xf32>
    %cst_106 = arith.constant 1.000000e+00 : f32
    %109 = vector.broadcast %cst_106 : f32 to vector<16x1xf32>
    %cst_107 = arith.constant 0.000000e+00 : f32
    %110 = vector.broadcast %cst_107 : f32 to vector<2x128xf32>
    %cst_108 = arith.constant 0.000000e+00 : f32
    %111 = vector.broadcast %cst_108 : f32 to vector<2x128xf32>
    %c0_109 = arith.constant 0 : index
    %c0_110 = arith.constant 0 : index
    %c0_111 = arith.constant 0 : index
    %112 = vector.load %arg6[%c0_109, %c0_110, %c0_111] : memref<3x128x128xbf16, #tpu.memory_space<vmem>>, vector<1x128x128xbf16>
    %113 = vector.shape_cast %112 : vector<1x128x128xbf16> to vector<128x128xbf16>
    %c0_112 = arith.constant 0 : index
    %c0_113 = arith.constant 0 : index
    %c0_114 = arith.constant 0 : index
    %114 = vector.load %arg7[%c0_112, %c0_113, %c0_114] : memref<3x128x128xbf16, #tpu.memory_space<vmem>>, vector<1x128x128xbf16>
    %115 = vector.shape_cast %114 : vector<1x128x128xbf16> to vector<128x128xbf16>
    %c0_115 = arith.constant 0 : index
    %c0_116 = arith.constant 0 : index
    %c0_117 = arith.constant 0 : index
    %116 = vector.load %arg8[%c0_115, %c0_116, %c0_117] : memref<3x1x128xf32, #tpu.memory_space<vmem>>, vector<1x1x128xf32>
    %117 = vector.shape_cast %116 : vector<1x1x128xf32> to vector<1x128xf32>
    %c0_118 = arith.constant 0 : index
    %c0_119 = arith.constant 0 : index
    %c0_120 = arith.constant 0 : index
    %118 = vector.load %arg9[%c0_118, %c0_119, %c0_120] : memref<3x1x128xf32, #tpu.memory_space<vmem>>, vector<1x1x128xf32>
    %119 = vector.shape_cast %118 : vector<1x1x128xf32> to vector<1x128xf32>
    %120 = arith.truncf %96 : vector<16x128xf32> to vector<16x128xbf16>
    %121 = arith.truncf %108 : vector<1x16xf32> to vector<1x16xbf16>
    %122 = vector.broadcast %121 : vector<1x16xbf16> to vector<16x16xbf16>
    %123 = arith.mulf %97, %122 : vector<16x16xbf16>
    %124 = arith.truncf %109 : vector<16x1xf32> to vector<16x1xbf16>
    %cst_121 = arith.constant dense<0.000000e+00> : vector<16x1xf32>
    %125 = tpu.matmul %97, %124, %cst_121 {dimension_numbers = #tpu.dot_dimension_numbers<[1], [0], [0], [1], [0, 0, 1, 1], [], []>} : vector<16x16xbf16>, vector<16x1xbf16>, vector<16x1xf32> -> vector<16x1xf32>
    %cst_122 = arith.constant 1.000000e+00 : f32
    %126 = vector.broadcast %cst_122 : f32 to vector<16x1xf32>
    %127 = arith.maximumf %125, %126 : vector<16x1xf32>
    %128 = tpu.reciprocal %127 {approx = true} : vector<16x1xf32> -> vector<16x1xf32>
    %cst_123 = arith.constant dense<0.000000e+00> : vector<16x128xf32>
    %129 = tpu.matmul %123, %120, %cst_123 {dimension_numbers = #tpu.dot_dimension_numbers<[1], [0], [0], [1], [0, 0, 1, 1], [], []>} : vector<16x16xbf16>, vector<16x128xbf16>, vector<16x128xf32> -> vector<16x128xf32>
    %130 = vector.broadcast %128 : vector<16x1xf32> to vector<16x128xf32>
    %131 = arith.mulf %129, %130 : vector<16x128xf32>
    %132 = arith.truncf %131 : vector<16x128xf32> to vector<16x128xbf16>
    %cst_124 = arith.constant dense<0.000000e+00> : vector<16x128xf32>
    %133 = tpu.matmul %132, %113, %cst_124 {dimension_numbers = #tpu.dot_dimension_numbers<[1], [0], [0], [1], [0, 0, 1, 1], [], []>} : vector<16x128xbf16>, vector<128x128xbf16>, vector<16x128xf32> -> vector<16x128xf32>
    %cst_125 = arith.constant dense<0.000000e+00> : vector<16x128xf32>
    %134 = tpu.matmul %120, %115, %cst_125 {dimension_numbers = #tpu.dot_dimension_numbers<[1], [0], [0], [1], [0, 0, 1, 1], [], []>} : vector<16x128xbf16>, vector<128x128xbf16>, vector<16x128xf32> -> vector<16x128xf32>
    %135 = arith.addf %133, %134 : vector<16x128xf32>
    %136 = vector.broadcast %117 : vector<1x128xf32> to vector<16x128xf32>
    %137 = arith.addf %135, %136 : vector<16x128xf32>
    %cst_126 = arith.constant 0.000000e+00 : f32
    %138 = vector.broadcast %cst_126 : f32 to vector<16x128xf32>
    %139 = arith.maximumf %137, %138 : vector<16x128xf32>
    %140 = arith.mulf %119, %119 : vector<1x128xf32>
    %141 = vector.shape_cast %140 : vector<1x128xf32> to vector<1x1x128xf32>
    %cst_127 = arith.constant dense<0.000000e+00> : vector<1xf32>
    %142 = vector.multi_reduction <add>, %141, %cst_127 [1, 2] : vector<1x1x128xf32> to vector<1xf32>
    %143 = vector.shape_cast %142 : vector<1xf32> to vector<1x1x1xf32>
    %144 = vector.extract %143[0, 0, 0] : f32 from vector<1x1x1xf32>
    %cst_128 = arith.constant 9.99999996E-13 : f32
    %145 = arith.addf %144, %cst_128 : f32
    %146 = math.rsqrt %145 : f32
    %cst_129 = arith.constant dense<0.000000e+00> : vector<16x1xf32>
    %147 = tpu.matmul %139, %119, %cst_129 {dimension_numbers = #tpu.dot_dimension_numbers<[1], [1], [0], [0], [0, 0, 1, 0], [], []>} : vector<16x128xf32>, vector<1x128xf32>, vector<16x1xf32> -> vector<16x1xf32>
    %148 = vector.broadcast %146 : f32 to vector<16x1xf32>
    %149 = arith.mulf %147, %148 : vector<16x1xf32>
    %150 = math.tanh %149 : vector<16x1xf32>
    %151 = arith.cmpi eq, %106, %107 : vector<16x16xi32>
    %cst_130 = arith.constant 0.000000e+00 : f32
    %152 = vector.shape_cast %150 : vector<16x1xf32> to vector<16x1xf32>
    %153 = vector.broadcast %152 : vector<16x1xf32> to vector<16x16xf32>
    %154 = vector.broadcast %cst_130 : f32 to vector<16x16xf32>
    %155 = arith.select %151, %153, %154 : vector<16x16xi1>, vector<16x16xf32>
    %cst_131 = arith.constant dense<0.000000e+00> : vector<16xf32>
    %156 = vector.multi_reduction <add>, %155, %cst_131 [0] : vector<16x16xf32> to vector<16xf32>
    %157 = vector.shape_cast %156 : vector<16xf32> to vector<1x16xf32>
    %158 = vector.broadcast %150 : vector<16x1xf32> to vector<16x128xf32>
    %159 = arith.mulf %139, %158 : vector<16x128xf32>
    %160 = vector.broadcast %108 : vector<1x16xf32> to vector<16x16xf32>
    %161 = arith.mulf %105, %160 : vector<16x16xf32>
    %cst_132 = arith.constant dense<0.000000e+00> : vector<16xf32>
    %162 = vector.multi_reduction <add>, %161, %cst_132 [1] : vector<16x16xf32> to vector<16xf32>
    %163 = vector.shape_cast %162 : vector<16xf32> to vector<16x1xf32>
    %cst_133 = arith.constant 8.000000e-01 : f32
    %164 = vector.broadcast %cst_133 : f32 to vector<16x1xf32>
    %165 = arith.mulf %164, %163 : vector<16x1xf32>
    %166 = math.ceil %165 : vector<16x1xf32>
    %167 = vector.broadcast %157 : vector<1x16xf32> to vector<16x16xf32>
    %168 = vector.broadcast %150 : vector<16x1xf32> to vector<16x16xf32>
    %169 = arith.cmpf ogt, %167, %168 : vector<16x16xf32>
    %170 = vector.broadcast %157 : vector<1x16xf32> to vector<16x16xf32>
    %171 = vector.broadcast %150 : vector<16x1xf32> to vector<16x16xf32>
    %172 = arith.cmpf oeq, %170, %171 : vector<16x16xf32>
    %173 = arith.cmpi slt, %107, %106 : vector<16x16xi32>
    %174 = arith.andi %172, %173 : vector<16x16xi1>
    %175 = arith.ori %169, %174 : vector<16x16xi1>
    %176 = arith.extui %175 : vector<16x16xi1> to vector<16x16xi32>
    %177 = arith.sitofp %176 : vector<16x16xi32> to vector<16x16xf32>
    %178 = arith.mulf %161, %177 : vector<16x16xf32>
    %cst_134 = arith.constant dense<0.000000e+00> : vector<16xf32>
    %179 = vector.multi_reduction <add>, %178, %cst_134 [1] : vector<16x16xf32> to vector<16xf32>
    %180 = vector.shape_cast %179 : vector<16xf32> to vector<16x1xf32>
    %181 = arith.cmpf olt, %180, %166 : vector<16x1xf32>
    %182 = arith.extui %181 : vector<16x1xi1> to vector<16x1xi32>
    %183 = arith.sitofp %182 : vector<16x1xi32> to vector<16x1xf32>
    %184 = arith.mulf %109, %183 : vector<16x1xf32>
    %185 = vector.broadcast %109 : vector<16x1xf32> to vector<16x16xf32>
    %186 = arith.mulf %105, %185 : vector<16x16xf32>
    %cst_135 = arith.constant dense<0.000000e+00> : vector<16xf32>
    %187 = vector.multi_reduction <add>, %186, %cst_135 [0] : vector<16x16xf32> to vector<16xf32>
    %188 = vector.shape_cast %187 : vector<16xf32> to vector<1x16xf32>
    %cst_136 = arith.constant 8.000000e-01 : f32
    %189 = vector.broadcast %cst_136 : f32 to vector<1x16xf32>
    %190 = arith.mulf %189, %188 : vector<1x16xf32>
    %191 = math.ceil %190 : vector<1x16xf32>
    %192 = vector.broadcast %150 : vector<16x1xf32> to vector<16x16xf32>
    %193 = vector.broadcast %157 : vector<1x16xf32> to vector<16x16xf32>
    %194 = arith.cmpf ogt, %192, %193 : vector<16x16xf32>
    %195 = vector.broadcast %150 : vector<16x1xf32> to vector<16x16xf32>
    %196 = vector.broadcast %157 : vector<1x16xf32> to vector<16x16xf32>
    %197 = arith.cmpf oeq, %195, %196 : vector<16x16xf32>
    %198 = arith.cmpi slt, %106, %107 : vector<16x16xi32>
    %199 = arith.andi %197, %198 : vector<16x16xi1>
    %200 = arith.ori %194, %199 : vector<16x16xi1>
    %201 = arith.extui %200 : vector<16x16xi1> to vector<16x16xi32>
    %202 = arith.sitofp %201 : vector<16x16xi32> to vector<16x16xf32>
    %203 = arith.mulf %186, %202 : vector<16x16xf32>
    %cst_137 = arith.constant dense<0.000000e+00> : vector<16xf32>
    %204 = vector.multi_reduction <add>, %203, %cst_137 [0] : vector<16x16xf32> to vector<16xf32>
    %205 = vector.shape_cast %204 : vector<16xf32> to vector<1x16xf32>
    %206 = arith.cmpf olt, %205, %191 : vector<1x16xf32>
    %207 = arith.extui %206 : vector<1x16xi1> to vector<1x16xi32>
    %208 = arith.sitofp %207 : vector<1x16xi32> to vector<1x16xf32>
    %209 = arith.mulf %108, %208 : vector<1x16xf32>
    %210 = vector.broadcast %209 : vector<1x16xf32> to vector<2x16xf32>
    %211 = arith.mulf %98, %210 : vector<2x16xf32>
    %cst_138 = arith.constant dense<0.000000e+00> : vector<2xf32>
    %212 = vector.multi_reduction <add>, %211, %cst_138 [1] : vector<2x16xf32> to vector<2xf32>
    %213 = vector.shape_cast %212 : vector<2xf32> to vector<2x1xf32>
    %cst_139 = arith.constant 1.000000e+00 : f32
    %214 = vector.broadcast %cst_139 : f32 to vector<2x1xf32>
    %215 = arith.maximumf %213, %214 : vector<2x1xf32>
    %cst_140 = arith.constant dense<0.000000e+00> : vector<2x128xf32>
    %216 = tpu.matmul %211, %159, %cst_140 {dimension_numbers = #tpu.dot_dimension_numbers<[1], [0], [0], [1], [0, 0, 1, 1], [], []>} : vector<2x16xf32>, vector<16x128xf32>, vector<2x128xf32> -> vector<2x128xf32>
    %217 = tpu.reciprocal %215 {approx = true} : vector<2x1xf32> -> vector<2x1xf32>
    %218 = vector.broadcast %217 : vector<2x1xf32> to vector<2x128xf32>
    %219 = arith.mulf %216, %218 : vector<2x128xf32>
    %220 = arith.addf %111, %219 : vector<2x128xf32>
    %cst_141 = arith.constant 0.000000e+00 : f32
    %221 = vector.broadcast %cst_141 : f32 to vector<16x1xf32>
    %222 = arith.cmpf oeq, %100, %221 : vector<16x1xf32>
    %223 = arith.extui %222 : vector<16x1xi1> to vector<16x1xi32>
    %224 = arith.sitofp %223 : vector<16x1xi32> to vector<16x1xf32>
    %225 = arith.mulf %224, %184 : vector<16x1xf32>
    %cst_142 = arith.constant 0.000000e+00 : f32
    %226 = vector.broadcast %cst_142 : f32 to vector<16x1xf32>
    %227 = arith.cmpf ogt, %225, %226 : vector<16x1xf32>
    %cst_143 = arith.constant -1.000000e+30 : f32
    %228 = vector.shape_cast %227 : vector<16x1xi1> to vector<16x1xi1>
    %229 = vector.broadcast %228 : vector<16x1xi1> to vector<16x128xi1>
    %230 = vector.broadcast %cst_143 : f32 to vector<16x128xf32>
    %231 = arith.select %229, %159, %230 : vector<16x128xi1>, vector<16x128xf32>
    %cst_144 = arith.constant dense<0xFF800000> : vector<128xf32>
    %232 = vector.multi_reduction <maximumf>, %231, %cst_144 [0] : vector<16x128xf32> to vector<128xf32>
    %233 = vector.shape_cast %232 : vector<128xf32> to vector<1x128xf32>
    %cst_145 = arith.constant 1.000000e+00 : f32
    %234 = vector.broadcast %cst_145 : f32 to vector<16x1xf32>
    %235 = arith.cmpf oeq, %100, %234 : vector<16x1xf32>
    %236 = arith.extui %235 : vector<16x1xi1> to vector<16x1xi32>
    %237 = arith.sitofp %236 : vector<16x1xi32> to vector<16x1xf32>
    %238 = arith.mulf %237, %184 : vector<16x1xf32>
    %cst_146 = arith.constant 0.000000e+00 : f32
    %239 = vector.broadcast %cst_146 : f32 to vector<16x1xf32>
    %240 = arith.cmpf ogt, %238, %239 : vector<16x1xf32>
    %cst_147 = arith.constant -1.000000e+30 : f32
    %241 = vector.shape_cast %240 : vector<16x1xi1> to vector<16x1xi1>
    %242 = vector.broadcast %241 : vector<16x1xi1> to vector<16x128xi1>
    %243 = vector.broadcast %cst_147 : f32 to vector<16x128xf32>
    %244 = arith.select %242, %159, %243 : vector<16x128xi1>, vector<16x128xf32>
    %cst_148 = arith.constant dense<0xFF800000> : vector<128xf32>
    %245 = vector.multi_reduction <maximumf>, %244, %cst_148 [0] : vector<16x128xf32> to vector<128xf32>
    %246 = vector.shape_cast %245 : vector<128xf32> to vector<1x128xf32>
    %247 = tpu.concatenate %233, %246 in 0 : vector<1x128xf32>, vector<1x128xf32> -> vector<2x128xf32>
    %248 = arith.addf %110, %247 : vector<2x128xf32>
    %c1_149 = arith.constant 1 : index
    %c0_150 = arith.constant 0 : index
    %c0_151 = arith.constant 0 : index
    %249 = vector.load %arg6[%c1_149, %c0_150, %c0_151] : memref<3x128x128xbf16, #tpu.memory_space<vmem>>, vector<1x128x128xbf16>
    %250 = vector.shape_cast %249 : vector<1x128x128xbf16> to vector<128x128xbf16>
    %c1_152 = arith.constant 1 : index
    %c0_153 = arith.constant 0 : index
    %c0_154 = arith.constant 0 : index
    %251 = vector.load %arg7[%c1_152, %c0_153, %c0_154] : memref<3x128x128xbf16, #tpu.memory_space<vmem>>, vector<1x128x128xbf16>
    %252 = vector.shape_cast %251 : vector<1x128x128xbf16> to vector<128x128xbf16>
    %c1_155 = arith.constant 1 : index
    %c0_156 = arith.constant 0 : index
    %c0_157 = arith.constant 0 : index
    %253 = vector.load %arg8[%c1_155, %c0_156, %c0_157] : memref<3x1x128xf32, #tpu.memory_space<vmem>>, vector<1x1x128xf32>
    %254 = vector.shape_cast %253 : vector<1x1x128xf32> to vector<1x128xf32>
    %c1_158 = arith.constant 1 : index
    %c0_159 = arith.constant 0 : index
    %c0_160 = arith.constant 0 : index
    %255 = vector.load %arg9[%c1_158, %c0_159, %c0_160] : memref<3x1x128xf32, #tpu.memory_space<vmem>>, vector<1x1x128xf32>
    %256 = vector.shape_cast %255 : vector<1x1x128xf32> to vector<1x128xf32>
    %257 = arith.truncf %159 : vector<16x128xf32> to vector<16x128xbf16>
    %258 = arith.truncf %209 : vector<1x16xf32> to vector<1x16xbf16>
    %259 = vector.broadcast %258 : vector<1x16xbf16> to vector<16x16xbf16>
    %260 = arith.mulf %97, %259 : vector<16x16xbf16>
    %261 = arith.truncf %184 : vector<16x1xf32> to vector<16x1xbf16>
    %cst_161 = arith.constant dense<0.000000e+00> : vector<16x1xf32>
    %262 = tpu.matmul %97, %261, %cst_161 {dimension_numbers = #tpu.dot_dimension_numbers<[1], [0], [0], [1], [0, 0, 1, 1], [], []>} : vector<16x16xbf16>, vector<16x1xbf16>, vector<16x1xf32> -> vector<16x1xf32>
    %cst_162 = arith.constant 1.000000e+00 : f32
    %263 = vector.broadcast %cst_162 : f32 to vector<16x1xf32>
    %264 = arith.maximumf %262, %263 : vector<16x1xf32>
    %265 = tpu.reciprocal %264 {approx = true} : vector<16x1xf32> -> vector<16x1xf32>
    %cst_163 = arith.constant dense<0.000000e+00> : vector<16x128xf32>
    %266 = tpu.matmul %260, %257, %cst_163 {dimension_numbers = #tpu.dot_dimension_numbers<[1], [0], [0], [1], [0, 0, 1, 1], [], []>} : vector<16x16xbf16>, vector<16x128xbf16>, vector<16x128xf32> -> vector<16x128xf32>
    %267 = vector.broadcast %265 : vector<16x1xf32> to vector<16x128xf32>
    %268 = arith.mulf %266, %267 : vector<16x128xf32>
    %269 = arith.truncf %268 : vector<16x128xf32> to vector<16x128xbf16>
    %cst_164 = arith.constant dense<0.000000e+00> : vector<16x128xf32>
    %270 = tpu.matmul %269, %250, %cst_164 {dimension_numbers = #tpu.dot_dimension_numbers<[1], [0], [0], [1], [0, 0, 1, 1], [], []>} : vector<16x128xbf16>, vector<128x128xbf16>, vector<16x128xf32> -> vector<16x128xf32>
    %cst_165 = arith.constant dense<0.000000e+00> : vector<16x128xf32>
    %271 = tpu.matmul %257, %252, %cst_165 {dimension_numbers = #tpu.dot_dimension_numbers<[1], [0], [0], [1], [0, 0, 1, 1], [], []>} : vector<16x128xbf16>, vector<128x128xbf16>, vector<16x128xf32> -> vector<16x128xf32>
    %272 = arith.addf %270, %271 : vector<16x128xf32>
    %273 = vector.broadcast %254 : vector<1x128xf32> to vector<16x128xf32>
    %274 = arith.addf %272, %273 : vector<16x128xf32>
    %cst_166 = arith.constant 0.000000e+00 : f32
    %275 = vector.broadcast %cst_166 : f32 to vector<16x128xf32>
    %276 = arith.maximumf %274, %275 : vector<16x128xf32>
    %277 = arith.mulf %256, %256 : vector<1x128xf32>
    %278 = vector.shape_cast %277 : vector<1x128xf32> to vector<1x1x128xf32>
    %cst_167 = arith.constant dense<0.000000e+00> : vector<1xf32>
    %279 = vector.multi_reduction <add>, %278, %cst_167 [1, 2] : vector<1x1x128xf32> to vector<1xf32>
    %280 = vector.shape_cast %279 : vector<1xf32> to vector<1x1x1xf32>
    %281 = vector.extract %280[0, 0, 0] : f32 from vector<1x1x1xf32>
    %cst_168 = arith.constant 9.99999996E-13 : f32
    %282 = arith.addf %281, %cst_168 : f32
    %283 = math.rsqrt %282 : f32
    %cst_169 = arith.constant dense<0.000000e+00> : vector<16x1xf32>
    %284 = tpu.matmul %276, %256, %cst_169 {dimension_numbers = #tpu.dot_dimension_numbers<[1], [1], [0], [0], [0, 0, 1, 0], [], []>} : vector<16x128xf32>, vector<1x128xf32>, vector<16x1xf32> -> vector<16x1xf32>
    %285 = vector.broadcast %283 : f32 to vector<16x1xf32>
    %286 = arith.mulf %284, %285 : vector<16x1xf32>
    %287 = math.tanh %286 : vector<16x1xf32>
    %288 = arith.cmpi eq, %106, %107 : vector<16x16xi32>
    %cst_170 = arith.constant 0.000000e+00 : f32
    %289 = vector.shape_cast %287 : vector<16x1xf32> to vector<16x1xf32>
    %290 = vector.broadcast %289 : vector<16x1xf32> to vector<16x16xf32>
    %291 = vector.broadcast %cst_170 : f32 to vector<16x16xf32>
    %292 = arith.select %288, %290, %291 : vector<16x16xi1>, vector<16x16xf32>
    %cst_171 = arith.constant dense<0.000000e+00> : vector<16xf32>
    %293 = vector.multi_reduction <add>, %292, %cst_171 [0] : vector<16x16xf32> to vector<16xf32>
    %294 = vector.shape_cast %293 : vector<16xf32> to vector<1x16xf32>
    %295 = vector.broadcast %287 : vector<16x1xf32> to vector<16x128xf32>
    %296 = arith.mulf %276, %295 : vector<16x128xf32>
    %297 = vector.broadcast %209 : vector<1x16xf32> to vector<16x16xf32>
    %298 = arith.mulf %105, %297 : vector<16x16xf32>
    %cst_172 = arith.constant dense<0.000000e+00> : vector<16xf32>
    %299 = vector.multi_reduction <add>, %298, %cst_172 [1] : vector<16x16xf32> to vector<16xf32>
    %300 = vector.shape_cast %299 : vector<16xf32> to vector<16x1xf32>
    %cst_173 = arith.constant 8.000000e-01 : f32
    %301 = vector.broadcast %cst_173 : f32 to vector<16x1xf32>
    %302 = arith.mulf %301, %300 : vector<16x1xf32>
    %303 = math.ceil %302 : vector<16x1xf32>
    %304 = vector.broadcast %294 : vector<1x16xf32> to vector<16x16xf32>
    %305 = vector.broadcast %287 : vector<16x1xf32> to vector<16x16xf32>
    %306 = arith.cmpf ogt, %304, %305 : vector<16x16xf32>
    %307 = vector.broadcast %294 : vector<1x16xf32> to vector<16x16xf32>
    %308 = vector.broadcast %287 : vector<16x1xf32> to vector<16x16xf32>
    %309 = arith.cmpf oeq, %307, %308 : vector<16x16xf32>
    %310 = arith.cmpi slt, %107, %106 : vector<16x16xi32>
    %311 = arith.andi %309, %310 : vector<16x16xi1>
    %312 = arith.ori %306, %311 : vector<16x16xi1>
    %313 = arith.extui %312 : vector<16x16xi1> to vector<16x16xi32>
    %314 = arith.sitofp %313 : vector<16x16xi32> to vector<16x16xf32>
    %315 = arith.mulf %298, %314 : vector<16x16xf32>
    %cst_174 = arith.constant dense<0.000000e+00> : vector<16xf32>
    %316 = vector.multi_reduction <add>, %315, %cst_174 [1] : vector<16x16xf32> to vector<16xf32>
    %317 = vector.shape_cast %316 : vector<16xf32> to vector<16x1xf32>
    %318 = arith.cmpf olt, %317, %303 : vector<16x1xf32>
    %319 = arith.extui %318 : vector<16x1xi1> to vector<16x1xi32>
    %320 = arith.sitofp %319 : vector<16x1xi32> to vector<16x1xf32>
    %321 = arith.mulf %184, %320 : vector<16x1xf32>
    %322 = vector.broadcast %184 : vector<16x1xf32> to vector<16x16xf32>
    %323 = arith.mulf %105, %322 : vector<16x16xf32>
    %cst_175 = arith.constant dense<0.000000e+00> : vector<16xf32>
    %324 = vector.multi_reduction <add>, %323, %cst_175 [0] : vector<16x16xf32> to vector<16xf32>
    %325 = vector.shape_cast %324 : vector<16xf32> to vector<1x16xf32>
    %cst_176 = arith.constant 8.000000e-01 : f32
    %326 = vector.broadcast %cst_176 : f32 to vector<1x16xf32>
    %327 = arith.mulf %326, %325 : vector<1x16xf32>
    %328 = math.ceil %327 : vector<1x16xf32>
    %329 = vector.broadcast %287 : vector<16x1xf32> to vector<16x16xf32>
    %330 = vector.broadcast %294 : vector<1x16xf32> to vector<16x16xf32>
    %331 = arith.cmpf ogt, %329, %330 : vector<16x16xf32>
    %332 = vector.broadcast %287 : vector<16x1xf32> to vector<16x16xf32>
    %333 = vector.broadcast %294 : vector<1x16xf32> to vector<16x16xf32>
    %334 = arith.cmpf oeq, %332, %333 : vector<16x16xf32>
    %335 = arith.cmpi slt, %106, %107 : vector<16x16xi32>
    %336 = arith.andi %334, %335 : vector<16x16xi1>
    %337 = arith.ori %331, %336 : vector<16x16xi1>
    %338 = arith.extui %337 : vector<16x16xi1> to vector<16x16xi32>
    %339 = arith.sitofp %338 : vector<16x16xi32> to vector<16x16xf32>
    %340 = arith.mulf %323, %339 : vector<16x16xf32>
    %cst_177 = arith.constant dense<0.000000e+00> : vector<16xf32>
    %341 = vector.multi_reduction <add>, %340, %cst_177 [0] : vector<16x16xf32> to vector<16xf32>
    %342 = vector.shape_cast %341 : vector<16xf32> to vector<1x16xf32>
    %343 = arith.cmpf olt, %342, %328 : vector<1x16xf32>
    %344 = arith.extui %343 : vector<1x16xi1> to vector<1x16xi32>
    %345 = arith.sitofp %344 : vector<1x16xi32> to vector<1x16xf32>
    %346 = arith.mulf %209, %345 : vector<1x16xf32>
    %347 = vector.broadcast %346 : vector<1x16xf32> to vector<2x16xf32>
    %348 = arith.mulf %98, %347 : vector<2x16xf32>
    %cst_178 = arith.constant dense<0.000000e+00> : vector<2xf32>
    %349 = vector.multi_reduction <add>, %348, %cst_178 [1] : vector<2x16xf32> to vector<2xf32>
    %350 = vector.shape_cast %349 : vector<2xf32> to vector<2x1xf32>
    %cst_179 = arith.constant 1.000000e+00 : f32
    %351 = vector.broadcast %cst_179 : f32 to vector<2x1xf32>
    %352 = arith.maximumf %350, %351 : vector<2x1xf32>
    %cst_180 = arith.constant dense<0.000000e+00> : vector<2x128xf32>
    %353 = tpu.matmul %348, %296, %cst_180 {dimension_numbers = #tpu.dot_dimension_numbers<[1], [0], [0], [1], [0, 0, 1, 1], [], []>} : vector<2x16xf32>, vector<16x128xf32>, vector<2x128xf32> -> vector<2x128xf32>
    %354 = tpu.reciprocal %352 {approx = true} : vector<2x1xf32> -> vector<2x1xf32>
    %355 = vector.broadcast %354 : vector<2x1xf32> to vector<2x128xf32>
    %356 = arith.mulf %353, %355 : vector<2x128xf32>
    %357 = arith.addf %220, %356 : vector<2x128xf32>
    %cst_181 = arith.constant 0.000000e+00 : f32
    %358 = vector.broadcast %cst_181 : f32 to vector<16x1xf32>
    %359 = arith.cmpf oeq, %100, %358 : vector<16x1xf32>
    %360 = arith.extui %359 : vector<16x1xi1> to vector<16x1xi32>
    %361 = arith.sitofp %360 : vector<16x1xi32> to vector<16x1xf32>
    %362 = arith.mulf %361, %321 : vector<16x1xf32>
    %cst_182 = arith.constant 0.000000e+00 : f32
    %363 = vector.broadcast %cst_182 : f32 to vector<16x1xf32>
    %364 = arith.cmpf ogt, %362, %363 : vector<16x1xf32>
    %cst_183 = arith.constant -1.000000e+30 : f32
    %365 = vector.shape_cast %364 : vector<16x1xi1> to vector<16x1xi1>
    %366 = vector.broadcast %365 : vector<16x1xi1> to vector<16x128xi1>
    %367 = vector.broadcast %cst_183 : f32 to vector<16x128xf32>
    %368 = arith.select %366, %296, %367 : vector<16x128xi1>, vector<16x128xf32>
    %cst_184 = arith.constant dense<0xFF800000> : vector<128xf32>
    %369 = vector.multi_reduction <maximumf>, %368, %cst_184 [0] : vector<16x128xf32> to vector<128xf32>
    %370 = vector.shape_cast %369 : vector<128xf32> to vector<1x128xf32>
    %cst_185 = arith.constant 1.000000e+00 : f32
    %371 = vector.broadcast %cst_185 : f32 to vector<16x1xf32>
    %372 = arith.cmpf oeq, %100, %371 : vector<16x1xf32>
    %373 = arith.extui %372 : vector<16x1xi1> to vector<16x1xi32>
    %374 = arith.sitofp %373 : vector<16x1xi32> to vector<16x1xf32>
    %375 = arith.mulf %374, %321 : vector<16x1xf32>
    %cst_186 = arith.constant 0.000000e+00 : f32
    %376 = vector.broadcast %cst_186 : f32 to vector<16x1xf32>
    %377 = arith.cmpf ogt, %375, %376 : vector<16x1xf32>
    %cst_187 = arith.constant -1.000000e+30 : f32
    %378 = vector.shape_cast %377 : vector<16x1xi1> to vector<16x1xi1>
    %379 = vector.broadcast %378 : vector<16x1xi1> to vector<16x128xi1>
    %380 = vector.broadcast %cst_187 : f32 to vector<16x128xf32>
    %381 = arith.select %379, %296, %380 : vector<16x128xi1>, vector<16x128xf32>
    %cst_188 = arith.constant dense<0xFF800000> : vector<128xf32>
    %382 = vector.multi_reduction <maximumf>, %381, %cst_188 [0] : vector<16x128xf32> to vector<128xf32>
    %383 = vector.shape_cast %382 : vector<128xf32> to vector<1x128xf32>
    %384 = tpu.concatenate %370, %383 in 0 : vector<1x128xf32>, vector<1x128xf32> -> vector<2x128xf32>
    %385 = arith.addf %248, %384 : vector<2x128xf32>
    %c2_189 = arith.constant 2 : index
    %c0_190 = arith.constant 0 : index
    %c0_191 = arith.constant 0 : index
    %386 = vector.load %arg6[%c2_189, %c0_190, %c0_191] : memref<3x128x128xbf16, #tpu.memory_space<vmem>>, vector<1x128x128xbf16>
    %387 = vector.shape_cast %386 : vector<1x128x128xbf16> to vector<128x128xbf16>
    %c2_192 = arith.constant 2 : index
    %c0_193 = arith.constant 0 : index
    %c0_194 = arith.constant 0 : index
    %388 = vector.load %arg7[%c2_192, %c0_193, %c0_194] : memref<3x128x128xbf16, #tpu.memory_space<vmem>>, vector<1x128x128xbf16>
    %389 = vector.shape_cast %388 : vector<1x128x128xbf16> to vector<128x128xbf16>
    %c2_195 = arith.constant 2 : index
    %c0_196 = arith.constant 0 : index
    %c0_197 = arith.constant 0 : index
    %390 = vector.load %arg8[%c2_195, %c0_196, %c0_197] : memref<3x1x128xf32, #tpu.memory_space<vmem>>, vector<1x1x128xf32>
    %391 = vector.shape_cast %390 : vector<1x1x128xf32> to vector<1x128xf32>
    %c2_198 = arith.constant 2 : index
    %c0_199 = arith.constant 0 : index
    %c0_200 = arith.constant 0 : index
    %392 = vector.load %arg9[%c2_198, %c0_199, %c0_200] : memref<3x1x128xf32, #tpu.memory_space<vmem>>, vector<1x1x128xf32>
    %393 = vector.shape_cast %392 : vector<1x1x128xf32> to vector<1x128xf32>
    %394 = arith.truncf %296 : vector<16x128xf32> to vector<16x128xbf16>
    %395 = arith.truncf %346 : vector<1x16xf32> to vector<1x16xbf16>
    %396 = vector.broadcast %395 : vector<1x16xbf16> to vector<16x16xbf16>
    %397 = arith.mulf %97, %396 : vector<16x16xbf16>
    %398 = arith.truncf %321 : vector<16x1xf32> to vector<16x1xbf16>
    %cst_201 = arith.constant dense<0.000000e+00> : vector<16x1xf32>
    %399 = tpu.matmul %97, %398, %cst_201 {dimension_numbers = #tpu.dot_dimension_numbers<[1], [0], [0], [1], [0, 0, 1, 1], [], []>} : vector<16x16xbf16>, vector<16x1xbf16>, vector<16x1xf32> -> vector<16x1xf32>
    %cst_202 = arith.constant 1.000000e+00 : f32
    %400 = vector.broadcast %cst_202 : f32 to vector<16x1xf32>
    %401 = arith.maximumf %399, %400 : vector<16x1xf32>
    %402 = tpu.reciprocal %401 {approx = true} : vector<16x1xf32> -> vector<16x1xf32>
    %cst_203 = arith.constant dense<0.000000e+00> : vector<16x128xf32>
    %403 = tpu.matmul %397, %394, %cst_203 {dimension_numbers = #tpu.dot_dimension_numbers<[1], [0], [0], [1], [0, 0, 1, 1], [], []>} : vector<16x16xbf16>, vector<16x128xbf16>, vector<16x128xf32> -> vector<16x128xf32>
    %404 = vector.broadcast %402 : vector<16x1xf32> to vector<16x128xf32>
    %405 = arith.mulf %403, %404 : vector<16x128xf32>
    %406 = arith.truncf %405 : vector<16x128xf32> to vector<16x128xbf16>
    %cst_204 = arith.constant dense<0.000000e+00> : vector<16x128xf32>
    %407 = tpu.matmul %406, %387, %cst_204 {dimension_numbers = #tpu.dot_dimension_numbers<[1], [0], [0], [1], [0, 0, 1, 1], [], []>} : vector<16x128xbf16>, vector<128x128xbf16>, vector<16x128xf32> -> vector<16x128xf32>
    %cst_205 = arith.constant dense<0.000000e+00> : vector<16x128xf32>
    %408 = tpu.matmul %394, %389, %cst_205 {dimension_numbers = #tpu.dot_dimension_numbers<[1], [0], [0], [1], [0, 0, 1, 1], [], []>} : vector<16x128xbf16>, vector<128x128xbf16>, vector<16x128xf32> -> vector<16x128xf32>
    %409 = arith.addf %407, %408 : vector<16x128xf32>
    %410 = vector.broadcast %391 : vector<1x128xf32> to vector<16x128xf32>
    %411 = arith.addf %409, %410 : vector<16x128xf32>
    %cst_206 = arith.constant 0.000000e+00 : f32
    %412 = vector.broadcast %cst_206 : f32 to vector<16x128xf32>
    %413 = arith.maximumf %411, %412 : vector<16x128xf32>
    %414 = arith.mulf %393, %393 : vector<1x128xf32>
    %415 = vector.shape_cast %414 : vector<1x128xf32> to vector<1x1x128xf32>
    %cst_207 = arith.constant dense<0.000000e+00> : vector<1xf32>
    %416 = vector.multi_reduction <add>, %415, %cst_207 [1, 2] : vector<1x1x128xf32> to vector<1xf32>
    %417 = vector.shape_cast %416 : vector<1xf32> to vector<1x1x1xf32>
    %418 = vector.extract %417[0, 0, 0] : f32 from vector<1x1x1xf32>
    %cst_208 = arith.constant 9.99999996E-13 : f32
    %419 = arith.addf %418, %cst_208 : f32
    %420 = math.rsqrt %419 : f32
    %cst_209 = arith.constant dense<0.000000e+00> : vector<16x1xf32>
    %421 = tpu.matmul %413, %393, %cst_209 {dimension_numbers = #tpu.dot_dimension_numbers<[1], [1], [0], [0], [0, 0, 1, 0], [], []>} : vector<16x128xf32>, vector<1x128xf32>, vector<16x1xf32> -> vector<16x1xf32>
    %422 = vector.broadcast %420 : f32 to vector<16x1xf32>
    %423 = arith.mulf %421, %422 : vector<16x1xf32>
    %424 = math.tanh %423 : vector<16x1xf32>
    %425 = arith.cmpi eq, %106, %107 : vector<16x16xi32>
    %cst_210 = arith.constant 0.000000e+00 : f32
    %426 = vector.shape_cast %424 : vector<16x1xf32> to vector<16x1xf32>
    %427 = vector.broadcast %426 : vector<16x1xf32> to vector<16x16xf32>
    %428 = vector.broadcast %cst_210 : f32 to vector<16x16xf32>
    %429 = arith.select %425, %427, %428 : vector<16x16xi1>, vector<16x16xf32>
    %cst_211 = arith.constant dense<0.000000e+00> : vector<16xf32>
    %430 = vector.multi_reduction <add>, %429, %cst_211 [0] : vector<16x16xf32> to vector<16xf32>
    %431 = vector.shape_cast %430 : vector<16xf32> to vector<1x16xf32>
    %432 = vector.broadcast %424 : vector<16x1xf32> to vector<16x128xf32>
    %433 = arith.mulf %413, %432 : vector<16x128xf32>
    %434 = vector.broadcast %346 : vector<1x16xf32> to vector<16x16xf32>
    %435 = arith.mulf %105, %434 : vector<16x16xf32>
    %cst_212 = arith.constant dense<0.000000e+00> : vector<16xf32>
    %436 = vector.multi_reduction <add>, %435, %cst_212 [1] : vector<16x16xf32> to vector<16xf32>
    %437 = vector.shape_cast %436 : vector<16xf32> to vector<16x1xf32>
    %cst_213 = arith.constant 8.000000e-01 : f32
    %438 = vector.broadcast %cst_213 : f32 to vector<16x1xf32>
    %439 = arith.mulf %438, %437 : vector<16x1xf32>
    %440 = math.ceil %439 : vector<16x1xf32>
    %441 = vector.broadcast %431 : vector<1x16xf32> to vector<16x16xf32>
    %442 = vector.broadcast %424 : vector<16x1xf32> to vector<16x16xf32>
    %443 = arith.cmpf ogt, %441, %442 : vector<16x16xf32>
    %444 = vector.broadcast %431 : vector<1x16xf32> to vector<16x16xf32>
    %445 = vector.broadcast %424 : vector<16x1xf32> to vector<16x16xf32>
    %446 = arith.cmpf oeq, %444, %445 : vector<16x16xf32>
    %447 = arith.cmpi slt, %107, %106 : vector<16x16xi32>
    %448 = arith.andi %446, %447 : vector<16x16xi1>
    %449 = arith.ori %443, %448 : vector<16x16xi1>
    %450 = arith.extui %449 : vector<16x16xi1> to vector<16x16xi32>
    %451 = arith.sitofp %450 : vector<16x16xi32> to vector<16x16xf32>
    %452 = arith.mulf %435, %451 : vector<16x16xf32>
    %cst_214 = arith.constant dense<0.000000e+00> : vector<16xf32>
    %453 = vector.multi_reduction <add>, %452, %cst_214 [1] : vector<16x16xf32> to vector<16xf32>
    %454 = vector.shape_cast %453 : vector<16xf32> to vector<16x1xf32>
    %455 = arith.cmpf olt, %454, %440 : vector<16x1xf32>
    %456 = arith.extui %455 : vector<16x1xi1> to vector<16x1xi32>
    %457 = arith.sitofp %456 : vector<16x1xi32> to vector<16x1xf32>
    %458 = arith.mulf %321, %457 : vector<16x1xf32>
    %459 = vector.broadcast %321 : vector<16x1xf32> to vector<16x16xf32>
    %460 = arith.mulf %105, %459 : vector<16x16xf32>
    %cst_215 = arith.constant dense<0.000000e+00> : vector<16xf32>
    %461 = vector.multi_reduction <add>, %460, %cst_215 [0] : vector<16x16xf32> to vector<16xf32>
    %462 = vector.shape_cast %461 : vector<16xf32> to vector<1x16xf32>
    %cst_216 = arith.constant 8.000000e-01 : f32
    %463 = vector.broadcast %cst_216 : f32 to vector<1x16xf32>
    %464 = arith.mulf %463, %462 : vector<1x16xf32>
    %465 = math.ceil %464 : vector<1x16xf32>
    %466 = vector.broadcast %424 : vector<16x1xf32> to vector<16x16xf32>
    %467 = vector.broadcast %431 : vector<1x16xf32> to vector<16x16xf32>
    %468 = arith.cmpf ogt, %466, %467 : vector<16x16xf32>
    %469 = vector.broadcast %424 : vector<16x1xf32> to vector<16x16xf32>
    %470 = vector.broadcast %431 : vector<1x16xf32> to vector<16x16xf32>
    %471 = arith.cmpf oeq, %469, %470 : vector<16x16xf32>
    %472 = arith.cmpi slt, %106, %107 : vector<16x16xi32>
    %473 = arith.andi %471, %472 : vector<16x16xi1>
    %474 = arith.ori %468, %473 : vector<16x16xi1>
    %475 = arith.extui %474 : vector<16x16xi1> to vector<16x16xi32>
    %476 = arith.sitofp %475 : vector<16x16xi32> to vector<16x16xf32>
    %477 = arith.mulf %460, %476 : vector<16x16xf32>
    %cst_217 = arith.constant dense<0.000000e+00> : vector<16xf32>
    %478 = vector.multi_reduction <add>, %477, %cst_217 [0] : vector<16x16xf32> to vector<16xf32>
    %479 = vector.shape_cast %478 : vector<16xf32> to vector<1x16xf32>
    %480 = arith.cmpf olt, %479, %465 : vector<1x16xf32>
    %481 = arith.extui %480 : vector<1x16xi1> to vector<1x16xi32>
    %482 = arith.sitofp %481 : vector<1x16xi32> to vector<1x16xf32>
    %483 = arith.mulf %346, %482 : vector<1x16xf32>
    %484 = vector.broadcast %483 : vector<1x16xf32> to vector<2x16xf32>
    %485 = arith.mulf %98, %484 : vector<2x16xf32>
    %cst_218 = arith.constant dense<0.000000e+00> : vector<2xf32>
    %486 = vector.multi_reduction <add>, %485, %cst_218 [1] : vector<2x16xf32> to vector<2xf32>
    %487 = vector.shape_cast %486 : vector<2xf32> to vector<2x1xf32>
    %cst_219 = arith.constant 1.000000e+00 : f32
    %488 = vector.broadcast %cst_219 : f32 to vector<2x1xf32>
    %489 = arith.maximumf %487, %488 : vector<2x1xf32>
    %cst_220 = arith.constant dense<0.000000e+00> : vector<2x128xf32>
    %490 = tpu.matmul %485, %433, %cst_220 {dimension_numbers = #tpu.dot_dimension_numbers<[1], [0], [0], [1], [0, 0, 1, 1], [], []>} : vector<2x16xf32>, vector<16x128xf32>, vector<2x128xf32> -> vector<2x128xf32>
    %491 = tpu.reciprocal %489 {approx = true} : vector<2x1xf32> -> vector<2x1xf32>
    %492 = vector.broadcast %491 : vector<2x1xf32> to vector<2x128xf32>
    %493 = arith.mulf %490, %492 : vector<2x128xf32>
    %494 = arith.addf %357, %493 : vector<2x128xf32>
    %cst_221 = arith.constant 0.000000e+00 : f32
    %495 = vector.broadcast %cst_221 : f32 to vector<16x1xf32>
    %496 = arith.cmpf oeq, %100, %495 : vector<16x1xf32>
    %497 = arith.extui %496 : vector<16x1xi1> to vector<16x1xi32>
    %498 = arith.sitofp %497 : vector<16x1xi32> to vector<16x1xf32>
    %499 = arith.mulf %498, %458 : vector<16x1xf32>
    %cst_222 = arith.constant 0.000000e+00 : f32
    %500 = vector.broadcast %cst_222 : f32 to vector<16x1xf32>
    %501 = arith.cmpf ogt, %499, %500 : vector<16x1xf32>
    %cst_223 = arith.constant -1.000000e+30 : f32
    %502 = vector.shape_cast %501 : vector<16x1xi1> to vector<16x1xi1>
    %503 = vector.broadcast %502 : vector<16x1xi1> to vector<16x128xi1>
    %504 = vector.broadcast %cst_223 : f32 to vector<16x128xf32>
    %505 = arith.select %503, %433, %504 : vector<16x128xi1>, vector<16x128xf32>
    %cst_224 = arith.constant dense<0xFF800000> : vector<128xf32>
    %506 = vector.multi_reduction <maximumf>, %505, %cst_224 [0] : vector<16x128xf32> to vector<128xf32>
    %507 = vector.shape_cast %506 : vector<128xf32> to vector<1x128xf32>
    %cst_225 = arith.constant 1.000000e+00 : f32
    %508 = vector.broadcast %cst_225 : f32 to vector<16x1xf32>
    %509 = arith.cmpf oeq, %100, %508 : vector<16x1xf32>
    %510 = arith.extui %509 : vector<16x1xi1> to vector<16x1xi32>
    %511 = arith.sitofp %510 : vector<16x1xi32> to vector<16x1xf32>
    %512 = arith.mulf %511, %458 : vector<16x1xf32>
    %cst_226 = arith.constant 0.000000e+00 : f32
    %513 = vector.broadcast %cst_226 : f32 to vector<16x1xf32>
    %514 = arith.cmpf ogt, %512, %513 : vector<16x1xf32>
    %cst_227 = arith.constant -1.000000e+30 : f32
    %515 = vector.shape_cast %514 : vector<16x1xi1> to vector<16x1xi1>
    %516 = vector.broadcast %515 : vector<16x1xi1> to vector<16x128xi1>
    %517 = vector.broadcast %cst_227 : f32 to vector<16x128xf32>
    %518 = arith.select %516, %433, %517 : vector<16x128xi1>, vector<16x128xf32>
    %cst_228 = arith.constant dense<0xFF800000> : vector<128xf32>
    %519 = vector.multi_reduction <maximumf>, %518, %cst_228 [0] : vector<16x128xf32> to vector<128xf32>
    %520 = vector.shape_cast %519 : vector<128xf32> to vector<1x128xf32>
    %521 = tpu.concatenate %507, %520 in 0 : vector<1x128xf32>, vector<1x128xf32> -> vector<2x128xf32>
    %522 = arith.addf %385, %521 : vector<2x128xf32>
    %c0_229 = arith.constant 0 : index
    %c0_230 = arith.constant 0 : index
    %523 = vector.load %arg10[%c0_229, %c0_230] : memref<128x128xf32, #tpu.memory_space<vmem>>, vector<128x128xf32>
    %cst_231 = arith.constant dense<0.000000e+00> : vector<2x128xf32>
    %524 = tpu.matmul %522, %523, %cst_231 {dimension_numbers = #tpu.dot_dimension_numbers<[1], [0], [0], [1], [0, 0, 1, 1], [], []>} : vector<2x128xf32>, vector<128x128xf32>, vector<2x128xf32> -> vector<2x128xf32>
    %c0_232 = arith.constant 0 : index
    %c0_233 = arith.constant 0 : index
    %525 = vector.load %arg11[%c0_232, %c0_233] : memref<128x128xf32, #tpu.memory_space<vmem>>, vector<128x128xf32>
    %cst_234 = arith.constant dense<0.000000e+00> : vector<2x128xf32>
    %526 = tpu.matmul %494, %525, %cst_234 {dimension_numbers = #tpu.dot_dimension_numbers<[1], [0], [0], [1], [0, 0, 1, 1], [], []>} : vector<2x128xf32>, vector<128x128xf32>, vector<2x128xf32> -> vector<2x128xf32>
    %527 = arith.addf %524, %526 : vector<2x128xf32>
    %c0_235 = arith.constant 0 : index
    %c0_236 = arith.constant 0 : index
    %528 = vector.load %arg12[%c0_235, %c0_236] : memref<1x128xf32, #tpu.memory_space<vmem>>, vector<1x128xf32>
    %529 = vector.broadcast %528 : vector<1x128xf32> to vector<2x128xf32>
    %530 = arith.addf %527, %529 : vector<2x128xf32>
    %cst_237 = arith.constant 0.000000e+00 : f32
    %531 = vector.broadcast %cst_237 : f32 to vector<2x128xf32>
    %532 = arith.maximumf %530, %531 : vector<2x128xf32>
    %c0_238 = arith.constant 0 : index
    %c0_239 = arith.constant 0 : index
    %533 = vector.load %arg13[%c0_238, %c0_239] : memref<128x64xf32, #tpu.memory_space<vmem>>, vector<128x64xf32>
    %cst_240 = arith.constant dense<0.000000e+00> : vector<2x64xf32>
    %534 = tpu.matmul %532, %533, %cst_240 {dimension_numbers = #tpu.dot_dimension_numbers<[1], [0], [0], [1], [0, 0, 1, 1], [], []>} : vector<2x128xf32>, vector<128x64xf32>, vector<2x64xf32> -> vector<2x64xf32>
    %c0_241 = arith.constant 0 : index
    %c0_242 = arith.constant 0 : index
    %535 = vector.load %arg14[%c0_241, %c0_242] : memref<1x64xf32, #tpu.memory_space<vmem>>, vector<1x64xf32>
    %536 = vector.broadcast %535 : vector<1x64xf32> to vector<2x64xf32>
    %537 = arith.addf %534, %536 : vector<2x64xf32>
    %cst_243 = arith.constant 0.000000e+00 : f32
    %538 = vector.broadcast %cst_243 : f32 to vector<2x64xf32>
    %539 = arith.maximumf %537, %538 : vector<2x64xf32>
    %c0_244 = arith.constant 0 : index
    %c0_245 = arith.constant 0 : index
    %540 = vector.load %arg15[%c0_244, %c0_245] : memref<1x64xf32, #tpu.memory_space<vmem>>, vector<1x64xf32>
    %cst_246 = arith.constant dense<0.000000e+00> : vector<1x2xf32>
    %541 = tpu.matmul %540, %539, %cst_246 {dimension_numbers = #tpu.dot_dimension_numbers<[1], [1], [0], [0], [0, 0, 1, 0], [], []>} : vector<1x64xf32>, vector<2x64xf32>, vector<1x2xf32> -> vector<1x2xf32>
    %c0_247 = arith.constant 0 : index
    %c0_248 = arith.constant 0 : index
    %542 = vector.load %arg16[%c0_247, %c0_248] : memref<1x1xf32, #tpu.memory_space<vmem>>, vector<1x1xf32>
    %543 = vector.broadcast %542 : vector<1x1xf32> to vector<1x2xf32>
    %544 = arith.addf %541, %543 : vector<1x2xf32>
    %545 = arith.negf %544 : vector<1x2xf32>
    %546 = math.exp %545 : vector<1x2xf32>
    %cst_249 = arith.constant 1.000000e+00 : f32
    %547 = vector.broadcast %cst_249 : f32 to vector<1x2xf32>
    %548 = arith.addf %547, %546 : vector<1x2xf32>
    %549 = arith.divf %547, %548 : vector<1x2xf32>
    %c0_250 = arith.constant 0 : index
    %c0_251 = arith.constant 0 : index
    %550 = vector.load %arg17[%c0_250, %c0_251] : memref<1x2xf32, #tpu.memory_space<vmem>>, vector<1x2xf32>
    tpu.vector_store %arg17[%c0_250, %c0_251], %549 {strides = array<i32>} : memref<1x2xf32, #tpu.memory_space<vmem>>, vector<1x2xf32>,
    return
  }
}

</mosaic_0001>

<llo_original>
// kernel: net_forward.1
$region0: #{net_forward.1}
  #allocation0 [shape = 'u32[]', space=smem, size = 0x4, offset = 0x4, fixed_abs, tag = 'smem constant byte address 0x4 - core index']
  #allocation1 [shape = 'u32[72,128]{1,0:T(1,128)}', space=vmem, size = 0x9000, scoped, tag = 'internal scratch']
  #allocation2 [shape = 'f32[16,128]{1,0:T(8,128)}', space=vmem, size = 0x2000, scoped, tag = 'scratch operand']
  #allocation3 [shape = 's32[1]{0}', space=sflag, size = 0x4, scoped, tag = 'scratch operand']
  #allocation4 [shape = 'f32[1,1]{1,0:T(1,128)S(1)}', space=vmem, size = 0x200, scoped, tag = 'scoped memory for net_forward.1']
  #allocation25 [shape = 's32[]', space=sflag, size = 0x4, offset = 0, fixed_abs, tag = 'sflag constant byte address 0x0 - dummy sync flag']
  #allocation26 [shape = 's32[]', space=sflag, size = 0x4, offset = 0, fixed_abs, tag = 'sflag constant byte address 0x0 - dummy sync flag']
  #allocation27 [shape = 'u32[]', space=smem, size = 0x4, offset = 0x44, fixed_abs, tag = 'smem constant byte address 0x44 - assertion arg 0']
  #allocation28 [shape = 'u32[]', space=smem, size = 0x4, offset = 0x48, fixed_abs, tag = 'smem constant byte address 0x48 - assertion arg 1']
  #allocation29 [shape = 's32[]', space=sflag, size = 0x4, offset = 0, fixed_abs, tag = 'sflag constant byte address 0x0 - dummy sync flag']
  #allocation30 [shape = 's32[]', space=sflag, size = 0x4, offset = 0, fixed_abs, tag = 'sflag constant byte address 0x0 - dummy sync flag']
  #allocation31 [shape = 's32[]', space=sflag, size = 0x4, offset = 0, fixed_abs, tag = 'sflag constant byte address 0x0 - dummy sync flag']
  #allocation32 [shape = 's32[]', space=sflag, size = 0x4, offset = 0, fixed_abs, tag = 'sflag constant byte address 0x0 - dummy sync flag']
  #allocation33 [shape = 's32[]', space=sflag, size = 0x4, offset = 0, fixed_abs, tag = 'sflag constant byte address 0x0 - dummy sync flag']
  #allocation34 [shape = 's32[]', space=sflag, size = 0x4, offset = 0, fixed_abs, tag = 'sflag constant byte address 0x0 - dummy sync flag']
  #allocation35 [shape = 's32[]', space=sflag, size = 0x4, offset = 0, fixed_abs, tag = 'sflag constant byte address 0x0 - dummy sync flag']
  #allocation36 [shape = 's32[]', space=sflag, size = 0x4, offset = 0, fixed_abs, tag = 'sflag constant byte address 0x0 - dummy sync flag']
  #allocation37 [shape = 's32[]', space=sflag, size = 0x4, offset = 0, fixed_abs, tag = 'sflag constant byte address 0x0 - dummy sync flag']
  #allocation38 [shape = 's32[]', space=sflag, size = 0x4, offset = 0, fixed_abs, tag = 'sflag constant byte address 0x0 - dummy sync flag']
  #allocation39 [shape = 's32[]', space=sflag, size = 0x4, offset = 0, fixed_abs, tag = 'sflag constant byte address 0x0 - dummy sync flag']
  #allocation40 [shape = 's32[]', space=sflag, size = 0x4, offset = 0, fixed_abs, tag = 'sflag constant byte address 0x0 - dummy sync flag']
  #allocation41 [shape = 's32[]', space=sflag, size = 0x4, offset = 0, fixed_abs, tag = 'sflag constant byte address 0x0 - dummy sync flag']
  #allocation42 [shape = 's32[]', space=sflag, size = 0x4, offset = 0, fixed_abs, tag = 'sflag constant byte address 0x0 - dummy sync flag']
  #allocation43 [shape = 's32[]', space=sflag, size = 0x4, offset = 0, fixed_abs, tag = 'sflag constant byte address 0x0 - dummy sync flag']
  #allocation44 [shape = 's32[]', space=sflag, size = 0x4, offset = 0, fixed_abs, tag = 'sflag constant byte address 0x0 - dummy sync flag']
  #allocation45 [shape = 's32[]', space=sflag, size = 0x4, offset = 0, fixed_abs, tag = 'sflag constant byte address 0x0 - dummy sync flag']
  #allocation46 [shape = 's32[]', space=sflag, size = 0x4, offset = 0, fixed_abs, tag = 'sflag constant byte address 0x0 - dummy sync flag']
  #allocation47 [shape = 's32[]', space=sflag, size = 0x4, offset = 0, fixed_abs, tag = 'sflag constant byte address 0x0 - dummy sync flag']
  #allocation48 [shape = 's32[]', space=sflag, size = 0x4, offset = 0, fixed_abs, tag = 'sflag constant byte address 0x0 - dummy sync flag']
  #allocation49 [shape = 's32[]', space=sflag, size = 0x4, offset = 0, fixed_abs, tag = 'sflag constant byte address 0x0 - dummy sync flag']
  #allocation50 [shape = 's32[]', space=sflag, size = 0x4, offset = 0, fixed_abs, tag = 'sflag constant byte address 0x0 - dummy sync flag']
  #allocation51 [shape = 's32[]', space=sflag, size = 0x4, offset = 0, fixed_abs, tag = 'sflag constant byte address 0x0 - dummy sync flag']
  #allocation52 [shape = 's32[]', space=sflag, size = 0x4, offset = 0, fixed_abs, tag = 'sflag constant byte address 0x0 - dummy sync flag']
  #allocation53 [shape = 's32[]', space=sflag, size = 0x4, offset = 0, fixed_abs, tag = 'sflag constant byte address 0x0 - dummy sync flag']
  #allocation54 [shape = 's32[]', space=sflag, size = 0x4, offset = 0, fixed_abs, tag = 'sflag constant byte address 0x0 - dummy sync flag']
  #allocation55 [shape = 's32[]', space=sflag, size = 0x4, offset = 0, fixed_abs, tag = 'sflag constant byte address 0x0 - dummy sync flag']
  #allocation56 [shape = 's32[]', space=sflag, size = 0x4, offset = 0, fixed_abs, tag = 'sflag constant byte address 0x0 - dummy sync flag']
  #allocation57 [shape = 's32[]', space=sflag, size = 0x4, offset = 0, fixed_abs, tag = 'sflag constant byte address 0x0 - dummy sync flag']
  #allocation58 [shape = 's32[]', space=sflag, size = 0x4, offset = 0, fixed_abs, tag = 'sflag constant byte address 0x0 - dummy sync flag']
  %s0 = inlined_call_operand.hbm [shape: s32[16], index: 0, kind: input, shape index: {}]
  %s1 = inlined_call_operand.hbm [shape: f32[52707,128], index: 1, kind: input, shape index: {}]
  %s2 = inlined_call_operand.hbm [shape: bf16[16,16], index: 2, kind: input, shape index: {}]
  %s3 = inlined_call_operand.vmem [shape: f32[2,16], index: 3, kind: input, shape index: {}]
  %s4 = inlined_call_operand.vmem [shape: f32[1,16], index: 4, kind: input, shape index: {}]
  %s5 = inlined_call_operand.vmem [shape: f32[16,1], index: 5, kind: input, shape index: {}]
  %s6 = inlined_call_operand.hbm [shape: bf16[3,128,128], index: 6, kind: input, shape index: {}]
  %s7 = inlined_call_operand.hbm [shape: bf16[3,128,128], index: 7, kind: input, shape index: {}]
  %s8 = inlined_call_operand.hbm [shape: f32[3,1,128], index: 8, kind: input, shape index: {}]
  %s9 = inlined_call_operand.hbm [shape: f32[3,1,128], index: 9, kind: input, shape index: {}]
  %s10 = inlined_call_operand.hbm [shape: f32[128,128], index: 10, kind: input, shape index: {}]
  %s11 = inlined_call_operand.hbm [shape: f32[128,128], index: 11, kind: input, shape index: {}]
  %s12 = inlined_call_operand.hbm [shape: f32[1,128], index: 12, kind: input, shape index: {}]
  %s13 = inlined_call_operand.vmem [shape: f32[128,64], index: 13, kind: input, shape index: {}]
  %s14 = inlined_call_operand.hbm [shape: f32[1,64], index: 14, kind: input, shape index: {}]
  %s15 = inlined_call_operand.hbm [shape: f32[1,64], index: 15, kind: input, shape index: {}]
  %s16 = inlined_call_operand.<no memory space> [shape: f32[1,1], index: 16, kind: input, shape index: {}]
  %s17 = inlined_call_operand.hbm [shape: f32[1,2], index: 17, kind: output, shape index: {}]
  %s18 = sld [smem:[#allocation0]]
  $region182: #{net_forward.1} parent=0
    _
  %s20 = ssub.s32 1, %s18
  %s21 = scalar_select 0, %s20, %s18
  %v22 = vstv %s16
  %23 = vst [vmem:[#allocation4] sm:$0x1] %v22
  $region1: #{net_forward.1} parent=0
    #allocation5 [shape = 'u8[512]{0}', space=smem, size = 0x200, scoped, tag = 'input window, operand 0, single buffered']
    #allocation6 [shape = 's32[1]{0}', space=sflag, size = 0x4, scoped, tag = 'scoped memory for net_forward.1']
    #allocation7 [shape = 's32[1]{0}', space=sflag, size = 0x4, scoped, tag = 'scoped memory for net_forward.1']
    #allocation8 [shape = 's32[1]{0}', space=sflag, size = 0x4, scoped, tag = 'scoped memory for net_forward.1']
    #allocation9 [shape = 'u8[4096]{0}', space=vmem, size = 0x1000, scoped, tag = 'input window, operand 2, single buffered']
    #allocation10 [shape = 'u8[98304]{0}', space=vmem, size = 0x18000, scoped, tag = 'input window, operand 6, single buffered']
    #allocation11 [shape = 's32[1]{0}', space=sflag, size = 0x4, scoped, tag = 'scoped memory for net_forward.1']
    #allocation12 [shape = 'u8[98304]{0}', space=vmem, size = 0x18000, scoped, tag = 'input window, operand 7, single buffered']
    #allocation13 [shape = 'u8[1536]{0}', space=vmem, size = 0x800, scoped, tag = 'input window, operand 8, single buffered']
    #allocation14 [shape = 's32[1]{0}', space=sflag, size = 0x4, scoped, tag = 'scoped memory for net_forward.1']
    #allocation15 [shape = 'u8[1536]{0}', space=vmem, size = 0x800, scoped, tag = 'input window, operand 9, single buffered']
    #allocation16 [shape = 'u8[65536]{0}', space=vmem, size = 0x10000, scoped, tag = 'input window, operand 10, single buffered']
    #allocation17 [shape = 's32[1]{0}', space=sflag, size = 0x4, scoped, tag = 'scoped memory for net_forward.1']
    #allocation18 [shape = 'u8[65536]{0}', space=vmem, size = 0x10000, scoped, tag = 'input window, operand 11, single buffered']
    #allocation19 [shape = 'u8[512]{0}', space=vmem, size = 0x400, scoped, tag = 'input window, operand 12, single buffered']
    #allocation20 [shape = 's32[1]{0}', space=sflag, size = 0x4, scoped, tag = 'scoped memory for net_forward.1']
    #allocation21 [shape = 'u8[512]{0}', space=vmem, size = 0x400, scoped, tag = 'input window, operand 14, single buffered']
    #allocation22 [shape = 'u8[512]{0}', space=vmem, size = 0x400, scoped, tag = 'input window, operand 15, single buffered']
    #allocation23 [shape = 's32[1]{0}', space=sflag, size = 0x4, scoped, tag = 'scoped memory for net_forward.1']
    #allocation24 [shape = 'u8[512]{0}', space=vmem, size = 0x400, scoped, tag = 'output window, operand 0, single buffered']
    %24 = vsyncpa [#allocation8], 0
    %25 = vsyncpa [#allocation6], 0
    %26 = vsyncpa [#allocation11], 0
    %27 = vsyncpa [#allocation14], 0
    %28 = vsyncpa [#allocation17], 0
    %29 = vsyncpa [#allocation20], 0
    %30 = vsyncpa [#allocation23], 0
    %31 = vsyncpa [#allocation7], 0
    // Predicated region
    $region2: #{net_forward.1} parent=1 // pred_check
      _
    $region3: #{net_forward.1} parent=1 // pred_check_branch
      %33 = sbr.rel (0) target = $region5
    $region4: #{net_forward.1} parent=1 // pred_region
      %35 = vsyncadd [#allocation8], 0
      %s37 = sshll.u32 %s0, 4
      %s38 = int_to_ptr.hbm [resolvable:$true] %s37
      %40 = dma.hbm_to_smem %s38, 16, [#allocation5], [#allocation8]
    $region5: #{net_forward.1} parent=1 // pred_fallthru
      _
    // Predicated region
    $region6: #{net_forward.1} parent=1 // pred_check
      _
    $region7: #{net_forward.1} parent=1 // pred_check_branch
      %42 = sbr.rel (0) target = $region9
    $region8: #{net_forward.1} parent=1 // pred_region
      %44 = vsyncadd [#allocation6], 0
      %s45 = sshll.u32 %s2, 4
      %s46 = int_to_ptr.hbm [resolvable:$true] %s45
      %s47 = sshll.u32 [#allocation9], 4
      %s48 = int_to_ptr.vmem [resolvable:$true] %s47
      %53 = dma.hbm_to_vmem [thread:$0]  %s46, 128, %s48, [#allocation6], 64, 64, 4
    $region9: #{net_forward.1} parent=1 // pred_fallthru
      _
    // Predicated region
    $region10: #{net_forward.1} parent=1 // pred_check
      _
    $region11: #{net_forward.1} parent=1 // pred_check_branch
      %55 = sbr.rel (0) target = $region13
    $region12: #{net_forward.1} parent=1 // pred_region
      _
    $region13: #{net_forward.1} parent=1 // pred_fallthru
      _
    // Predicated region
    $region14: #{net_forward.1} parent=1 // pred_check
      _
    $region15: #{net_forward.1} parent=1 // pred_check_branch
      %57 = sbr.rel (0) target = $region17
    $region16: #{net_forward.1} parent=1 // pred_region
      _
    $region17: #{net_forward.1} parent=1 // pred_fallthru
      _
    // Predicated region
    $region18: #{net_forward.1} parent=1 // pred_check
      _
    $region19: #{net_forward.1} parent=1 // pred_check_branch
      %59 = sbr.rel (0) target = $region21
    $region20: #{net_forward.1} parent=1 // pred_region
      _
    $region21: #{net_forward.1} parent=1 // pred_fallthru
      _
    // Predicated region
    $region22: #{net_forward.1} parent=1 // pred_check
      _
    $region23: #{net_forward.1} parent=1 // pred_check_branch
      %61 = sbr.rel (0) target = $region25
    $region24: #{net_forward.1} parent=1 // pred_region
      %63 = vsyncadd [#allocation11], 0
      %s64 = sshll.u32 %s6, 4
      %s65 = int_to_ptr.hbm [resolvable:$true] %s64
      %s66 = sshll.u32 [#allocation10], 4
      %s67 = int_to_ptr.vmem [resolvable:$true] %s66
      %72 = dma.hbm_to_vmem [thread:$0]  %s65, 3072, %s67, [#allocation11], 64, 64, 4
    $region25: #{net_forward.1} parent=1 // pred_fallthru
      _
    // Predicated region
    $region26: #{net_forward.1} parent=1 // pred_check
      _
    $region27: #{net_forward.1} parent=1 // pred_check_branch
      %74 = sbr.rel (0) target = $region29
    $region28: #{net_forward.1} parent=1 // pred_region
      %76 = vsyncadd [#allocation11], 0
      %s77 = sshll.u32 %s7, 4
      %s78 = int_to_ptr.hbm [resolvable:$true] %s77
      %s79 = sshll.u32 [#allocation12], 4
      %s80 = int_to_ptr.vmem [resolvable:$true] %s79
      %85 = dma.hbm_to_vmem [thread:$0]  %s78, 3072, %s80, [#allocation11], 64, 64, 4
    $region29: #{net_forward.1} parent=1 // pred_fallthru
      _
    // Predicated region
    $region30: #{net_forward.1} parent=1 // pred_check
      _
    $region31: #{net_forward.1} parent=1 // pred_check_branch
      %87 = sbr.rel (0) target = $region33
    $region32: #{net_forward.1} parent=1 // pred_region
      %89 = vsyncadd [#allocation14], 0
      %s90 = sshll.u32 %s8, 4
      %s91 = int_to_ptr.hbm [resolvable:$true] %s90
      %s92 = sshll.u32 [#allocation13], 4
      %s93 = int_to_ptr.vmem [resolvable:$true] %s92
      %98 = dma.hbm_to_vmem [thread:$0]  %s91, 48, %s93, [#allocation14], 16, 16, 1
    $region33: #{net_forward.1} parent=1 // pred_fallthru
      _
    // Predicated region
    $region34: #{net_forward.1} parent=1 // pred_check
      _
    $region35: #{net_forward.1} parent=1 // pred_check_branch
      %100 = sbr.rel (0) target = $region37
    $region36: #{net_forward.1} parent=1 // pred_region
      %102 = vsyncadd [#allocation14], 0
      %s103 = sshll.u32 %s9, 4
      %s104 = int_to_ptr.hbm [resolvable:$true] %s103
      %s105 = sshll.u32 [#allocation15], 4
      %s106 = int_to_ptr.vmem [resolvable:$true] %s105
      %111 = dma.hbm_to_vmem [thread:$0]  %s104, 48, %s106, [#allocation14], 16, 16, 1
    $region37: #{net_forward.1} parent=1 // pred_fallthru
      _
    // Predicated region
    $region38: #{net_forward.1} parent=1 // pred_check
      _
    $region39: #{net_forward.1} parent=1 // pred_check_branch
      %113 = sbr.rel (0) target = $region41
    $region40: #{net_forward.1} parent=1 // pred_region
      %115 = vsyncadd [#allocation17], 0
      %s116 = sshll.u32 %s10, 4
      %s117 = int_to_ptr.hbm [resolvable:$true] %s116
      %s118 = sshll.u32 [#allocation16], 4
      %s119 = int_to_ptr.vmem [resolvable:$true] %s118
      %124 = dma.hbm_to_vmem [thread:$0]  %s117, 2048, %s119, [#allocation17], 128, 128, 8
    $region41: #{net_forward.1} parent=1 // pred_fallthru
      _
    // Predicated region
    $region42: #{net_forward.1} parent=1 // pred_check
      _
    $region43: #{net_forward.1} parent=1 // pred_check_branch
      %126 = sbr.rel (0) target = $region45
    $region44: #{net_forward.1} parent=1 // pred_region
      %128 = vsyncadd [#allocation17], 0
      %s129 = sshll.u32 %s11, 4
      %s130 = int_to_ptr.hbm [resolvable:$true] %s129
      %s131 = sshll.u32 [#allocation18], 4
      %s132 = int_to_ptr.vmem [resolvable:$true] %s131
      %137 = dma.hbm_to_vmem [thread:$0]  %s130, 2048, %s132, [#allocation17], 128, 128, 8
    $region45: #{net_forward.1} parent=1 // pred_fallthru
      _
    // Predicated region
    $region46: #{net_forward.1} parent=1 // pred_check
      _
    $region47: #{net_forward.1} parent=1 // pred_check_branch
      %139 = sbr.rel (0) target = $region49
    $region48: #{net_forward.1} parent=1 // pred_region
      %141 = vsyncadd [#allocation20], 0
      %s143 = sshll.u32 %s12, 4
      %s144 = int_to_ptr.hbm [resolvable:$true] %s143
      %s145 = sshll.u32 [#allocation19], 4
      %s146 = int_to_ptr.vmem [resolvable:$true] %s145
      %148 = dma.hbm_to_vmem [thread:$0]  %s144, 16, %s146, [#allocation20]
    $region49: #{net_forward.1} parent=1 // pred_fallthru
      _
    // Predicated region
    $region50: #{net_forward.1} parent=1 // pred_check
      _
    $region51: #{net_forward.1} parent=1 // pred_check_branch
      %150 = sbr.rel (0) target = $region53
    $region52: #{net_forward.1} parent=1 // pred_region
      _
    $region53: #{net_forward.1} parent=1 // pred_fallthru
      _
    // Predicated region
    $region54: #{net_forward.1} parent=1 // pred_check
      _
    $region55: #{net_forward.1} parent=1 // pred_check_branch
      %152 = sbr.rel (0) target = $region57
    $region56: #{net_forward.1} parent=1 // pred_region
      %154 = vsyncadd [#allocation20], 0
      %s156 = sshll.u32 %s14, 4
      %s157 = int_to_ptr.hbm [resolvable:$true] %s156
      %s158 = sshll.u32 [#allocation21], 4
      %s159 = int_to_ptr.vmem [resolvable:$true] %s158
      %161 = dma.hbm_to_vmem [thread:$0]  %s157, 16, %s159, [#allocation20]
    $region57: #{net_forward.1} parent=1 // pred_fallthru
      _
    // Predicated region
    $region58: #{net_forward.1} parent=1 // pred_check
      _
    $region59: #{net_forward.1} parent=1 // pred_check_branch
      %163 = sbr.rel (0) target = $region61
    $region60: #{net_forward.1} parent=1 // pred_region
      %165 = vsyncadd [#allocation23], 0
      %s167 = sshll.u32 %s15, 4
      %s168 = int_to_ptr.hbm [resolvable:$true] %s167
      %s169 = sshll.u32 [#allocation22], 4
      %s170 = int_to_ptr.vmem [resolvable:$true] %s169
      %172 = dma.hbm_to_vmem [thread:$0]  %s168, 16, %s170, [#allocation23]
    $region61: #{net_forward.1} parent=1 // pred_fallthru
      _
    // Predicated region
    $region62: #{net_forward.1} parent=1 // pred_check
      _
    $region63: #{net_forward.1} parent=1 // pred_check_branch
      %174 = sbr.rel (0) target = $region65
    $region64: #{net_forward.1} parent=1 // pred_region
      _
    $region65: #{net_forward.1} parent=1 // pred_fallthru
      _
    // Predicated region
    $region66: #{net_forward.1} parent=1 // pred_check
      _
    $region67: #{net_forward.1} parent=1 // pred_check_branch
      %176 = sbr.rel (0) target = $region69
    $region68: #{net_forward.1} parent=1 // pred_region
      %178 = dma.done [#allocation8], 16
    $region69: #{net_forward.1} parent=1 // pred_fallthru
      _
    // Predicated region
    $region70: #{net_forward.1} parent=1 // pred_check
      _
    $region71: #{net_forward.1} parent=1 // pred_check_branch
      %180 = sbr.rel (0) target = $region73
    $region72: #{net_forward.1} parent=1 // pred_region
      %182 = dma.done [#allocation6], 128
    $region73: #{net_forward.1} parent=1 // pred_fallthru
      _
    // Predicated region
    $region74: #{net_forward.1} parent=1 // pred_check
      _
    $region75: #{net_forward.1} parent=1 // pred_check_branch
      %184 = sbr.rel (0) target = $region77
    $region76: #{net_forward.1} parent=1 // pred_region
      %186 = dma.done [#allocation11], 3072
    $region77: #{net_forward.1} parent=1 // pred_fallthru
      _
    // Predicated region
    $region78: #{net_forward.1} parent=1 // pred_check
      _
    $region79: #{net_forward.1} parent=1 // pred_check_branch
      %188 = sbr.rel (0) target = $region81
    $region80: #{net_forward.1} parent=1 // pred_region
      %190 = dma.done [#allocation11], 3072
    $region81: #{net_forward.1} parent=1 // pred_fallthru
      _
    // Predicated region
    $region82: #{net_forward.1} parent=1 // pred_check
      _
    $region83: #{net_forward.1} parent=1 // pred_check_branch
      %192 = sbr.rel (0) target = $region85
    $region84: #{net_forward.1} parent=1 // pred_region
      %194 = dma.done [#allocation14], 48
    $region85: #{net_forward.1} parent=1 // pred_fallthru
      _
    // Predicated region
    $region86: #{net_forward.1} parent=1 // pred_check
      _
    $region87: #{net_forward.1} parent=1 // pred_check_branch
      %196 = sbr.rel (0) target = $region89
    $region88: #{net_forward.1} parent=1 // pred_region
      %198 = dma.done [#allocation14], 48
    $region89: #{net_forward.1} parent=1 // pred_fallthru
      _
    // Predicated region
    $region90: #{net_forward.1} parent=1 // pred_check
      _
    $region91: #{net_forward.1} parent=1 // pred_check_branch
      %200 = sbr.rel (0) target = $region93
    $region92: #{net_forward.1} parent=1 // pred_region
      %202 = dma.done [#allocation17], 2048
    $region93: #{net_forward.1} parent=1 // pred_fallthru
      _
    // Predicated region
    $region94: #{net_forward.1} parent=1 // pred_check
      _
    $region95: #{net_forward.1} parent=1 // pred_check_branch
      %204 = sbr.rel (0) target = $region97
    $region96: #{net_forward.1} parent=1 // pred_region
      %206 = dma.done [#allocation17], 2048
    $region97: #{net_forward.1} parent=1 // pred_fallthru
      _
    // Predicated region
    $region98: #{net_forward.1} parent=1 // pred_check
      _
    $region99: #{net_forward.1} parent=1 // pred_check_branch
      %208 = sbr.rel (0) target = $region101
    $region100: #{net_forward.1} parent=1 // pred_region
      %210 = dma.done [#allocation20], 16
    $region101: #{net_forward.1} parent=1 // pred_fallthru
      _
    // Predicated region
    $region102: #{net_forward.1} parent=1 // pred_check
      _
    $region103: #{net_forward.1} parent=1 // pred_check_branch
      %212 = sbr.rel (0) target = $region105
    $region104: #{net_forward.1} parent=1 // pred_region
      %214 = dma.done [#allocation20], 16
    $region105: #{net_forward.1} parent=1 // pred_fallthru
      _
    // Predicated region
    $region106: #{net_forward.1} parent=1 // pred_check
      _
    $region107: #{net_forward.1} parent=1 // pred_check_branch
      %216 = sbr.rel (0) target = $region109
    $region108: #{net_forward.1} parent=1 // pred_region
      %218 = dma.done [#allocation23], 16
    $region109: #{net_forward.1} parent=1 // pred_fallthru
      _
    %219 = sfence
    %s222 = sld [smem:[#allocation5]]
    %s223 = scalar_lea.hbm %s1, %s222
    // Predicated region
    $region110: #{net_forward.1} parent=1 // pred_check
      _
    $region111: #{net_forward.1} parent=1 // pred_check_branch
      %225 = sbr.rel target = $region113
    $region112: #{net_forward.1} parent=1 // pred_region
      %226 = sst [smem:[#allocation27]] [#allocation26]
      %227 = sst [smem:[#allocation28]] [#allocation25]
    $region113: #{net_forward.1} parent=1 // pred_fallthru
      _
    %229 = shalt.err (0)
    %s231 = sshll.u32 %s223, 4
    %s232 = int_to_ptr.hbm [resolvable:$true] %s231
    %s233 = sshll.u32 [#allocation2], 4
    %s234 = int_to_ptr.vmem [resolvable:$true] %s233
    %236 = dma.hbm_to_vmem [thread:$0]  %s232, 16, %s234, [#allocation3]
    %s237 = sld [smem:[#allocation5 + $0x1]]
    %s238 = scalar_lea.hbm %s1, %s237
    %s239 = scalar_lea.vmem [#allocation2], 1
    // Predicated region
    $region114: #{net_forward.1} parent=1 // pred_check
      _
    $region115: #{net_forward.1} parent=1 // pred_check_branch
      %241 = sbr.rel target = $region117
    $region116: #{net_forward.1} parent=1 // pred_region
      %242 = sst [smem:[#allocation27]] [#allocation30]
      %243 = sst [smem:[#allocation28]] [#allocation29]
    $region117: #{net_forward.1} parent=1 // pred_fallthru
      _
    %245 = shalt.err (0)
    %s247 = sshll.u32 %s238, 4
    %s248 = int_to_ptr.hbm [resolvable:$true] %s247
    %s249 = sshll.u32 %s239, 4
    %s250 = int_to_ptr.vmem [resolvable:$true] %s249
    %252 = dma.hbm_to_vmem [thread:$0]  %s248, 16, %s250, [#allocation3]
    %s253 = sld [smem:[#allocation5 + $0x2]]
    %s254 = scalar_lea.hbm %s1, %s253
    %s255 = scalar_lea.vmem [#allocation2], 2
    // Predicated region
    $region118: #{net_forward.1} parent=1 // pred_check
      _
    $region119: #{net_forward.1} parent=1 // pred_check_branch
      %257 = sbr.rel target = $region121
    $region120: #{net_forward.1} parent=1 // pred_region
      %258 = sst [smem:[#allocation27]] [#allocation32]
      %259 = sst [smem:[#allocation28]] [#allocation31]
    $region121: #{net_forward.1} parent=1 // pred_fallthru
      _
    %261 = shalt.err (0)
    %s263 = sshll.u32 %s254, 4
    %s264 = int_to_ptr.hbm [resolvable:$true] %s263
    %s265 = sshll.u32 %s255, 4
    %s266 = int_to_ptr.vmem [resolvable:$true] %s265
    %268 = dma.hbm_to_vmem [thread:$0]  %s264, 16, %s266, [#allocation3]
    %s269 = sld [smem:[#allocation5 + $0x3]]
    %s270 = scalar_lea.hbm %s1, %s269
    %s271 = scalar_lea.vmem [#allocation2], 3
    // Predicated region
    $region122: #{net_forward.1} parent=1 // pred_check
      _
    $region123: #{net_forward.1} parent=1 // pred_check_branch
      %273 = sbr.rel target = $region125
    $region124: #{net_forward.1} parent=1 // pred_region
      %274 = sst [smem:[#allocation27]] [#allocation34]
      %275 = sst [smem:[#allocation28]] [#allocation33]
    $region125: #{net_forward.1} parent=1 // pred_fallthru
      _
    %277 = shalt.err (0)
    %s279 = sshll.u32 %s270, 4
    %s280 = int_to_ptr.hbm [resolvable:$true] %s279
    %s281 = sshll.u32 %s271, 4
    %s282 = int_to_ptr.vmem [resolvable:$true] %s281
    %284 = dma.hbm_to_vmem [thread:$0]  %s280, 16, %s282, [#allocation3]
    %s285 = sld [smem:[#allocation5 + $0x4]]
    %s286 = scalar_lea.hbm %s1, %s285
    %s287 = scalar_lea.vmem [#allocation2], 4
    // Predicated region
    $region126: #{net_forward.1} parent=1 // pred_check
      _
    $region127: #{net_forward.1} parent=1 // pred_check_branch
      %289 = sbr.rel target = $region129
    $region128: #{net_forward.1} parent=1 // pred_region
      %290 = sst [smem:[#allocation27]] [#allocation36]
      %291 = sst [smem:[#allocation28]] [#allocation35]
    $region129: #{net_forward.1} parent=1 // pred_fallthru
      _
    %293 = shalt.err (0)
    %s295 = sshll.u32 %s286, 4
    %s296 = int_to_ptr.hbm [resolvable:$true] %s295
    %s297 = sshll.u32 %s287, 4
    %s298 = int_to_ptr.vmem [resolvable:$true] %s297
    %300 = dma.hbm_to_vmem [thread:$0]  %s296, 16, %s298, [#allocation3]
    %s301 = sld [smem:[#allocation5 + $0x5]]
    %s302 = scalar_lea.hbm %s1, %s301
    %s303 = scalar_lea.vmem [#allocation2], 5
    // Predicated region
    $region130: #{net_forward.1} parent=1 // pred_check
      _
    $region131: #{net_forward.1} parent=1 // pred_check_branch
      %305 = sbr.rel target = $region133
    $region132: #{net_forward.1} parent=1 // pred_region
      %306 = sst [smem:[#allocation27]] [#allocation38]
      %307 = sst [smem:[#allocation28]] [#allocation37]
    $region133: #{net_forward.1} parent=1 // pred_fallthru
      _
    %309 = shalt.err (0)
    %s311 = sshll.u32 %s302, 4
    %s312 = int_to_ptr.hbm [resolvable:$true] %s311
    %s313 = sshll.u32 %s303, 4
    %s314 = int_to_ptr.vmem [resolvable:$true] %s313
    %316 = dma.hbm_to_vmem [thread:$0]  %s312, 16, %s314, [#allocation3]
    %s317 = sld [smem:[#allocation5 + $0x6]]
    %s318 = scalar_lea.hbm %s1, %s317
    %s319 = scalar_lea.vmem [#allocation2], 6
    // Predicated region
    $region134: #{net_forward.1} parent=1 // pred_check
      _
    $region135: #{net_forward.1} parent=1 // pred_check_branch
      %321 = sbr.rel target = $region137
    $region136: #{net_forward.1} parent=1 // pred_region
      %322 = sst [smem:[#allocation27]] [#allocation40]
      %323 = sst [smem:[#allocation28]] [#allocation39]
    $region137: #{net_forward.1} parent=1 // pred_fallthru
      _
    %325 = shalt.err (0)
    %s327 = sshll.u32 %s318, 4
    %s328 = int_to_ptr.hbm [resolvable:$true] %s327
    %s329 = sshll.u32 %s319, 4
    %s330 = int_to_ptr.vmem [resolvable:$true] %s329
    %332 = dma.hbm_to_vmem [thread:$0]  %s328, 16, %s330, [#allocation3]
    %s333 = sld [smem:[#allocation5 + $0x7]]
    %s334 = scalar_lea.hbm %s1, %s333
    %s335 = scalar_lea.vmem [#allocation2], 7
    // Predicated region
    $region138: #{net_forward.1} parent=1 // pred_check
      _
    $region139: #{net_forward.1} parent=1 // pred_check_branch
      %337 = sbr.rel target = $region141
    $region140: #{net_forward.1} parent=1 // pred_region
      %338 = sst [smem:[#allocation27]] [#allocation42]
      %339 = sst [smem:[#allocation28]] [#allocation41]
    $region141: #{net_forward.1} parent=1 // pred_fallthru
      _
    %341 = shalt.err (0)
    %s343 = sshll.u32 %s334, 4
    %s344 = int_to_ptr.hbm [resolvable:$true] %s343
    %s345 = sshll.u32 %s335, 4
    %s346 = int_to_ptr.vmem [resolvable:$true] %s345
    %348 = dma.hbm_to_vmem [thread:$0]  %s344, 16, %s346, [#allocation3]
    %s349 = sld [smem:[#allocation5 + $0x8]]
    %s350 = scalar_lea.hbm %s1, %s349
    %s351 = scalar_lea.vmem [#allocation2], 8
    // Predicated region
    $region142: #{net_forward.1} parent=1 // pred_check
      _
    $region143: #{net_forward.1} parent=1 // pred_check_branch
      %353 = sbr.rel target = $region145
    $region144: #{net_forward.1} parent=1 // pred_region
      %354 = sst [smem:[#allocation27]] [#allocation44]
      %355 = sst [smem:[#allocation28]] [#allocation43]
    $region145: #{net_forward.1} parent=1 // pred_fallthru
      _
    %357 = shalt.err (0)
    %s359 = sshll.u32 %s350, 4
    %s360 = int_to_ptr.hbm [resolvable:$true] %s359
    %s361 = sshll.u32 %s351, 4
    %s362 = int_to_ptr.vmem [resolvable:$true] %s361
    %364 = dma.hbm_to_vmem [thread:$0]  %s360, 16, %s362, [#allocation3]
    %s365 = sld [smem:[#allocation5 + $0x9]]
    %s366 = scalar_lea.hbm %s1, %s365
    %s367 = scalar_lea.vmem [#allocation2], 9
    // Predicated region
    $region146: #{net_forward.1} parent=1 // pred_check
      _
    $region147: #{net_forward.1} parent=1 // pred_check_branch
      %369 = sbr.rel target = $region149
    $region148: #{net_forward.1} parent=1 // pred_region
      %370 = sst [smem:[#allocation27]] [#allocation46]
      %371 = sst [smem:[#allocation28]] [#allocation45]
    $region149: #{net_forward.1} parent=1 // pred_fallthru
      _
    %373 = shalt.err (0)
    %s375 = sshll.u32 %s366, 4
    %s376 = int_to_ptr.hbm [resolvable:$true] %s375
    %s377 = sshll.u32 %s367, 4
    %s378 = int_to_ptr.vmem [resolvable:$true] %s377
    %380 = dma.hbm_to_vmem [thread:$0]  %s376, 16, %s378, [#allocation3]
    %s381 = sld [smem:[#allocation5 + $0xa]]
    %s382 = scalar_lea.hbm %s1, %s381
    %s383 = scalar_lea.vmem [#allocation2], 10
    // Predicated region
    $region150: #{net_forward.1} parent=1 // pred_check
      _
    $region151: #{net_forward.1} parent=1 // pred_check_branch
      %385 = sbr.rel target = $region153
    $region152: #{net_forward.1} parent=1 // pred_region
      %386 = sst [smem:[#allocation27]] [#allocation48]
      %387 = sst [smem:[#allocation28]] [#allocation47]
    $region153: #{net_forward.1} parent=1 // pred_fallthru
      _
    %389 = shalt.err (0)
    %s391 = sshll.u32 %s382, 4
    %s392 = int_to_ptr.hbm [resolvable:$true] %s391
    %s393 = sshll.u32 %s383, 4
    %s394 = int_to_ptr.vmem [resolvable:$true] %s393
    %396 = dma.hbm_to_vmem [thread:$0]  %s392, 16, %s394, [#allocation3]
    %s397 = sld [smem:[#allocation5 + $0xb]]
    %s398 = scalar_lea.hbm %s1, %s397
    %s399 = scalar_lea.vmem [#allocation2], 11
    // Predicated region
    $region154: #{net_forward.1} parent=1 // pred_check
      _
    $region155: #{net_forward.1} parent=1 // pred_check_branch
      %401 = sbr.rel target = $region157
    $region156: #{net_forward.1} parent=1 // pred_region
      %402 = sst [smem:[#allocation27]] [#allocation50]
      %403 = sst [smem:[#allocation28]] [#allocation49]
    $region157: #{net_forward.1} parent=1 // pred_fallthru
      _
    %405 = shalt.err (0)
    %s407 = sshll.u32 %s398, 4
    %s408 = int_to_ptr.hbm [resolvable:$true] %s407
    %s409 = sshll.u32 %s399, 4
    %s410 = int_to_ptr.vmem [resolvable:$true] %s409
    %412 = dma.hbm_to_vmem [thread:$0]  %s408, 16, %s410, [#allocation3]
    %s413 = sld [smem:[#allocation5 + $0xc]]
    %s414 = scalar_lea.hbm %s1, %s413
    %s415 = scalar_lea.vmem [#allocation2], 12
    // Predicated region
    $region158: #{net_forward.1} parent=1 // pred_check
      _
    $region159: #{net_forward.1} parent=1 // pred_check_branch
      %417 = sbr.rel target = $region161
    $region160: #{net_forward.1} parent=1 // pred_region
      %418 = sst [smem:[#allocation27]] [#allocation52]
      %419 = sst [smem:[#allocation28]] [#allocation51]
    $region161: #{net_forward.1} parent=1 // pred_fallthru
      _
    %421 = shalt.err (0)
    %s423 = sshll.u32 %s414, 4
    %s424 = int_to_ptr.hbm [resolvable:$true] %s423
    %s425 = sshll.u32 %s415, 4
    %s426 = int_to_ptr.vmem [resolvable:$true] %s425
    %428 = dma.hbm_to_vmem [thread:$0]  %s424, 16, %s426, [#allocation3]
    %s429 = sld [smem:[#allocation5 + $0xd]]
    %s430 = scalar_lea.hbm %s1, %s429
    %s431 = scalar_lea.vmem [#allocation2], 13
    // Predicated region
    $region162: #{net_forward.1} parent=1 // pred_check
      _
    $region163: #{net_forward.1} parent=1 // pred_check_branch
      %433 = sbr.rel target = $region165
    $region164: #{net_forward.1} parent=1 // pred_region
      %434 = sst [smem:[#allocation27]] [#allocation54]
      %435 = sst [smem:[#allocation28]] [#allocation53]
    $region165: #{net_forward.1} parent=1 // pred_fallthru
      _
    %437 = shalt.err (0)
    %s439 = sshll.u32 %s430, 4
    %s440 = int_to_ptr.hbm [resolvable:$true] %s439
    %s441 = sshll.u32 %s431, 4
    %s442 = int_to_ptr.vmem [resolvable:$true] %s441
    %444 = dma.hbm_to_vmem [thread:$0]  %s440, 16, %s442, [#allocation3]
    %s445 = sld [smem:[#allocation5 + $0xe]]
    %s446 = scalar_lea.hbm %s1, %s445
    %s447 = scalar_lea.vmem [#allocation2], 14
    // Predicated region
    $region166: #{net_forward.1} parent=1 // pred_check
      _
    $region167: #{net_forward.1} parent=1 // pred_check_branch
      %449 = sbr.rel target = $region169
    $region168: #{net_forward.1} parent=1 // pred_region
      %450 = sst [smem:[#allocation27]] [#allocation56]
      %451 = sst [smem:[#allocation28]] [#allocation55]
    $region169: #{net_forward.1} parent=1 // pred_fallthru
      _
    %453 = shalt.err (0)
    %s455 = sshll.u32 %s446, 4
    %s456 = int_to_ptr.hbm [resolvable:$true] %s455
    %s457 = sshll.u32 %s447, 4
    %s458 = int_to_ptr.vmem [resolvable:$true] %s457
    %460 = dma.hbm_to_vmem [thread:$0]  %s456, 16, %s458, [#allocation3]
    %s461 = sld [smem:[#allocation5 + $0xf]]
    %s462 = scalar_lea.hbm %s1, %s461
    %s463 = scalar_lea.vmem [#allocation2], 15
    // Predicated region
    $region170: #{net_forward.1} parent=1 // pred_check
      _
    $region171: #{net_forward.1} parent=1 // pred_check_branch
      %465 = sbr.rel target = $region173
    $region172: #{net_forward.1} parent=1 // pred_region
      %466 = sst [smem:[#allocation27]] [#allocation58]
      %467 = sst [smem:[#allocation28]] [#allocation57]
    $region173: #{net_forward.1} parent=1 // pred_fallthru
      _
    %469 = shalt.err (0)
    %s471 = sshll.u32 %s462, 4
    %s472 = int_to_ptr.hbm [resolvable:$true] %s471
    %s473 = sshll.u32 %s463, 4
    %s474 = int_to_ptr.vmem [resolvable:$true] %s473
    %476 = dma.hbm_to_vmem [thread:$0]  %s472, 16, %s474, [#allocation3]
    %s477 = sld [smem:[#allocation5]]
    %s478 = smul.u32 1, 1
    %s479 = sshll.u32 %s478, 4
    %480 = dma.done [#allocation3], %s479
    %s481 = sld [smem:[#allocation5 + $0x1]]
    %s482 = sshll.u32 %s478, 4
    %483 = dma.done [#allocation3], %s482
    %s484 = sld [smem:[#allocation5 + $0x2]]
    %s485 = sshll.u32 %s478, 4
    %486 = dma.done [#allocation3], %s485
    %s487 = sld [smem:[#allocation5 + $0x3]]
    %s488 = sshll.u32 %s478, 4
    %489 = dma.done [#allocation3], %s488
    %s490 = sld [smem:[#allocation5 + $0x4]]
    %s491 = sshll.u32 %s478, 4
    %492 = dma.done [#allocation3], %s491
    %s493 = sld [smem:[#allocation5 + $0x5]]
    %s494 = sshll.u32 %s478, 4
    %495 = dma.done [#allocation3], %s494
    %s496 = sld [smem:[#allocation5 + $0x6]]
    %s497 = sshll.u32 %s478, 4
    %498 = dma.done [#allocation3], %s497
    %s499 = sld [smem:[#allocation5 + $0x7]]
    %s500 = sshll.u32 %s478, 4
    %501 = dma.done [#allocation3], %s500
    %s502 = sld [smem:[#allocation5 + $0x8]]
    %s503 = sshll.u32 %s478, 4
    %504 = dma.done [#allocation3], %s503
    %s505 = sld [smem:[#allocation5 + $0x9]]
    %s506 = sshll.u32 %s478, 4
    %507 = dma.done [#allocation3], %s506
    %s508 = sld [smem:[#allocation5 + $0xa]]
    %s509 = sshll.u32 %s478, 4
    %510 = dma.done [#allocation3], %s509
    %s511 = sld [smem:[#allocation5 + $0xb]]
    %s512 = sshll.u32 %s478, 4
    %513 = dma.done [#allocation3], %s512
    %s514 = sld [smem:[#allocation5 + $0xc]]
    %s515 = sshll.u32 %s478, 4
    %516 = dma.done [#allocation3], %s515
    %s517 = sld [smem:[#allocation5 + $0xd]]
    %s518 = sshll.u32 %s478, 4
    %519 = dma.done [#allocation3], %s518
    %s520 = sld [smem:[#allocation5 + $0xe]]
    %s521 = sshll.u32 %s478, 4
    %522 = dma.done [#allocation3], %s521
    %s523 = sld [smem:[#allocation5 + $0xf]]
    %s524 = sshll.u32 %s478, 4
    %525 = dma.done [#allocation3], %s524
    %v526 = vld [vmem:[#allocation2] sm:$0xff]
    %v527 = vld [vmem:[#allocation2 + $0x8] sm:$0xff]
    %v528 = vld [vmem:[#allocation9] sm:$0xf]
    %v529 = vld [vmem:[#allocation9 + $0x4] sm:$0xf]
    %v530 = vld [vmem:[%s3] sm:$0x3]
    %v531 = vld [vmem:[%s4] sm:$0x1]
    %v532 = vld [vmem:[%s5] sm:$0xff]
    %v533 = vld [vmem:[%s5 + $0x8] sm:$0xff]
    %535 = vset.pattern.permute.xlu0 0
    %536 = vperm.xlu0 %535, %v532
    %v537 = vpop.permute.xlu0 %536
    %540 = vset.pattern.permute.xlu0 0
    %541 = vperm.xlu0 %540, %v533
    %v542 = vpop.permute.xlu0 %541
    %v545 = vperm.slane %v531, 0
    %vm547 = vcmp.eq.f32.partialorder %v537, %v545
    %vm548 = vcmp.eq.f32.partialorder %v542, %v545
    %v549 = vsel %vm547, 1, 0
    %v550 = vsel %vm548, 1, 0
    %v551 = vcvt.s32.f32 %v549
    %v552 = vcvt.s32.f32 %v550
    %v553 = vlaneseq
    %v554 = vshrl.u32 %v553, 7
    %v555 = vadd.s32 %v554, 8
    %v556 = vlaneseq
    %v557 = vand.u32 %v556, 127
    %v558 = vld [vmem:[#allocation10] sm:$0xf]
    %v559 = vld [vmem:[#allocation10 + $0x4] sm:$0xf]
    %v560 = vld [vmem:[#allocation10 + $0x8] sm:$0xf]
    %v561 = vld [vmem:[#allocation10 + $0xc] sm:$0xf]
    %v562 = vld [vmem:[#allocation10 + $0x10] sm:$0xf]
    %v563 = vld [vmem:[#allocation10 + $0x14] sm:$0xf]
    %v564 = vld [vmem:[#allocation10 + $0x18] sm:$0xf]
    %v565 = vld [vmem:[#allocation10 + $0x1c] sm:$0xf]
    %v566 = vld [vmem:[#allocation10 + $0x20] sm:$0xf]
    %v567 = vld [vmem:[#allocation10 + $0x24] sm:$0xf]
    %v568 = vld [vmem:[#allocation10 + $0x28] sm:$0xf]
    %v569 = vld [vmem:[#allocation10 + $0x2c] sm:$0xf]
    %v570 = vld [vmem:[#allocation10 + $0x30] sm:$0xf]
    %v571 = vld [vmem:[#allocation10 + $0x34] sm:$0xf]
    %v572 = vld [vmem:[#allocation10 + $0x38] sm:$0xf]
    %v573 = vld [vmem:[#allocation10 + $0x3c] sm:$0xf]
    %v574 = vld [vmem:[#allocation12] sm:$0xf]
    %v575 = vld [vmem:[#allocation12 + $0x4] sm:$0xf]
    %v576 = vld [vmem:[#allocation12 + $0x8] sm:$0xf]
    %v577 = vld [vmem:[#allocation12 + $0xc] sm:$0xf]
    %v578 = vld [vmem:[#allocation12 + $0x10] sm:$0xf]
    %v579 = vld [vmem:[#allocation12 + $0x14] sm:$0xf]
    %v580 = vld [vmem:[#allocation12 + $0x18] sm:$0xf]
    %v581 = vld [vmem:[#allocation12 + $0x1c] sm:$0xf]
    %v582 = vld [vmem:[#allocation12 + $0x20] sm:$0xf]
    %v583 = vld [vmem:[#allocation12 + $0x24] sm:$0xf]
    %v584 = vld [vmem:[#allocation12 + $0x28] sm:$0xf]
    %v585 = vld [vmem:[#allocation12 + $0x2c] sm:$0xf]
    %v586 = vld [vmem:[#allocation12 + $0x30] sm:$0xf]
    %v587 = vld [vmem:[#allocation12 + $0x34] sm:$0xf]
    %v588 = vld [vmem:[#allocation12 + $0x38] sm:$0xf]
    %v589 = vld [vmem:[#allocation12 + $0x3c] sm:$0xf]
    %v590 = vld [vmem:[#allocation13] sm:$0x1]
    %v591 = vld [vmem:[#allocation15] sm:$0x1]
    %v592 = vpack.c.bf16 %v527, %v526
    %v595 = vunpack.c.l.b16 %v528
    %v596 = vunpack.c.l.b16 %v529
    %v597 = vpack.c.b16 %v596, %v595
    %vm598 = vcmask 130048
    %v600 = vsel %vm598, %v597, 0
    %602 = vmatpush.bf16.msra.mxu0 0
    %603 = vmatpush.bf16.msra.mxu0 0
    %604 = vmatpush.bf16.msra.mxu0 0
    %605 = vmatpush.bf16.msra.mxu0 0
    %606 = vmatpush.bf16.msra.mxu0 0
    %607 = vmatpush.bf16.msra.mxu0 0
    %608 = vmatpush.bf16.msra.mxu0 0
    %609 = vmatpush.bf16.msra.mxu0 1065369472
    %610 = vmatmul.bf16.gmra.mxu0 %v600
    %v611 = vpop.f32.mrf.mxu0
    %v612 = vadd.f32 0.0, %v611
    %v613 = vpop.f32.mrf.mxu0
    %v614 = vadd.f32 0.0, %v613
    %615 = vdwg.mxu0
    %v616 = vmax.f32 %v612, 1.0
    %v617 = vmax.f32 %v614, 1.0
    %v618 = vrcp.pop %v616
    %v619 = vrcp.pop %v617
    %620 = vmatpush.bf16.msra.mxu0 0
    %621 = vmatpush.bf16.msra.mxu0 0
    %622 = vmatpush.bf16.msra.mxu0 0
    %623 = vmatpush.bf16.msra.mxu0 0
    %624 = vmatpush.bf16.msra.mxu0 0
    %625 = vmatpush.bf16.msra.mxu0 0
    %626 = vmatpush.bf16.msra.mxu0 0
    %627 = vmatpush.bf16.msra.mxu0 %v592
    %628 = vmatmul.bf16.gmra.mxu0 %v600
    %v629 = vpop.f32.mrf.mxu0
    %v630 = vadd.f32 0.0, %v629
    %v631 = vpop.f32.mrf.mxu0
    %v632 = vadd.f32 0.0, %v631
    %633 = vdwg.mxu0
    %635 = vset.pattern.permute.xlu0 0
    %636 = vperm.xlu0 %635, %v618
    %v637 = vpop.permute.xlu0 %636
    %640 = vset.pattern.permute.xlu0 0
    %641 = vperm.xlu0 %640, %v619
    %v642 = vpop.permute.xlu0 %641
    %v644 = vmul.f32 %v630, %v637
    %v645 = vmul.f32 %v632, %v642
    %v646 = vpack.c.bf16 %v645, %v644
    %v663 = vunpack.c.l.b16 %v574
    %v664 = vunpack.c.l.b16 %v575
    %v665 = vunpack.c.l.b16 %v576
    %v666 = vunpack.c.l.b16 %v577
    %v667 = vunpack.c.l.b16 %v578
    %v668 = vunpack.c.l.b16 %v579
    %v669 = vunpack.c.l.b16 %v580
    %v670 = vunpack.c.l.b16 %v581
    %v671 = vunpack.c.l.b16 %v582
    %v672 = vunpack.c.l.b16 %v583
    %v673 = vunpack.c.l.b16 %v584
    %v674 = vunpack.c.l.b16 %v585
    %v675 = vunpack.c.l.b16 %v586
    %v676 = vunpack.c.l.b16 %v587
    %v677 = vunpack.c.l.b16 %v588
    %v678 = vunpack.c.l.b16 %v589
    %v679 = vpack.c.b16 %v664, %v663
    %v680 = vpack.c.b16 %v666, %v665
    %v681 = vpack.c.b16 %v668, %v667
    %v682 = vpack.c.b16 %v670, %v669
    %v683 = vpack.c.b16 %v672, %v671
    %v684 = vpack.c.b16 %v674, %v673
    %v685 = vpack.c.b16 %v676, %v675
    %v686 = vpack.c.b16 %v678, %v677
    %695 = vmatpush.bf16.msra.mxu0 %v686
    %696 = vmatpush.bf16.msra.mxu0 %v685
    %697 = vmatpush.bf16.msra.mxu0 %v684
    %698 = vmatpush.bf16.msra.mxu0 %v683
    %699 = vmatpush.bf16.msra.mxu0 %v682
    %700 = vmatpush.bf16.msra.mxu0 %v681
    %701 = vmatpush.bf16.msra.mxu0 %v680
    %702 = vmatpush.bf16.msra.mxu0 %v679
    %703 = vmatmul.bf16.gmra.mxu0 %v592
    %v704 = vpop.f32.mrf.mxu0
    %v705 = vadd.f32 0.0, %v704
    %v706 = vpop.f32.mrf.mxu0
    %v707 = vadd.f32 0.0, %v706
    %708 = vdwg.mxu0
    %v725 = vunpack.c.l.b16 %v558
    %v726 = vunpack.c.l.b16 %v559
    %v727 = vunpack.c.l.b16 %v560
    %v728 = vunpack.c.l.b16 %v561
    %v729 = vunpack.c.l.b16 %v562
    %v730 = vunpack.c.l.b16 %v563
    %v731 = vunpack.c.l.b16 %v564
    %v732 = vunpack.c.l.b16 %v565
    %v733 = vunpack.c.l.b16 %v566
    %v734 = vunpack.c.l.b16 %v567
    %v735 = vunpack.c.l.b16 %v568
    %v736 = vunpack.c.l.b16 %v569
    %v737 = vunpack.c.l.b16 %v570
    %v738 = vunpack.c.l.b16 %v571
    %v739 = vunpack.c.l.b16 %v572
    %v740 = vunpack.c.l.b16 %v573
    %v741 = vpack.c.b16 %v726, %v725
    %v742 = vpack.c.b16 %v728, %v727
    %v743 = vpack.c.b16 %v730, %v729
    %v744 = vpack.c.b16 %v732, %v731
    %v745 = vpack.c.b16 %v734, %v733
    %v746 = vpack.c.b16 %v736, %v735
    %v747 = vpack.c.b16 %v738, %v737
    %v748 = vpack.c.b16 %v740, %v739
    %757 = vmatpush.bf16.msra.mxu0 %v748
    %758 = vmatpush.bf16.msra.mxu0 %v747
    %759 = vmatpush.bf16.msra.mxu0 %v746
    %760 = vmatpush.bf16.msra.mxu0 %v745
    %761 = vmatpush.bf16.msra.mxu0 %v744
    %762 = vmatpush.bf16.msra.mxu0 %v743
    %763 = vmatpush.bf16.msra.mxu0 %v742
    %764 = vmatpush.bf16.msra.mxu0 %v741
    %765 = vmatmul.bf16.gmra.mxu0 %v646
    %v766 = vpop.f32.mrf.mxu0
    %v767 = vadd.f32 %v705, %v766
    %v768 = vpop.f32.mrf.mxu0
    %v769 = vadd.f32 %v707, %v768
    %770 = vdwg.mxu0
    %v772 = vperm.slane %v590, 0
    %v774 = vadd.f32 %v767, %v772
    %v775 = vadd.f32 %v769, %v772
    %v776 = vmax.f32 %v774, 0.0
    %v777 = vmax.f32 %v775, 0.0
    %v778 = vmul.f32 %v591, %v591
    %vm779 = vcmask 1040384
    %v780 = vsel %vm779, %v778, 0.0
    %781 = vadd.xlane.f32.xlu0 %v780
    %v782 = vpop.xlane.xlu0 %781
    %v783 = vrot.slane %v782, 4
    %v784 = vadd.f32 %v782, %v783
    %v785 = vrot.slane %v784, 2
    %v786 = vadd.f32 %v784, %v785
    %v787 = vrot.slane %v786, 1
    %v788 = vadd.f32 %v786, %v787
    %s789 = vtos %v788
    %s790 = sadd.f32 %s789, 1e-12
    %v791 = vstv %s790
    %v792 = vrsqrt.pop %v791
    %v793 = vmul.f32 %v792, %v791
    %v794 = vmul.f32 %v793, %v792
    %v795 = vmul.f32 0.5, %v794
    %v796 = vsub.f32 1.5, %v795
    %v797 = vmul.f32 %v792, %v796
    %vm798 = vweird.f32 %v791
    %vm799 = vweird.f32 %v792
    %vm800 = vmor %vm798, %vm799
    %v801 = vsel %vm800, %v792, %v797
    %s802 = vtos %v801
    %v804 = vperm.slane %v591, 0
    %v806 = vmul.f32 %v776, %v804
    %v807 = vmul.f32 %v777, %v804
    %808 = vadd.xlane.f32.xlu0 %v806
    %v809 = vpop.xlane.xlu0 %808
    %810 = vadd.xlane.f32.xlu0 %v807
    %v811 = vpop.xlane.xlu0 %810
    %v812 = vstv %s802
    %v813 = vmul.f32 %v809, %v812
    %v814 = vmul.f32 %v811, %v812
    %v815 = vtanh.pop %v813
    %v816 = vtanh.pop %v814
    %vm817 = vcmp.eq.s32.totalorder %v554, %v557
    %vm818 = vcmp.eq.s32.totalorder %v555, %v557
    %v819 = vsel %vm817, %v815, 0.0
    %v820 = vsel %vm818, %v816, 0.0
    %v821 = vsel %vm598, %v819, 0.0
    %v822 = vsel %vm598, %v820, 0.0
    %v823 = vadd.f32 %v821, %v822
    %v824 = vrot.slane %v823, 4
    %v825 = vadd.f32 %v823, %v824
    %v826 = vrot.slane %v825, 2
    %v827 = vadd.f32 %v825, %v826
    %v828 = vrot.slane %v827, 1
    %v829 = vadd.f32 %v827, %v828
    %v830 = vmul.f32 %v776, %v815
    %v831 = vmul.f32 %v777, %v816
    %v832 = vsel %vm598, %v551, 0.0
    %833 = vadd.xlane.f32.xlu0 %v832
    %v834 = vpop.xlane.xlu0 %833
    %v835 = vsel %vm598, %v552, 0.0
    %836 = vadd.xlane.f32.xlu0 %v835
    %v837 = vpop.xlane.xlu0 %836
    %v838 = vmul.f32 %v834, 0.8
    %v839 = vmul.f32 %v837, 0.8
    %v840 = vceil.f32 %v838
    %v841 = vceil.f32 %v839
    %vm842 = vcmp.gt.f32.partialorder %v829, %v815
    %vm843 = vcmp.gt.f32.partialorder %v829, %v816
    %vm844 = vcmp.eq.f32.partialorder %v829, %v815
    %vm845 = vcmp.eq.f32.partialorder %v829, %v816
    %vm846 = vcmp.lt.s32.totalorder %v557, %v554
    %vm847 = vcmp.lt.s32.totalorder %v557, %v555
    %vm848 = vmand %vm844, %vm846
    %vm849 = vmand %vm845, %vm847
    %vm850 = vmor %vm842, %vm848
    %vm851 = vmor %vm843, %vm849
    %v852 = vsel %vm850, 1, 0
    %v853 = vsel %vm851, 1, 0
    %v854 = vcvt.s32.f32 %v852
    %v855 = vcvt.s32.f32 %v853
    %v856 = vmul.f32 %v551, %v854
    %v857 = vmul.f32 %v552, %v855
    %v858 = vsel %vm598, %v856, 0.0
    %859 = vadd.xlane.f32.xlu0 %v858
    %v860 = vpop.xlane.xlu0 %859
    %v861 = vsel %vm598, %v857, 0.0
    %862 = vadd.xlane.f32.xlu0 %v861
    %v863 = vpop.xlane.xlu0 %862
    %vm864 = vcmp.lt.f32.partialorder %v860, %v840
    %vm865 = vcmp.lt.f32.partialorder %v863, %v841
    %v866 = vsel %vm864, 1, 0
    %v867 = vsel %vm865, 1, 0
    %v868 = vcvt.s32.f32 %v866
    %v869 = vcvt.s32.f32 %v867
    %v870 = vadd.f32 %v832, %v835
    %v871 = vrot.slane %v870, 4
    %v872 = vadd.f32 %v870, %v871
    %v873 = vrot.slane %v872, 2
    %v874 = vadd.f32 %v872, %v873
    %v875 = vrot.slane %v874, 1
    %v876 = vadd.f32 %v874, %v875
    %v877 = vmul.f32 %v876, 0.8
    %v878 = vceil.f32 %v877
    %vm879 = vcmp.gt.f32.partialorder %v815, %v829
    %vm880 = vcmp.gt.f32.partialorder %v816, %v829
    %vm881 = vcmp.eq.f32.partialorder %v815, %v829
    %vm882 = vcmp.eq.f32.partialorder %v816, %v829
    %vm883 = vcmp.lt.s32.totalorder %v554, %v557
    %vm884 = vcmp.lt.s32.totalorder %v555, %v557
    %vm885 = vmand %vm881, %vm883
    %vm886 = vmand %vm882, %vm884
    %vm887 = vmor %vm879, %vm885
    %vm888 = vmor %vm880, %vm886
    %v889 = vsel %vm887, 1, 0
    %v890 = vsel %vm888, 1, 0
    %v891 = vcvt.s32.f32 %v889
    %v892 = vcvt.s32.f32 %v890
    %v893 = vmul.f32 %v551, %v891
    %v894 = vmul.f32 %v552, %v892
    %v895 = vsel %vm598, %v893, 0.0
    %v896 = vsel %vm598, %v894, 0.0
    %v897 = vadd.f32 %v895, %v896
    %v898 = vrot.slane %v897, 4
    %v899 = vadd.f32 %v897, %v898
    %v900 = vrot.slane %v899, 2
    %v901 = vadd.f32 %v899, %v900
    %v902 = vrot.slane %v901, 1
    %v903 = vadd.f32 %v901, %v902
    %vm904 = vcmp.lt.f32.partialorder %v903, %v878
    %v905 = vsel %vm904, 1, 0
    %v906 = vcvt.s32.f32 %v905
    %v907 = vmul.f32 %v530, %v906
    %vm908 = vcmask 123904
    %v909 = vsel %vm908, %v907, 0.0
    %910 = vadd.xlane.f32.xlu0 %v909
    %v911 = vpop.xlane.xlu0 %910
    %v912 = vmax.f32 %v911, 1.0
    %v914 = vsel %vm598, %v907, 0
    %916 = vmatpush.msra.mxu0 0.0
    %917 = vmatpush.msra.mxu0 0.0
    %918 = vmatpush.msra.mxu0 0.0
    %919 = vmatpush.msra.mxu0 0.0
    %920 = vmatpush.msra.mxu0 0.0
    %921 = vmatpush.msra.mxu0 0.0
    %922 = vmatpush.msra.mxu0 0.0
    %923 = vmatpush.msra.mxu0 0.0
    %924 = vmatpush.msra.mxu0 0.0
    %925 = vmatpush.msra.mxu0 0.0
    %926 = vmatpush.msra.mxu0 0.0
    %927 = vmatpush.msra.mxu0 0.0
    %928 = vmatpush.msra.mxu0 0.0
    %929 = vmatpush.msra.mxu0 0.0
    %930 = vmatpush.msra.mxu0 %v831
    %931 = vmatpush.msra.mxu0 %v830
    %932 = vmatmul.f32.gmra.mxu0 %v914
    %v933 = vpop.f32.mrf.mxu0
    %v934 = vadd.f32 0.0, %v933
    %935 = vdwg.mxu0
    %v936 = vrcp.pop %v912
    %v937 = vmul.f32 %v934, %v936
    %v938 = vadd.f32 %v937, 0.0
    %vm939 = vcmp.eq.f32.partialorder %v532, 0.0
    %vm940 = vcmp.eq.f32.partialorder %v533, 0.0
    %v941 = vsel %vm939, 1, 0
    %v942 = vsel %vm940, 1, 0
    %v943 = vcvt.s32.f32 %v941
    %v944 = vcvt.s32.f32 %v942
    %v945 = vmul.f32 %v943, %v868
    %v946 = vmul.f32 %v944, %v869
    %vm947 = vcmp.gt.f32.partialorder %v945, 0.0
    %vm948 = vcmp.gt.f32.partialorder %v946, 0.0
    %v949 = vsel %vm947, 1, 0
    %v950 = vsel %vm948, 1, 0
    %951 = vset.pattern.permute.xlu0 0
    %952 = vperm.xlu0 %951, %v949
    %v953 = vpop.permute.xlu0 %952
    %954 = vset.pattern.permute.xlu0 0
    %955 = vperm.xlu0 %954, %v950
    %v956 = vpop.permute.xlu0 %955
    %vm957 = vcmp.eq.s32.totalorder %v953, 1
    %vm958 = vcmp.eq.s32.totalorder %v956, 1
    %v959 = vsel %vm957, %v830, -1e+30
    %v960 = vsel %vm958, %v831, -1e+30
    %v961 = vmax.f32 %v959, %v960
    %v962 = vrot.slane %v961, 4
    %v963 = vmax.f32 %v961, %v962
    %v964 = vrot.slane %v963, 2
    %v965 = vmax.f32 %v963, %v964
    %v966 = vrot.slane %v965, 1
    %v967 = vmax.f32 %v965, %v966
    %vm968 = vcmp.eq.f32.partialorder %v532, 1.0
    %vm969 = vcmp.eq.f32.partialorder %v533, 1.0
    %v970 = vsel %vm968, 1, 0
    %v971 = vsel %vm969, 1, 0
    %v972 = vcvt.s32.f32 %v970
    %v973 = vcvt.s32.f32 %v971
    %v974 = vmul.f32 %v972, %v868
    %v975 = vmul.f32 %v973, %v869
    %vm976 = vcmp.gt.f32.partialorder %v974, 0.0
    %vm977 = vcmp.gt.f32.partialorder %v975, 0.0
    %v978 = vsel %vm976, 1, 0
    %v979 = vsel %vm977, 1, 0
    %980 = vset.pattern.permute.xlu0 0
    %981 = vperm.xlu0 %980, %v978
    %v982 = vpop.permute.xlu0 %981
    %983 = vset.pattern.permute.xlu0 0
    %984 = vperm.xlu0 %983, %v979
    %v985 = vpop.permute.xlu0 %984
    %vm986 = vcmp.eq.s32.totalorder %v982, 1
    %vm987 = vcmp.eq.s32.totalorder %v985, 1
    %v988 = vsel %vm986, %v830, -1e+30
    %v989 = vsel %vm987, %v831, -1e+30
    %v990 = vmax.f32 %v988, %v989
    %v991 = vrot.slane %v990, 4
    %v992 = vmax.f32 %v990, %v991
    %v993 = vrot.slane %v992, 2
    %v994 = vmax.f32 %v992, %v993
    %v995 = vrot.slane %v994, 1
    %v996 = vmax.f32 %v994, %v995
    %v997 = vsel %vm779, %v967, %v996
    %v998 = vadd.f32 %v997, 0.0
    %s999 = scalar_lea.vmem [#allocation10], 64
    %v1000 = vld [vmem:[%s999] sm:$0xf]
    %v1001 = vld [vmem:[%s999 + $0x4] sm:$0xf]
    %v1002 = vld [vmem:[%s999 + $0x8] sm:$0xf]
    %v1003 = vld [vmem:[%s999 + $0xc] sm:$0xf]
    %v1004 = vld [vmem:[%s999 + $0x10] sm:$0xf]
    %v1005 = vld [vmem:[%s999 + $0x14] sm:$0xf]
    %v1006 = vld [vmem:[%s999 + $0x18] sm:$0xf]
    %v1007 = vld [vmem:[%s999 + $0x1c] sm:$0xf]
    %v1008 = vld [vmem:[%s999 + $0x20] sm:$0xf]
    %v1009 = vld [vmem:[%s999 + $0x24] sm:$0xf]
    %v1010 = vld [vmem:[%s999 + $0x28] sm:$0xf]
    %v1011 = vld [vmem:[%s999 + $0x2c] sm:$0xf]
    %v1012 = vld [vmem:[%s999 + $0x30] sm:$0xf]
    %v1013 = vld [vmem:[%s999 + $0x34] sm:$0xf]
    %v1014 = vld [vmem:[%s999 + $0x38] sm:$0xf]
    %v1015 = vld [vmem:[%s999 + $0x3c] sm:$0xf]
    %s1016 = scalar_lea.vmem [#allocation12], 64
    %v1017 = vld [vmem:[%s1016] sm:$0xf]
    %v1018 = vld [vmem:[%s1016 + $0x4] sm:$0xf]
    %v1019 = vld [vmem:[%s1016 + $0x8] sm:$0xf]
    %v1020 = vld [vmem:[%s1016 + $0xc] sm:$0xf]
    %v1021 = vld [vmem:[%s1016 + $0x10] sm:$0xf]
    %v1022 = vld [vmem:[%s1016 + $0x14] sm:$0xf]
    %v1023 = vld [vmem:[%s1016 + $0x18] sm:$0xf]
    %v1024 = vld [vmem:[%s1016 + $0x1c] sm:$0xf]
    %v1025 = vld [vmem:[%s1016 + $0x20] sm:$0xf]
    %v1026 = vld [vmem:[%s1016 + $0x24] sm:$0xf]
    %v1027 = vld [vmem:[%s1016 + $0x28] sm:$0xf]
    %v1028 = vld [vmem:[%s1016 + $0x2c] sm:$0xf]
    %v1029 = vld [vmem:[%s1016 + $0x30] sm:$0xf]
    %v1030 = vld [vmem:[%s1016 + $0x34] sm:$0xf]
    %v1031 = vld [vmem:[%s1016 + $0x38] sm:$0xf]
    %v1032 = vld [vmem:[%s1016 + $0x3c] sm:$0xf]
    %s1033 = scalar_lea.vmem [#allocation13], 1
    %v1034 = vld [vmem:[%s1033] sm:$0x1]
    %s1035 = scalar_lea.vmem [#allocation15], 1
    %v1036 = vld [vmem:[%s1035] sm:$0x1]
    %v1037 = vpack.c.bf16 %v831, %v830
    %v1038 = vpack.c.bf16 %v906, %v906
    %v1039 = vunpack.c.l.bf16 %v528
    %v1040 = vunpack.c.l.bf16 %v529
    %v1041 = vunpack.c.l.bf16 %v1038
    %v1042 = vmul.f32 %v1039, %v1041
    %v1043 = vmul.f32 %v1040, %v1041
    %v1044 = vpack.c.bf16 %v1043, %v1042
    %v1045 = vpack.c.bf16 %v869, %v868
    %1046 = vmatpush.bf16.msra.mxu0 0
    %1047 = vmatpush.bf16.msra.mxu0 0
    %1048 = vmatpush.bf16.msra.mxu0 0
    %1049 = vmatpush.bf16.msra.mxu0 0
    %1050 = vmatpush.bf16.msra.mxu0 0
    %1051 = vmatpush.bf16.msra.mxu0 0
    %1052 = vmatpush.bf16.msra.mxu0 0
    %1053 = vmatpush.bf16.msra.mxu0 %v1045
    %1054 = vmatmul.bf16.gmra.mxu0 %v600
    %v1055 = vpop.f32.mrf.mxu0
    %v1056 = vadd.f32 0.0, %v1055
    %v1057 = vpop.f32.mrf.mxu0
    %v1058 = vadd.f32 0.0, %v1057
    %1059 = vdwg.mxu0
    %v1060 = vmax.f32 %v1056, 1.0
    %v1061 = vmax.f32 %v1058, 1.0
    %v1062 = vrcp.pop %v1060
    %v1063 = vrcp.pop %v1061
    %v1065 = vsel %vm598, %v1044, 0
    %1067 = vmatpush.bf16.msra.mxu0 0
    %1068 = vmatpush.bf16.msra.mxu0 0
    %1069 = vmatpush.bf16.msra.mxu0 0
    %1070 = vmatpush.bf16.msra.mxu0 0
    %1071 = vmatpush.bf16.msra.mxu0 0
    %1072 = vmatpush.bf16.msra.mxu0 0
    %1073 = vmatpush.bf16.msra.mxu0 0
    %1074 = vmatpush.bf16.msra.mxu0 %v1037
    %1075 = vmatmul.bf16.gmra.mxu0 %v1065
    %v1076 = vpop.f32.mrf.mxu0
    %v1077 = vadd.f32 0.0, %v1076
    %v1078 = vpop.f32.mrf.mxu0
    %v1079 = vadd.f32 0.0, %v1078
    %1080 = vdwg.mxu0
    %1082 = vset.pattern.permute.xlu0 0
    %1083 = vperm.xlu0 %1082, %v1062
    %v1084 = vpop.permute.xlu0 %1083
    %1087 = vset.pattern.permute.xlu0 0
    %1088 = vperm.xlu0 %1087, %v1063
    %v1089 = vpop.permute.xlu0 %1088
    %v1091 = vmul.f32 %v1077, %v1084
    %v1092 = vmul.f32 %v1079, %v1089
    %v1093 = vpack.c.bf16 %v1092, %v1091
    %v1110 = vunpack.c.l.b16 %v1017
    %v1111 = vunpack.c.l.b16 %v1018
    %v1112 = vunpack.c.l.b16 %v1019
    %v1113 = vunpack.c.l.b16 %v1020
    %v1114 = vunpack.c.l.b16 %v1021
    %v1115 = vunpack.c.l.b16 %v1022
    %v1116 = vunpack.c.l.b16 %v1023
    %v1117 = vunpack.c.l.b16 %v1024
    %v1118 = vunpack.c.l.b16 %v1025
    %v1119 = vunpack.c.l.b16 %v1026
    %v1120 = vunpack.c.l.b16 %v1027
    %v1121 = vunpack.c.l.b16 %v1028
    %v1122 = vunpack.c.l.b16 %v1029
    %v1123 = vunpack.c.l.b16 %v1030
    %v1124 = vunpack.c.l.b16 %v1031
    %v1125 = vunpack.c.l.b16 %v1032
    %v1126 = vpack.c.b16 %v1111, %v1110
    %v1127 = vpack.c.b16 %v1113, %v1112
    %v1128 = vpack.c.b16 %v1115, %v1114
    %v1129 = vpack.c.b16 %v1117, %v1116
    %v1130 = vpack.c.b16 %v1119, %v1118
    %v1131 = vpack.c.b16 %v1121, %v1120
    %v1132 = vpack.c.b16 %v1123, %v1122
    %v1133 = vpack.c.b16 %v1125, %v1124
    %1142 = vmatpush.bf16.msra.mxu0 %v1133
    %1143 = vmatpush.bf16.msra.mxu0 %v1132
    %1144 = vmatpush.bf16.msra.mxu0 %v1131
    %1145 = vmatpush.bf16.msra.mxu0 %v1130
    %1146 = vmatpush.bf16.msra.mxu0 %v1129
    %1147 = vmatpush.bf16.msra.mxu0 %v1128
    %1148 = vmatpush.bf16.msra.mxu0 %v1127
    %1149 = vmatpush.bf16.msra.mxu0 %v1126
    %1150 = vmatmul.bf16.gmra.mxu0 %v1037
    %v1151 = vpop.f32.mrf.mxu0
    %v1152 = vadd.f32 0.0, %v1151
    %v1153 = vpop.f32.mrf.mxu0
    %v1154 = vadd.f32 0.0, %v1153
    %1155 = vdwg.mxu0
    %v1172 = vunpack.c.l.b16 %v1000
    %v1173 = vunpack.c.l.b16 %v1001
    %v1174 = vunpack.c.l.b16 %v1002
    %v1175 = vunpack.c.l.b16 %v1003
    %v1176 = vunpack.c.l.b16 %v1004
    %v1177 = vunpack.c.l.b16 %v1005
    %v1178 = vunpack.c.l.b16 %v1006
    %v1179 = vunpack.c.l.b16 %v1007
    %v1180 = vunpack.c.l.b16 %v1008
    %v1181 = vunpack.c.l.b16 %v1009
    %v1182 = vunpack.c.l.b16 %v1010
    %v1183 = vunpack.c.l.b16 %v1011
    %v1184 = vunpack.c.l.b16 %v1012
    %v1185 = vunpack.c.l.b16 %v1013
    %v1186 = vunpack.c.l.b16 %v1014
    %v1187 = vunpack.c.l.b16 %v1015
    %v1188 = vpack.c.b16 %v1173, %v1172
    %v1189 = vpack.c.b16 %v1175, %v1174
    %v1190 = vpack.c.b16 %v1177, %v1176
    %v1191 = vpack.c.b16 %v1179, %v1178
    %v1192 = vpack.c.b16 %v1181, %v1180
    %v1193 = vpack.c.b16 %v1183, %v1182
    %v1194 = vpack.c.b16 %v1185, %v1184
    %v1195 = vpack.c.b16 %v1187, %v1186
    %1204 = vmatpush.bf16.msra.mxu0 %v1195
    %1205 = vmatpush.bf16.msra.mxu0 %v1194
    %1206 = vmatpush.bf16.msra.mxu0 %v1193
    %1207 = vmatpush.bf16.msra.mxu0 %v1192
    %1208 = vmatpush.bf16.msra.mxu0 %v1191
    %1209 = vmatpush.bf16.msra.mxu0 %v1190
    %1210 = vmatpush.bf16.msra.mxu0 %v1189
    %1211 = vmatpush.bf16.msra.mxu0 %v1188
    %1212 = vmatmul.bf16.gmra.mxu0 %v1093
    %v1213 = vpop.f32.mrf.mxu0
    %v1214 = vadd.f32 %v1152, %v1213
    %v1215 = vpop.f32.mrf.mxu0
    %v1216 = vadd.f32 %v1154, %v1215
    %1217 = vdwg.mxu0
    %v1219 = vperm.slane %v1034, 0
    %v1221 = vadd.f32 %v1214, %v1219
    %v1222 = vadd.f32 %v1216, %v1219
    %v1223 = vmax.f32 %v1221, 0.0
    %v1224 = vmax.f32 %v1222, 0.0
    %v1225 = vmul.f32 %v1036, %v1036
    %v1226 = vsel %vm779, %v1225, 0.0
    %1227 = vadd.xlane.f32.xlu0 %v1226
    %v1228 = vpop.xlane.xlu0 %1227
    %v1229 = vrot.slane %v1228, 4
    %v1230 = vadd.f32 %v1228, %v1229
    %v1231 = vrot.slane %v1230, 2
    %v1232 = vadd.f32 %v1230, %v1231
    %v1233 = vrot.slane %v1232, 1
    %v1234 = vadd.f32 %v1232, %v1233
    %s1235 = vtos %v1234
    %s1236 = sadd.f32 %s1235, 1e-12
    %v1237 = vstv %s1236
    %v1238 = vrsqrt.pop %v1237
    %v1239 = vmul.f32 %v1238, %v1237
    %v1240 = vmul.f32 %v1239, %v1238
    %v1241 = vmul.f32 0.5, %v1240
    %v1242 = vsub.f32 1.5, %v1241
    %v1243 = vmul.f32 %v1238, %v1242
    %vm1244 = vweird.f32 %v1237
    %vm1245 = vweird.f32 %v1238
    %vm1246 = vmor %vm1244, %vm1245
    %v1247 = vsel %vm1246, %v1238, %v1243
    %s1248 = vtos %v1247
    %v1250 = vperm.slane %v1036, 0
    %v1252 = vmul.f32 %v1223, %v1250
    %v1253 = vmul.f32 %v1224, %v1250
    %1254 = vadd.xlane.f32.xlu0 %v1252
    %v1255 = vpop.xlane.xlu0 %1254
    %1256 = vadd.xlane.f32.xlu0 %v1253
    %v1257 = vpop.xlane.xlu0 %1256
    %v1258 = vstv %s1248
    %v1259 = vmul.f32 %v1255, %v1258
    %v1260 = vmul.f32 %v1257, %v1258
    %v1261 = vtanh.pop %v1259
    %v1262 = vtanh.pop %v1260
    %v1263 = vsel %vm817, %v1261, 0.0
    %v1264 = vsel %vm818, %v1262, 0.0
    %v1265 = vsel %vm598, %v1263, 0.0
    %v1266 = vsel %vm598, %v1264, 0.0
    %v1267 = vadd.f32 %v1265, %v1266
    %v1268 = vrot.slane %v1267, 4
    %v1269 = vadd.f32 %v1267, %v1268
    %v1270 = vrot.slane %v1269, 2
    %v1271 = vadd.f32 %v1269, %v1270
    %v1272 = vrot.slane %v1271, 1
    %v1273 = vadd.f32 %v1271, %v1272
    %v1274 = vmul.f32 %v1223, %v1261
    %v1275 = vmul.f32 %v1224, %v1262
    %v1276 = vmul.f32 %v551, %v906
    %v1277 = vmul.f32 %v552, %v906
    %v1278 = vsel %vm598, %v1276, 0.0
    %1279 = vadd.xlane.f32.xlu0 %v1278
    %v1280 = vpop.xlane.xlu0 %1279
    %v1281 = vsel %vm598, %v1277, 0.0
    %1282 = vadd.xlane.f32.xlu0 %v1281
    %v1283 = vpop.xlane.xlu0 %1282
    %v1284 = vmul.f32 %v1280, 0.8
    %v1285 = vmul.f32 %v1283, 0.8
    %v1286 = vceil.f32 %v1284
    %v1287 = vceil.f32 %v1285
    %vm1288 = vcmp.gt.f32.partialorder %v1273, %v1261
    %vm1289 = vcmp.gt.f32.partialorder %v1273, %v1262
    %vm1290 = vcmp.eq.f32.partialorder %v1273, %v1261
    %vm1291 = vcmp.eq.f32.partialorder %v1273, %v1262
    %vm1292 = vmand %vm1290, %vm846
    %vm1293 = vmand %vm1291, %vm847
    %vm1294 = vmor %vm1288, %vm1292
    %vm1295 = vmor %vm1289, %vm1293
    %v1296 = vsel %vm1294, 1, 0
    %v1297 = vsel %vm1295, 1, 0
    %v1298 = vcvt.s32.f32 %v1296
    %v1299 = vcvt.s32.f32 %v1297
    %v1300 = vmul.f32 %v1276, %v1298
    %v1301 = vmul.f32 %v1277, %v1299
    %v1302 = vsel %vm598, %v1300, 0.0
    %1303 = vadd.xlane.f32.xlu0 %v1302
    %v1304 = vpop.xlane.xlu0 %1303
    %v1305 = vsel %vm598, %v1301, 0.0
    %1306 = vadd.xlane.f32.xlu0 %v1305
    %v1307 = vpop.xlane.xlu0 %1306
    %vm1308 = vcmp.lt.f32.partialorder %v1304, %v1286
    %vm1309 = vcmp.lt.f32.partialorder %v1307, %v1287
    %v1310 = vsel %vm1308, 1, 0
    %v1311 = vsel %vm1309, 1, 0
    %v1312 = vcvt.s32.f32 %v1310
    %v1313 = vcvt.s32.f32 %v1311
    %v1314 = vmul.f32 %v868, %v1312
    %v1315 = vmul.f32 %v869, %v1313
    %v1316 = vmul.f32 %v551, %v868
    %v1317 = vmul.f32 %v552, %v869
    %v1318 = vsel %vm598, %v1316, 0.0
    %v1319 = vsel %vm598, %v1317, 0.0
    %v1320 = vadd.f32 %v1318, %v1319
    %v1321 = vrot.slane %v1320, 4
    %v1322 = vadd.f32 %v1320, %v1321
    %v1323 = vrot.slane %v1322, 2
    %v1324 = vadd.f32 %v1322, %v1323
    %v1325 = vrot.slane %v1324, 1
    %v1326 = vadd.f32 %v1324, %v1325
    %v1327 = vmul.f32 %v1326, 0.8
    %v1328 = vceil.f32 %v1327
    %vm1329 = vcmp.gt.f32.partialorder %v1261, %v1273
    %vm1330 = vcmp.gt.f32.partialorder %v1262, %v1273
    %vm1331 = vcmp.eq.f32.partialorder %v1261, %v1273
    %vm1332 = vcmp.eq.f32.partialorder %v1262, %v1273
    %vm1333 = vmand %vm1331, %vm883
    %vm1334 = vmand %vm1332, %vm884
    %vm1335 = vmor %vm1329, %vm1333
    %vm1336 = vmor %vm1330, %vm1334
    %v1337 = vsel %vm1335, 1, 0
    %v1338 = vsel %vm1336, 1, 0
    %v1339 = vcvt.s32.f32 %v1337
    %v1340 = vcvt.s32.f32 %v1338
    %v1341 = vmul.f32 %v1316, %v1339
    %v1342 = vmul.f32 %v1317, %v1340
    %v1343 = vsel %vm598, %v1341, 0.0
    %v1344 = vsel %vm598, %v1342, 0.0
    %v1345 = vadd.f32 %v1343, %v1344
    %v1346 = vrot.slane %v1345, 4
    %v1347 = vadd.f32 %v1345, %v1346
    %v1348 = vrot.slane %v1347, 2
    %v1349 = vadd.f32 %v1347, %v1348
    %v1350 = vrot.slane %v1349, 1
    %v1351 = vadd.f32 %v1349, %v1350
    %vm1352 = vcmp.lt.f32.partialorder %v1351, %v1328
    %v1353 = vsel %vm1352, 1, 0
    %v1354 = vcvt.s32.f32 %v1353
    %v1355 = vmul.f32 %v906, %v1354
    %v1356 = vmul.f32 %v530, %v1355
    %v1357 = vsel %vm908, %v1356, 0.0
    %1358 = vadd.xlane.f32.xlu0 %v1357
    %v1359 = vpop.xlane.xlu0 %1358
    %v1360 = vmax.f32 %v1359, 1.0
    %v1362 = vsel %vm598, %v1356, 0
    %1364 = vmatpush.msra.mxu0 0.0
    %1365 = vmatpush.msra.mxu0 0.0
    %1366 = vmatpush.msra.mxu0 0.0
    %1367 = vmatpush.msra.mxu0 0.0
    %1368 = vmatpush.msra.mxu0 0.0
    %1369 = vmatpush.msra.mxu0 0.0
    %1370 = vmatpush.msra.mxu0 0.0
    %1371 = vmatpush.msra.mxu0 0.0
    %1372 = vmatpush.msra.mxu0 0.0
    %1373 = vmatpush.msra.mxu0 0.0
    %1374 = vmatpush.msra.mxu0 0.0
    %1375 = vmatpush.msra.mxu0 0.0
    %1376 = vmatpush.msra.mxu0 0.0
    %1377 = vmatpush.msra.mxu0 0.0
    %1378 = vmatpush.msra.mxu0 %v1275
    %1379 = vmatpush.msra.mxu0 %v1274
    %1380 = vmatmul.f32.gmra.mxu0 %v1362
    %v1381 = vpop.f32.mrf.mxu0
    %v1382 = vadd.f32 0.0, %v1381
    %1383 = vdwg.mxu0
    %v1384 = vrcp.pop %v1360
    %v1385 = vmul.f32 %v1382, %v1384
    %v1386 = vadd.f32 %v938, %v1385
    %v1387 = vmul.f32 %v943, %v1314
    %v1388 = vmul.f32 %v944, %v1315
    %vm1389 = vcmp.gt.f32.partialorder %v1387, 0.0
    %vm1390 = vcmp.gt.f32.partialorder %v1388, 0.0
    %v1391 = vsel %vm1389, 1, 0
    %v1392 = vsel %vm1390, 1, 0
    %1393 = vset.pattern.permute.xlu0 0
    %1394 = vperm.xlu0 %1393, %v1391
    %v1395 = vpop.permute.xlu0 %1394
    %1396 = vset.pattern.permute.xlu0 0
    %1397 = vperm.xlu0 %1396, %v1392
    %v1398 = vpop.permute.xlu0 %1397
    %vm1399 = vcmp.eq.s32.totalorder %v1395, 1
    %vm1400 = vcmp.eq.s32.totalorder %v1398, 1
    %v1401 = vsel %vm1399, %v1274, -1e+30
    %v1402 = vsel %vm1400, %v1275, -1e+30
    %v1403 = vmax.f32 %v1401, %v1402
    %v1404 = vrot.slane %v1403, 4
    %v1405 = vmax.f32 %v1403, %v1404
    %v1406 = vrot.slane %v1405, 2
    %v1407 = vmax.f32 %v1405, %v1406
    %v1408 = vrot.slane %v1407, 1
    %v1409 = vmax.f32 %v1407, %v1408
    %v1410 = vmul.f32 %v972, %v1314
    %v1411 = vmul.f32 %v973, %v1315
    %vm1412 = vcmp.gt.f32.partialorder %v1410, 0.0
    %vm1413 = vcmp.gt.f32.partialorder %v1411, 0.0
    %v1414 = vsel %vm1412, 1, 0
    %v1415 = vsel %vm1413, 1, 0
    %1416 = vset.pattern.permute.xlu0 0
    %1417 = vperm.xlu0 %1416, %v1414
    %v1418 = vpop.permute.xlu0 %1417
    %1419 = vset.pattern.permute.xlu0 0
    %1420 = vperm.xlu0 %1419, %v1415
    %v1421 = vpop.permute.xlu0 %1420
    %vm1422 = vcmp.eq.s32.totalorder %v1418, 1
    %vm1423 = vcmp.eq.s32.totalorder %v1421, 1
    %v1424 = vsel %vm1422, %v1274, -1e+30
    %v1425 = vsel %vm1423, %v1275, -1e+30
    %v1426 = vmax.f32 %v1424, %v1425
    %v1427 = vrot.slane %v1426, 4
    %v1428 = vmax.f32 %v1426, %v1427
    %v1429 = vrot.slane %v1428, 2
    %v1430 = vmax.f32 %v1428, %v1429
    %v1431 = vrot.slane %v1430, 1
    %v1432 = vmax.f32 %v1430, %v1431
    %v1433 = vsel %vm779, %v1409, %v1432
    %v1434 = vadd.f32 %v998, %v1433
    %s1435 = scalar_lea.vmem [#allocation10], 128
    %v1436 = vld [vmem:[%s1435] sm:$0xf]
    %v1437 = vld [vmem:[%s1435 + $0x4] sm:$0xf]
    %v1438 = vld [vmem:[%s1435 + $0x8] sm:$0xf]
    %v1439 = vld [vmem:[%s1435 + $0xc] sm:$0xf]
    %v1440 = vld [vmem:[%s1435 + $0x10] sm:$0xf]
    %v1441 = vld [vmem:[%s1435 + $0x14] sm:$0xf]
    %v1442 = vld [vmem:[%s1435 + $0x18] sm:$0xf]
    %v1443 = vld [vmem:[%s1435 + $0x1c] sm:$0xf]
    %v1444 = vld [vmem:[%s1435 + $0x20] sm:$0xf]
    %v1445 = vld [vmem:[%s1435 + $0x24] sm:$0xf]
    %v1446 = vld [vmem:[%s1435 + $0x28] sm:$0xf]
    %v1447 = vld [vmem:[%s1435 + $0x2c] sm:$0xf]
    %v1448 = vld [vmem:[%s1435 + $0x30] sm:$0xf]
    %v1449 = vld [vmem:[%s1435 + $0x34] sm:$0xf]
    %v1450 = vld [vmem:[%s1435 + $0x38] sm:$0xf]
    %v1451 = vld [vmem:[%s1435 + $0x3c] sm:$0xf]
    %s1452 = scalar_lea.vmem [#allocation12], 128
    %v1453 = vld [vmem:[%s1452] sm:$0xf]
    %v1454 = vld [vmem:[%s1452 + $0x4] sm:$0xf]
    %v1455 = vld [vmem:[%s1452 + $0x8] sm:$0xf]
    %v1456 = vld [vmem:[%s1452 + $0xc] sm:$0xf]
    %v1457 = vld [vmem:[%s1452 + $0x10] sm:$0xf]
    %v1458 = vld [vmem:[%s1452 + $0x14] sm:$0xf]
    %v1459 = vld [vmem:[%s1452 + $0x18] sm:$0xf]
    %v1460 = vld [vmem:[%s1452 + $0x1c] sm:$0xf]
    %v1461 = vld [vmem:[%s1452 + $0x20] sm:$0xf]
    %v1462 = vld [vmem:[%s1452 + $0x24] sm:$0xf]
    %v1463 = vld [vmem:[%s1452 + $0x28] sm:$0xf]
    %v1464 = vld [vmem:[%s1452 + $0x2c] sm:$0xf]
    %v1465 = vld [vmem:[%s1452 + $0x30] sm:$0xf]
    %v1466 = vld [vmem:[%s1452 + $0x34] sm:$0xf]
    %v1467 = vld [vmem:[%s1452 + $0x38] sm:$0xf]
    %v1468 = vld [vmem:[%s1452 + $0x3c] sm:$0xf]
    %s1469 = scalar_lea.vmem [#allocation13], 2
    %v1470 = vld [vmem:[%s1469] sm:$0x1]
    %s1471 = scalar_lea.vmem [#allocation15], 2
    %v1472 = vld [vmem:[%s1471] sm:$0x1]
    %v1473 = vpack.c.bf16 %v1275, %v1274
    %v1474 = vpack.c.bf16 %v1355, %v1355
    %v1475 = vunpack.c.l.bf16 %v1474
    %v1476 = vmul.f32 %v1039, %v1475
    %v1477 = vmul.f32 %v1040, %v1475
    %v1478 = vpack.c.bf16 %v1477, %v1476
    %v1479 = vpack.c.bf16 %v1315, %v1314
    %1480 = vmatpush.bf16.msra.mxu0 0
    %1481 = vmatpush.bf16.msra.mxu0 0
    %1482 = vmatpush.bf16.msra.mxu0 0
    %1483 = vmatpush.bf16.msra.mxu0 0
    %1484 = vmatpush.bf16.msra.mxu0 0
    %1485 = vmatpush.bf16.msra.mxu0 0
    %1486 = vmatpush.bf16.msra.mxu0 0
    %1487 = vmatpush.bf16.msra.mxu0 %v1479
    %1488 = vmatmul.bf16.gmra.mxu0 %v600
    %v1489 = vpop.f32.mrf.mxu0
    %v1490 = vadd.f32 0.0, %v1489
    %v1491 = vpop.f32.mrf.mxu0
    %v1492 = vadd.f32 0.0, %v1491
    %1493 = vdwg.mxu0
    %v1494 = vmax.f32 %v1490, 1.0
    %v1495 = vmax.f32 %v1492, 1.0
    %v1496 = vrcp.pop %v1494
    %v1497 = vrcp.pop %v1495
    %v1499 = vsel %vm598, %v1478, 0
    %1501 = vmatpush.bf16.msra.mxu0 0
    %1502 = vmatpush.bf16.msra.mxu0 0
    %1503 = vmatpush.bf16.msra.mxu0 0
    %1504 = vmatpush.bf16.msra.mxu0 0
    %1505 = vmatpush.bf16.msra.mxu0 0
    %1506 = vmatpush.bf16.msra.mxu0 0
    %1507 = vmatpush.bf16.msra.mxu0 0
    %1508 = vmatpush.bf16.msra.mxu0 %v1473
    %1509 = vmatmul.bf16.gmra.mxu0 %v1499
    %v1510 = vpop.f32.mrf.mxu0
    %v1511 = vadd.f32 0.0, %v1510
    %v1512 = vpop.f32.mrf.mxu0
    %v1513 = vadd.f32 0.0, %v1512
    %1514 = vdwg.mxu0
    %1516 = vset.pattern.permute.xlu0 0
    %1517 = vperm.xlu0 %1516, %v1496
    %v1518 = vpop.permute.xlu0 %1517
    %1521 = vset.pattern.permute.xlu0 0
    %1522 = vperm.xlu0 %1521, %v1497
    %v1523 = vpop.permute.xlu0 %1522
    %v1525 = vmul.f32 %v1511, %v1518
    %v1526 = vmul.f32 %v1513, %v1523
    %v1527 = vpack.c.bf16 %v1526, %v1525
    %v1544 = vunpack.c.l.b16 %v1453
    %v1545 = vunpack.c.l.b16 %v1454
    %v1546 = vunpack.c.l.b16 %v1455
    %v1547 = vunpack.c.l.b16 %v1456
    %v1548 = vunpack.c.l.b16 %v1457
    %v1549 = vunpack.c.l.b16 %v1458
    %v1550 = vunpack.c.l.b16 %v1459
    %v1551 = vunpack.c.l.b16 %v1460
    %v1552 = vunpack.c.l.b16 %v1461
    %v1553 = vunpack.c.l.b16 %v1462
    %v1554 = vunpack.c.l.b16 %v1463
    %v1555 = vunpack.c.l.b16 %v1464
    %v1556 = vunpack.c.l.b16 %v1465
    %v1557 = vunpack.c.l.b16 %v1466
    %v1558 = vunpack.c.l.b16 %v1467
    %v1559 = vunpack.c.l.b16 %v1468
    %v1560 = vpack.c.b16 %v1545, %v1544
    %v1561 = vpack.c.b16 %v1547, %v1546
    %v1562 = vpack.c.b16 %v1549, %v1548
    %v1563 = vpack.c.b16 %v1551, %v1550
    %v1564 = vpack.c.b16 %v1553, %v1552
    %v1565 = vpack.c.b16 %v1555, %v1554
    %v1566 = vpack.c.b16 %v1557, %v1556
    %v1567 = vpack.c.b16 %v1559, %v1558
    %1576 = vmatpush.bf16.msra.mxu0 %v1567
    %1577 = vmatpush.bf16.msra.mxu0 %v1566
    %1578 = vmatpush.bf16.msra.mxu0 %v1565
    %1579 = vmatpush.bf16.msra.mxu0 %v1564
    %1580 = vmatpush.bf16.msra.mxu0 %v1563
    %1581 = vmatpush.bf16.msra.mxu0 %v1562
    %1582 = vmatpush.bf16.msra.mxu0 %v1561
    %1583 = vmatpush.bf16.msra.mxu0 %v1560
    %1584 = vmatmul.bf16.gmra.mxu0 %v1473
    %v1585 = vpop.f32.mrf.mxu0
    %v1586 = vadd.f32 0.0, %v1585
    %v1587 = vpop.f32.mrf.mxu0
    %v1588 = vadd.f32 0.0, %v1587
    %1589 = vdwg.mxu0
    %v1606 = vunpack.c.l.b16 %v1436
    %v1607 = vunpack.c.l.b16 %v1437
    %v1608 = vunpack.c.l.b16 %v1438
    %v1609 = vunpack.c.l.b16 %v1439
    %v1610 = vunpack.c.l.b16 %v1440
    %v1611 = vunpack.c.l.b16 %v1441
    %v1612 = vunpack.c.l.b16 %v1442
    %v1613 = vunpack.c.l.b16 %v1443
    %v1614 = vunpack.c.l.b16 %v1444
    %v1615 = vunpack.c.l.b16 %v1445
    %v1616 = vunpack.c.l.b16 %v1446
    %v1617 = vunpack.c.l.b16 %v1447
    %v1618 = vunpack.c.l.b16 %v1448
    %v1619 = vunpack.c.l.b16 %v1449
    %v1620 = vunpack.c.l.b16 %v1450
    %v1621 = vunpack.c.l.b16 %v1451
    %v1622 = vpack.c.b16 %v1607, %v1606
    %v1623 = vpack.c.b16 %v1609, %v1608
    %v1624 = vpack.c.b16 %v1611, %v1610
    %v1625 = vpack.c.b16 %v1613, %v1612
    %v1626 = vpack.c.b16 %v1615, %v1614
    %v1627 = vpack.c.b16 %v1617, %v1616
    %v1628 = vpack.c.b16 %v1619, %v1618
    %v1629 = vpack.c.b16 %v1621, %v1620
    %1638 = vmatpush.bf16.msra.mxu0 %v1629
    %1639 = vmatpush.bf16.msra.mxu0 %v1628
    %1640 = vmatpush.bf16.msra.mxu0 %v1627
    %1641 = vmatpush.bf16.msra.mxu0 %v1626
    %1642 = vmatpush.bf16.msra.mxu0 %v1625
    %1643 = vmatpush.bf16.msra.mxu0 %v1624
    %1644 = vmatpush.bf16.msra.mxu0 %v1623
    %1645 = vmatpush.bf16.msra.mxu0 %v1622
    %1646 = vmatmul.bf16.gmra.mxu0 %v1527
    %v1647 = vpop.f32.mrf.mxu0
    %v1648 = vadd.f32 %v1586, %v1647
    %v1649 = vpop.f32.mrf.mxu0
    %v1650 = vadd.f32 %v1588, %v1649
    %1651 = vdwg.mxu0
    %v1653 = vperm.slane %v1470, 0
    %v1655 = vadd.f32 %v1648, %v1653
    %v1656 = vadd.f32 %v1650, %v1653
    %v1657 = vmax.f32 %v1655, 0.0
    %v1658 = vmax.f32 %v1656, 0.0
    %v1659 = vmul.f32 %v1472, %v1472
    %v1660 = vsel %vm779, %v1659, 0.0
    %1661 = vadd.xlane.f32.xlu0 %v1660
    %v1662 = vpop.xlane.xlu0 %1661
    %v1663 = vrot.slane %v1662, 4
    %v1664 = vadd.f32 %v1662, %v1663
    %v1665 = vrot.slane %v1664, 2
    %v1666 = vadd.f32 %v1664, %v1665
    %v1667 = vrot.slane %v1666, 1
    %v1668 = vadd.f32 %v1666, %v1667
    %s1669 = vtos %v1668
    %s1670 = sadd.f32 %s1669, 1e-12
    %v1671 = vstv %s1670
    %v1672 = vrsqrt.pop %v1671
    %v1673 = vmul.f32 %v1672, %v1671
    %v1674 = vmul.f32 %v1673, %v1672
    %v1675 = vmul.f32 0.5, %v1674
    %v1676 = vsub.f32 1.5, %v1675
    %v1677 = vmul.f32 %v1672, %v1676
    %vm1678 = vweird.f32 %v1671
    %vm1679 = vweird.f32 %v1672
    %vm1680 = vmor %vm1678, %vm1679
    %v1681 = vsel %vm1680, %v1672, %v1677
    %s1682 = vtos %v1681
    %v1684 = vperm.slane %v1472, 0
    %v1686 = vmul.f32 %v1657, %v1684
    %v1687 = vmul.f32 %v1658, %v1684
    %1688 = vadd.xlane.f32.xlu0 %v1686
    %v1689 = vpop.xlane.xlu0 %1688
    %1690 = vadd.xlane.f32.xlu0 %v1687
    %v1691 = vpop.xlane.xlu0 %1690
    %v1692 = vstv %s1682
    %v1693 = vmul.f32 %v1689, %v1692
    %v1694 = vmul.f32 %v1691, %v1692
    %v1695 = vtanh.pop %v1693
    %v1696 = vtanh.pop %v1694
    %v1697 = vsel %vm817, %v1695, 0.0
    %v1698 = vsel %vm818, %v1696, 0.0
    %v1699 = vsel %vm598, %v1697, 0.0
    %v1700 = vsel %vm598, %v1698, 0.0
    %v1701 = vadd.f32 %v1699, %v1700
    %v1702 = vrot.slane %v1701, 4
    %v1703 = vadd.f32 %v1701, %v1702
    %v1704 = vrot.slane %v1703, 2
    %v1705 = vadd.f32 %v1703, %v1704
    %v1706 = vrot.slane %v1705, 1
    %v1707 = vadd.f32 %v1705, %v1706
    %v1708 = vmul.f32 %v1657, %v1695
    %v1709 = vmul.f32 %v1658, %v1696
    %v1710 = vmul.f32 %v551, %v1355
    %v1711 = vmul.f32 %v552, %v1355
    %v1712 = vsel %vm598, %v1710, 0.0
    %1713 = vadd.xlane.f32.xlu0 %v1712
    %v1714 = vpop.xlane.xlu0 %1713
    %v1715 = vsel %vm598, %v1711, 0.0
    %1716 = vadd.xlane.f32.xlu0 %v1715
    %v1717 = vpop.xlane.xlu0 %1716
    %v1718 = vmul.f32 %v1714, 0.8
    %v1719 = vmul.f32 %v1717, 0.8
    %v1720 = vceil.f32 %v1718
    %v1721 = vceil.f32 %v1719
    %vm1722 = vcmp.gt.f32.partialorder %v1707, %v1695
    %vm1723 = vcmp.gt.f32.partialorder %v1707, %v1696
    %vm1724 = vcmp.eq.f32.partialorder %v1707, %v1695
    %vm1725 = vcmp.eq.f32.partialorder %v1707, %v1696
    %vm1726 = vmand %vm1724, %vm846
    %vm1727 = vmand %vm1725, %vm847
    %vm1728 = vmor %vm1722, %vm1726
    %vm1729 = vmor %vm1723, %vm1727
    %v1730 = vsel %vm1728, 1, 0
    %v1731 = vsel %vm1729, 1, 0
    %v1732 = vcvt.s32.f32 %v1730
    %v1733 = vcvt.s32.f32 %v1731
    %v1734 = vmul.f32 %v1710, %v1732
    %v1735 = vmul.f32 %v1711, %v1733
    %v1736 = vsel %vm598, %v1734, 0.0
    %1737 = vadd.xlane.f32.xlu0 %v1736
    %v1738 = vpop.xlane.xlu0 %1737
    %v1739 = vsel %vm598, %v1735, 0.0
    %1740 = vadd.xlane.f32.xlu0 %v1739
    %v1741 = vpop.xlane.xlu0 %1740
    %vm1742 = vcmp.lt.f32.partialorder %v1738, %v1720
    %vm1743 = vcmp.lt.f32.partialorder %v1741, %v1721
    %v1744 = vsel %vm1742, 1, 0
    %v1745 = vsel %vm1743, 1, 0
    %v1746 = vcvt.s32.f32 %v1744
    %v1747 = vcvt.s32.f32 %v1745
    %v1748 = vmul.f32 %v1314, %v1746
    %v1749 = vmul.f32 %v1315, %v1747
    %v1750 = vmul.f32 %v551, %v1314
    %v1751 = vmul.f32 %v552, %v1315
    %v1752 = vsel %vm598, %v1750, 0.0
    %v1753 = vsel %vm598, %v1751, 0.0
    %v1754 = vadd.f32 %v1752, %v1753
    %v1755 = vrot.slane %v1754, 4
    %v1756 = vadd.f32 %v1754, %v1755
    %v1757 = vrot.slane %v1756, 2
    %v1758 = vadd.f32 %v1756, %v1757
    %v1759 = vrot.slane %v1758, 1
    %v1760 = vadd.f32 %v1758, %v1759
    %v1761 = vmul.f32 %v1760, 0.8
    %v1762 = vceil.f32 %v1761
    %vm1763 = vcmp.gt.f32.partialorder %v1695, %v1707
    %vm1764 = vcmp.gt.f32.partialorder %v1696, %v1707
    %vm1765 = vcmp.eq.f32.partialorder %v1695, %v1707
    %vm1766 = vcmp.eq.f32.partialorder %v1696, %v1707
    %vm1767 = vmand %vm1765, %vm883
    %vm1768 = vmand %vm1766, %vm884
    %vm1769 = vmor %vm1763, %vm1767
    %vm1770 = vmor %vm1764, %vm1768
    %v1771 = vsel %vm1769, 1, 0
    %v1772 = vsel %vm1770, 1, 0
    %v1773 = vcvt.s32.f32 %v1771
    %v1774 = vcvt.s32.f32 %v1772
    %v1775 = vmul.f32 %v1750, %v1773
    %v1776 = vmul.f32 %v1751, %v1774
    %v1777 = vsel %vm598, %v1775, 0.0
    %v1778 = vsel %vm598, %v1776, 0.0
    %v1779 = vadd.f32 %v1777, %v1778
    %v1780 = vrot.slane %v1779, 4
    %v1781 = vadd.f32 %v1779, %v1780
    %v1782 = vrot.slane %v1781, 2
    %v1783 = vadd.f32 %v1781, %v1782
    %v1784 = vrot.slane %v1783, 1
    %v1785 = vadd.f32 %v1783, %v1784
    %vm1786 = vcmp.lt.f32.partialorder %v1785, %v1762
    %v1787 = vsel %vm1786, 1, 0
    %v1788 = vcvt.s32.f32 %v1787
    %v1789 = vmul.f32 %v1355, %v1788
    %v1790 = vmul.f32 %v530, %v1789
    %v1791 = vsel %vm908, %v1790, 0.0
    %1792 = vadd.xlane.f32.xlu0 %v1791
    %v1793 = vpop.xlane.xlu0 %1792
    %v1794 = vmax.f32 %v1793, 1.0
    %v1796 = vsel %vm598, %v1790, 0
    %1798 = vmatpush.msra.mxu0 0.0
    %1799 = vmatpush.msra.mxu0 0.0
    %1800 = vmatpush.msra.mxu0 0.0
    %1801 = vmatpush.msra.mxu0 0.0
    %1802 = vmatpush.msra.mxu0 0.0
    %1803 = vmatpush.msra.mxu0 0.0
    %1804 = vmatpush.msra.mxu0 0.0
    %1805 = vmatpush.msra.mxu0 0.0
    %1806 = vmatpush.msra.mxu0 0.0
    %1807 = vmatpush.msra.mxu0 0.0
    %1808 = vmatpush.msra.mxu0 0.0
    %1809 = vmatpush.msra.mxu0 0.0
    %1810 = vmatpush.msra.mxu0 0.0
    %1811 = vmatpush.msra.mxu0 0.0
    %1812 = vmatpush.msra.mxu0 %v1709
    %1813 = vmatpush.msra.mxu0 %v1708
    %1814 = vmatmul.f32.gmra.mxu0 %v1796
    %v1815 = vpop.f32.mrf.mxu0
    %v1816 = vadd.f32 0.0, %v1815
    %1817 = vdwg.mxu0
    %v1818 = vrcp.pop %v1794
    %v1819 = vmul.f32 %v1816, %v1818
    %v1820 = vadd.f32 %v1386, %v1819
    %v1821 = vmul.f32 %v943, %v1748
    %v1822 = vmul.f32 %v944, %v1749
    %vm1823 = vcmp.gt.f32.partialorder %v1821, 0.0
    %vm1824 = vcmp.gt.f32.partialorder %v1822, 0.0
    %v1825 = vsel %vm1823, 1, 0
    %v1826 = vsel %vm1824, 1, 0
    %1827 = vset.pattern.permute.xlu0 0
    %1828 = vperm.xlu0 %1827, %v1825
    %v1829 = vpop.permute.xlu0 %1828
    %1830 = vset.pattern.permute.xlu0 0
    %1831 = vperm.xlu0 %1830, %v1826
    %v1832 = vpop.permute.xlu0 %1831
    %vm1833 = vcmp.eq.s32.totalorder %v1829, 1
    %vm1834 = vcmp.eq.s32.totalorder %v1832, 1
    %v1835 = vsel %vm1833, %v1708, -1e+30
    %v1836 = vsel %vm1834, %v1709, -1e+30
    %v1837 = vmax.f32 %v1835, %v1836
    %v1838 = vrot.slane %v1837, 4
    %v1839 = vmax.f32 %v1837, %v1838
    %v1840 = vrot.slane %v1839, 2
    %v1841 = vmax.f32 %v1839, %v1840
    %v1842 = vrot.slane %v1841, 1
    %v1843 = vmax.f32 %v1841, %v1842
    %v1844 = vmul.f32 %v972, %v1748
    %v1845 = vmul.f32 %v973, %v1749
    %vm1846 = vcmp.gt.f32.partialorder %v1844, 0.0
    %vm1847 = vcmp.gt.f32.partialorder %v1845, 0.0
    %v1848 = vsel %vm1846, 1, 0
    %v1849 = vsel %vm1847, 1, 0
    %1850 = vset.pattern.permute.xlu0 0
    %1851 = vperm.xlu0 %1850, %v1848
    %v1852 = vpop.permute.xlu0 %1851
    %1853 = vset.pattern.permute.xlu0 0
    %1854 = vperm.xlu0 %1853, %v1849
    %v1855 = vpop.permute.xlu0 %1854
    %vm1856 = vcmp.eq.s32.totalorder %v1852, 1
    %vm1857 = vcmp.eq.s32.totalorder %v1855, 1
    %v1858 = vsel %vm1856, %v1708, -1e+30
    %v1859 = vsel %vm1857, %v1709, -1e+30
    %v1860 = vmax.f32 %v1858, %v1859
    %v1861 = vrot.slane %v1860, 4
    %v1862 = vmax.f32 %v1860, %v1861
    %v1863 = vrot.slane %v1862, 2
    %v1864 = vmax.f32 %v1862, %v1863
    %v1865 = vrot.slane %v1864, 1
    %v1866 = vmax.f32 %v1864, %v1865
    %v1867 = vsel %vm779, %v1843, %v1866
    %v1868 = vadd.f32 %v1434, %v1867
    %v1869 = vld [vmem:[#allocation16] sm:$0xff]
    %v1870 = vld [vmem:[#allocation16 + $0x8] sm:$0xff]
    %v1871 = vld [vmem:[#allocation16 + $0x10] sm:$0xff]
    %v1872 = vld [vmem:[#allocation16 + $0x18] sm:$0xff]
    %v1873 = vld [vmem:[#allocation16 + $0x20] sm:$0xff]
    %v1874 = vld [vmem:[#allocation16 + $0x28] sm:$0xff]
    %v1875 = vld [vmem:[#allocation16 + $0x30] sm:$0xff]
    %v1876 = vld [vmem:[#allocation16 + $0x38] sm:$0xff]
    %v1877 = vld [vmem:[#allocation16 + $0x40] sm:$0xff]
    %v1878 = vld [vmem:[#allocation16 + $0x48] sm:$0xff]
    %v1879 = vld [vmem:[#allocation16 + $0x50] sm:$0xff]
    %v1880 = vld [vmem:[#allocation16 + $0x58] sm:$0xff]
    %v1881 = vld [vmem:[#allocation16 + $0x60] sm:$0xff]
    %v1882 = vld [vmem:[#allocation16 + $0x68] sm:$0xff]
    %v1883 = vld [vmem:[#allocation16 + $0x70] sm:$0xff]
    %v1884 = vld [vmem:[#allocation16 + $0x78] sm:$0xff]
    %v1885 = vld [vmem:[#allocation18] sm:$0xff]
    %v1886 = vld [vmem:[#allocation18 + $0x8] sm:$0xff]
    %v1887 = vld [vmem:[#allocation18 + $0x10] sm:$0xff]
    %v1888 = vld [vmem:[#allocation18 + $0x18] sm:$0xff]
    %v1889 = vld [vmem:[#allocation18 + $0x20] sm:$0xff]
    %v1890 = vld [vmem:[#allocation18 + $0x28] sm:$0xff]
    %v1891 = vld [vmem:[#allocation18 + $0x30] sm:$0xff]
    %v1892 = vld [vmem:[#allocation18 + $0x38] sm:$0xff]
    %v1893 = vld [vmem:[#allocation18 + $0x40] sm:$0xff]
    %v1894 = vld [vmem:[#allocation18 + $0x48] sm:$0xff]
    %v1895 = vld [vmem:[#allocation18 + $0x50] sm:$0xff]
    %v1896 = vld [vmem:[#allocation18 + $0x58] sm:$0xff]
    %v1897 = vld [vmem:[#allocation18 + $0x60] sm:$0xff]
    %v1898 = vld [vmem:[#allocation18 + $0x68] sm:$0xff]
    %v1899 = vld [vmem:[#allocation18 + $0x70] sm:$0xff]
    %v1900 = vld [vmem:[#allocation18 + $0x78] sm:$0xff]
    %1901 = vmatpush.msra.mxu0 %v1900
    %1902 = vmatpush.msra.mxu0 %v1899
    %1903 = vmatpush.msra.mxu0 %v1898
    %1904 = vmatpush.msra.mxu0 %v1897
    %1905 = vmatpush.msra.mxu0 %v1896
    %1906 = vmatpush.msra.mxu0 %v1895
    %1907 = vmatpush.msra.mxu0 %v1894
    %1908 = vmatpush.msra.mxu0 %v1893
    %1909 = vmatpush.msra.mxu0 %v1892
    %1910 = vmatpush.msra.mxu0 %v1891
    %1911 = vmatpush.msra.mxu0 %v1890
    %1912 = vmatpush.msra.mxu0 %v1889
    %1913 = vmatpush.msra.mxu0 %v1888
    %1914 = vmatpush.msra.mxu0 %v1887
    %1915 = vmatpush.msra.mxu0 %v1886
    %1916 = vmatpush.msra.mxu0 %v1885
    %1917 = vmatmul.f32.gmra.mxu0 %v1820
    %v1918 = vpop.f32.mrf.mxu0
    %v1919 = vadd.f32 0.0, %v1918
    %1920 = vdwg.mxu0
    %1921 = vmatpush.msra.mxu0 %v1884
    %1922 = vmatpush.msra.mxu0 %v1883
    %1923 = vmatpush.msra.mxu0 %v1882
    %1924 = vmatpush.msra.mxu0 %v1881
    %1925 = vmatpush.msra.mxu0 %v1880
    %1926 = vmatpush.msra.mxu0 %v1879
    %1927 = vmatpush.msra.mxu0 %v1878
    %1928 = vmatpush.msra.mxu0 %v1877
    %1929 = vmatpush.msra.mxu0 %v1876
    %1930 = vmatpush.msra.mxu0 %v1875
    %1931 = vmatpush.msra.mxu0 %v1874
    %1932 = vmatpush.msra.mxu0 %v1873
    %1933 = vmatpush.msra.mxu0 %v1872
    %1934 = vmatpush.msra.mxu0 %v1871
    %1935 = vmatpush.msra.mxu0 %v1870
    %1936 = vmatpush.msra.mxu0 %v1869
    %1937 = vmatmul.f32.gmra.mxu0 %v1868
    %v1938 = vpop.f32.mrf.mxu0
    %v1939 = vadd.f32 %v1919, %v1938
    %1940 = vdwg.mxu0
    %v1941 = vld [vmem:[#allocation19] sm:$0x1]
    %v1943 = vperm.slane %v1941, 0
    %v1945 = vadd.f32 %v1939, %v1943
    %v1946 = vmax.f32 %v1945, 0.0
    %v1947 = vld [vmem:[%s13] sm:$0xff]
    %v1948 = vld [vmem:[%s13 + $0x8] sm:$0xff]
    %v1949 = vld [vmem:[%s13 + $0x10] sm:$0xff]
    %v1950 = vld [vmem:[%s13 + $0x18] sm:$0xff]
    %v1951 = vld [vmem:[%s13 + $0x20] sm:$0xff]
    %v1952 = vld [vmem:[%s13 + $0x28] sm:$0xff]
    %v1953 = vld [vmem:[%s13 + $0x30] sm:$0xff]
    %v1954 = vld [vmem:[%s13 + $0x38] sm:$0xff]
    %v1955 = vld [vmem:[%s13 + $0x40] sm:$0xff]
    %v1956 = vld [vmem:[%s13 + $0x48] sm:$0xff]
    %v1957 = vld [vmem:[%s13 + $0x50] sm:$0xff]
    %v1958 = vld [vmem:[%s13 + $0x58] sm:$0xff]
    %v1959 = vld [vmem:[%s13 + $0x60] sm:$0xff]
    %v1960 = vld [vmem:[%s13 + $0x68] sm:$0xff]
    %v1961 = vld [vmem:[%s13 + $0x70] sm:$0xff]
    %v1962 = vld [vmem:[%s13 + $0x78] sm:$0xff]
    %v1963 = vld [vmem:[#allocation21] sm:$0x1]
    %v1965 = vperm.slane %v1963, 0
    %1967 = vmatpush.msra.mxu0 %v1962
    %1968 = vmatpush.msra.mxu0 %v1961
    %1969 = vmatpush.msra.mxu0 %v1960
    %1970 = vmatpush.msra.mxu0 %v1959
    %1971 = vmatpush.msra.mxu0 %v1958
    %1972 = vmatpush.msra.mxu0 %v1957
    %1973 = vmatpush.msra.mxu0 %v1956
    %1974 = vmatpush.msra.mxu0 %v1955
    %1975 = vmatpush.msra.mxu0 %v1954
    %1976 = vmatpush.msra.mxu0 %v1953
    %1977 = vmatpush.msra.mxu0 %v1952
    %1978 = vmatpush.msra.mxu0 %v1951
    %1979 = vmatpush.msra.mxu0 %v1950
    %1980 = vmatpush.msra.mxu0 %v1949
    %1981 = vmatpush.msra.mxu0 %v1948
    %1982 = vmatpush.msra.mxu0 %v1947
    %1983 = vmatmul.f32.gmra.mxu0 %v1946
    %v1984 = vpop.f32.mrf.mxu0
    %v1985 = vadd.f32 %v1965, %v1984
    %1986 = vdwg.mxu0
    %v1987 = vmax.f32 %v1985, 0.0
    %v1988 = vld [vmem:[#allocation22] sm:$0x1]
    %v1989 = vld [vmem:[#allocation4] sm:$0x1]
    %1991 = vset.pattern.permute.xlu0 0
    %1992 = vperm.xlu0 %1991, %v1989
    %v1993 = vpop.permute.xlu0 %1992
    %v1995 = vperm.slane %v1993, 0
    %vm1996 = vcmask 523264
    %v1998 = vsel %vm1996, %v1988, 0
    %v2001 = vsel %vm1996, %v1987, 0
    %2003 = vmatpush.xpose.msra.mxu0 0.0
    %2004 = vmatpush.xpose.msra.mxu0 0.0
    %2005 = vmatpush.xpose.msra.mxu0 0.0
    %2006 = vmatpush.xpose.msra.mxu0 0.0
    %2007 = vmatpush.xpose.msra.mxu0 0.0
    %2008 = vmatpush.xpose.msra.mxu0 0.0
    %2009 = vmatpush.xpose.msra.mxu0 0.0
    %2010 = vmatpush.xpose.msra.mxu0 0.0
    %2011 = vmatpush.xpose.msra.mxu0 0.0
    %2012 = vmatpush.xpose.msra.mxu0 0.0
    %2013 = vmatpush.xpose.msra.mxu0 0.0
    %2014 = vmatpush.xpose.msra.mxu0 0.0
    %2015 = vmatpush.xpose.msra.mxu0 0.0
    %2016 = vmatpush.xpose.msra.mxu0 0.0
    %2017 = vmatpush.xpose.msra.mxu0 0.0
    %2018 = vmatpush.xpose.msra.mxu0 %v2001
    %2019 = vmatmul.f32.gmra.mxu0 %v1998
    %v2020 = vpop.f32.mrf.mxu0
    %v2021 = vadd.f32 %v1995, %v2020
    %2022 = vdwg.mxu0
    %v2023 = vxor.u32 %v2021, 2147483648
    %v2024 = vmul.f32 %v2023, 1.442695
    %v2025 = vpow.pop %v2024
    %v2026 = vadd.f32 %v2025, 1.0
    %v2027 = vrcp.pop %v2026
    %v2028 = vmul.f32 %v2026, %v2027
    %v2029 = vsub.f32 1.0, %v2028
    %v2030 = vmul.f32 %v2027, %v2029
    %v2031 = vadd.f32 %v2027, %v2030
    %vm2032 = vweird.f32 %v2026
    %vm2033 = vweird.f32 %v2027
    %vm2034 = vmor %vm2032, %vm2033
    %v2035 = vsel %vm2034, %v2027, %v2031
    %v2036 = vand.u32 2147483647, %v2026
    %vm2037 = vcmp.eq.f32.partialorder %v2036, 8.507059e+37
    %v2038 = vand.u32 %v2026, 2147483648
    %v2039 = vor.u32 1.1754944e-38, %v2038
    %v2040 = vsel %vm2037, %v2039, %v2035
    %v2041 = vmul.f32 1.0, %v2040
    %vm2042 = vcmask 8192
    %2043 = vst.msk [vmem:[#allocation24] sm:$0x1] %vm2042, %v2041
    // Predicated region
    $region174: #{net_forward.1} parent=1 // pred_check
      _
    $region175: #{net_forward.1} parent=1 // pred_check_branch
      %2045 = sbr.rel (0) target = $region177
    $region176: #{net_forward.1} parent=1 // pred_region
      %2047 = vsyncadd [#allocation7], 0
      %s2049 = sshll.u32 [#allocation24], 4
      %s2050 = int_to_ptr.vmem [resolvable:$true] %s2049
      %s2051 = sshll.u32 %s17, 4
      %s2052 = int_to_ptr.hbm [resolvable:$true] %s2051
      %2054 = dma.vmem_to_hbm [thread:$0]  %s2050, 16, %s2052, [#allocation7]
    $region177: #{net_forward.1} parent=1 // pred_fallthru
      _
    // Predicated region
    $region178: #{net_forward.1} parent=1 // pred_check
      _
    $region179: #{net_forward.1} parent=1 // pred_check_branch
      %2056 = sbr.rel (0) target = $region181
    $region180: #{net_forward.1} parent=1 // pred_region
      %2058 = dma.done [#allocation7], 16
    $region181: #{net_forward.1} parent=1 // pred_fallthru
      _
    %2059 = vsyncpa [#allocation6], 1
    %2060 = vsyncpa [#allocation11], 1
    %2061 = vsyncpa [#allocation14], 1
    %2062 = vsyncpa [#allocation17], 1
    %2063 = vsyncpa [#allocation20], 1
    %2064 = vsyncpa [#allocation23], 1
    %2065 = vsyncpa [#allocation7], 1
    %2066 = vsyncpa [#allocation8], 1
  %2067 = vsyncmov [#allocation3]
  %s2068 = vpop.sfrf %2067
  %p2069 = scmp.eq.s32.totalorder %s2068, 0
  %p2070 = pneg %p2069
  %2072 = shalt.err (%p2070)

</llo_original>
